<compile_context>
chip_gen: v7x
topology: tpu7x:2x2x1
jax: 0.10.0
libtpu: 0.0.40
codegen_flags: <defaults>
</compile_context>

<pallas_src>
import math

import jax
import jax.numpy as jnp
from jax.experimental import pallas as pl
from jax.experimental.pallas import tpu as pltpu

_LANE = 128


def _round_up(n, m):
    return ((n + m - 1) // m) * m


def _pad2(a, rows, cols):
    return jnp.pad(a, ((0, rows - a.shape[0]), (0, cols - a.shape[1])))


def _choose_tb(batch, seq_len):
    """Sequences per grid step: fill the matmul M dim, keep >=2 grid steps (v7x)."""
    tb = max(1, min(batch, max(1, 128 // max(seq_len, 1))))
    while tb > 1 and batch % tb != 0:
        tb -= 1
    if tb == batch and batch > 1:
        tb = max(1, batch // 2)
        while batch % tb != 0:
            tb -= 1
    return tb


def _prep_stage_params(p, d_model_p, di_p, oc_p, x_p):
    """Pad one Mamba+LN stage's parameters into the kernel's lane-dense layout."""
    d_inner = p["w_dt"].shape[1]
    dt_rank = p["w_dt"].shape[0]
    ns = p["a_log"].shape[1]
    k = p["w_conv"].shape[0]
    # in_proj halves padded independently so the kernel slices xz/res at DIp.
    w_in_x = _pad2(p["w_in"][:, :d_inner], d_model_p, di_p)
    w_in_r = _pad2(p["w_in"][:, d_inner:], d_model_p, di_p)
    return (
        jnp.concatenate([w_in_x, w_in_r], axis=1),     # (d_model_p, 2*di_p)
        _pad2(p["w_conv"], k, di_p),                   # (K, di_p)
        _pad2(p["b_conv"], 1, di_p),                   # (1, di_p)
        _pad2(p["w_xproj"], di_p, x_p),                # (di_p, x_p)
        _pad2(p["w_dt"], dt_rank, di_p),               # (dt_rank, di_p)
        _pad2(p["b_dt"], 1, di_p),                     # (1, di_p)
        _pad2(jnp.transpose(p["a_log"]), ns, di_p),    # (ns, di_p)  A^T layout
        _pad2(p["d"], 1, di_p),                        # (1, di_p)
        _pad2(p["w_out"], di_p, oc_p),                 # (di_p, oc_p)
        _pad2(p["ln_w"], 1, oc_p),                     # (1, oc_p)
        _pad2(p["ln_b"], 1, oc_p),                     # (1, oc_p)
    )


@jax.jit
def double_ssm_block(x, p1, p2):
    """x: (B, L, n_channels) -> (B, L, out_channels). ssm1+ln1 then ssm2+ln2, fused."""
    B, L, n_ch = x.shape
    out_c = p1["w_out"].shape[1]
    d_in1, d_in2 = p1["w_dt"].shape[1], p2["w_dt"].shape[1]
    dtr1, dtr2 = p1["w_dt"].shape[0], p2["w_dt"].shape[0]
    NS = p1["a_log"].shape[1]
    K = p1["w_conv"].shape[0]
    assert p2["a_log"].shape[1] == NS and p2["w_conv"].shape[0] == K
    assert p2["w_in"].shape[0] == out_c and p2["w_out"].shape[1] == out_c

    Cp = _round_up(n_ch, _LANE)                       # padded input channels
    OCp = _round_up(out_c, _LANE)                     # padded output channels
    DIp = _round_up(max(d_in1, d_in2), _LANE)         # padded d_inner (shared)
    Xp = _round_up(max(dtr1, dtr2) + 2 * NS, _LANE)   # padded x_proj width

    TB = _choose_tb(B, L)
    G = B // TB
    M = TB * L                                        # matmul M dim per grid step
    PADROWS = _round_up(max(K - 1, 1), 8)             # conv left-pad rows (aligned)

    ws1 = _prep_stage_params(p1, Cp, DIp, OCp, Xp)
    ws2 = _prep_stage_params(p2, OCp, DIp, OCp, Xp)
    x_pad = jnp.pad(x, ((0, 0), (0, 0), (0, Cp - n_ch)))

    # ---------------- one (Mamba + LayerNorm) stage, traced inline -----------------
    def _stage(x2d, w, dt_rank, scratch):
        (w_in, w_conv, b_conv, w_xproj, w_dt, b_dt, a_logT, d_vec,
         w_out, ln_w, ln_b) = w
        xzp_ref, dl_ref, du_ref, bc_ref, y_ref = scratch

        # ---- in_proj: (M, d_model_p) @ (d_model_p, 2*DIp) ----
        xr = jnp.dot(x2d, w_in[...], preferred_element_type=jnp.float32)
        xz = xr[:, :DIp]                              # conv / SSM branch
        res = xr[:, DIp:]                             # gating branch

        # ---- causal depthwise conv: zero-padded scratch + static shifted taps ----
        xzp_ref[pl.ds(0, PADROWS), :] = jnp.zeros((PADROWS, DIp), jnp.float32)
        xzp_ref[pl.ds(PADROWS, M), :] = xz
        acc = xz * w_conv[K - 1:K, :]                 # tap with lookback 0
        for k in range(K - 1):
            s = K - 1 - k                             # how far back this tap looks
            tap = xzp_ref[pl.ds(PADROWS - s, M), :]
            if TB > 1:                                # causality per sequence in block
                pos = jax.lax.broadcasted_iota(jnp.int32, (M, DIp), 0) % L
                tap = jnp.where(pos >= s, tap, 0.0)
            acc = acc + tap * w_conv[k:k + 1, :]
        xc = acc + b_conv[...]
        xc = xc * jax.nn.sigmoid(xc)                  # SiLU

        # ---- x_proj -> [dt_lowrank | B | C] ----
        xdbl = jnp.dot(xc, w_xproj[...], preferred_element_type=jnp.float32)
        delta_in = xdbl[:, :dt_rank]
        Bm = xdbl[:, dt_rank:dt_rank + NS]
        Cm = xdbl[:, dt_rank + NS:dt_rank + 2 * NS]

        # ---- dt_proj + softplus (torch threshold = 20) ----
        if dt_rank == 1:                              # rank-1: VPU broadcast, no MXU
            dt = delta_in * w_dt[...] + b_dt[...]
        else:
            dt = jnp.dot(delta_in, w_dt[...],
                         preferred_element_type=jnp.float32) + b_dt[...]
        softplus = jnp.maximum(dt, 0.0) + jnp.log(1.0 + jnp.exp(-jnp.abs(dt)))
        delta = jnp.where(dt > 20.0, dt, softplus)

        A_T = -jnp.exp(a_logT[...])                   # (NS, DIp)

        # ---- stash scan inputs once (lane-dense rows) ----
        dl_ref[...] = delta
        du_ref[...] = delta * xc
        bc_ref[...] = jnp.concatenate([Bm, Cm], axis=1)   # (M, 2*NS)

        eye = (jax.lax.broadcasted_iota(jnp.int32, (NS, NS), 0) ==
               jax.lax.broadcasted_iota(jnp.int32, (NS, NS), 1))

        # ---- selective scan: fori over time, h = (NS, DIp) (d_inner on lanes) ----
        for b in range(TB):
            base = b * L

            def body(l, h):
                r = base + l
                d_row = dl_ref[pl.ds(r, 1), :]        # (1, DIp)
                u_row = du_ref[pl.ds(r, 1), :]        # (1, DIp)
                bc_row = bc_ref[pl.ds(r, 1), :]       # (1, 2*NS)
                b_row = bc_row[:, :NS]
                c_row = bc_row[:, NS:]
                # lane -> sublane move of B[l] via broadcast + eye-mask + lane reduce
                b_col = jnp.sum(
                    jnp.where(eye, jnp.broadcast_to(b_row, (NS, NS)), 0.0),
                    axis=1, keepdims=True)            # (NS, 1)
                dA = jnp.exp(d_row * A_T)             # (NS, DIp)
                h = dA * h + b_col * u_row
                y_ref[pl.ds(r, 1), :] = jnp.dot(      # (1, DIp) lane-dense store
                    c_row, h, preferred_element_type=jnp.float32)
                return h

            jax.lax.fori_loop(0, L, body,
                              jnp.zeros((NS, DIp), jnp.float32),
                              unroll=(L <= 16))

        y = y_ref[...]                                # (M, DIp)
        y = y + xc * d_vec[...]                       # skip (D) term
        y = y * (res * jax.nn.sigmoid(res))           # gate with SiLU(res)

        # ---- out_proj + LayerNorm over the real out_c channels (padded cols = 0) ----
        out = jnp.dot(y, w_out[...], preferred_element_type=jnp.float32)  # (M, OCp)
        col = jax.lax.broadcasted_iota(jnp.int32, out.shape, 1)
        real = col < out_c
        inv_n = 1.0 / float(out_c)
        mean = jnp.sum(jnp.where(real, out, 0.0), axis=-1, keepdims=True) * inv_n
        cent = jnp.where(real, out - mean, 0.0)
        var = jnp.sum(cent * cent, axis=-1, keepdims=True) * inv_n
        normed = cent * jax.lax.rsqrt(var + 1e-5)
        return normed * ln_w[...] + ln_b[...]         # padded cols remain exactly 0

    # ---------------- fused kernel: stage1 -> stage2 without leaving VMEM ----------
    def kernel(x_ref, *args):
        w1 = args[0:11]
        w2 = args[11:22]
        o_ref = args[22]
        scratch = args[23:28]

        x2d = x_ref[...].reshape(M, Cp)               # fold (TB, L) into matmul M
        h1 = _stage(x2d, w1, dtr1, scratch)           # ssm1 + ln1 -> (M, OCp)
        h2 = _stage(h1, w2, dtr2, scratch)            # ssm2 + ln2 -> (M, OCp)
        o_ref[...] = h2.reshape(TB, L, OCp)

    def _full_spec(w):
        nd = w.ndim
        return pl.BlockSpec(w.shape, lambda g, _nd=nd: (0,) * _nd)

    out_padded = pl.pallas_call(
        kernel,
        out_shape=jax.ShapeDtypeStruct((B, L, OCp), jnp.float32),
        grid=(G,),
        in_specs=[pl.BlockSpec((TB, L, Cp), lambda g: (g, 0, 0))]
                 + [_full_spec(w) for w in ws1 + ws2],
        out_specs=pl.BlockSpec((TB, L, OCp), lambda g: (g, 0, 0)),
        scratch_shapes=[
            pltpu.VMEM((PADROWS + M, DIp), jnp.float32),  # zero-padded conv input
            pltpu.VMEM((M, DIp), jnp.float32),            # delta
            pltpu.VMEM((M, DIp), jnp.float32),            # delta * u
            pltpu.VMEM((M, 2 * NS), jnp.float32),         # [B | C]
            pltpu.VMEM((M, DIp), jnp.float32),            # scan output y
        ],
        compiler_params=pltpu.CompilerParams(
            dimension_semantics=("parallel",),
            vmem_limit_bytes=32 * 1024 * 1024),
    )(x_pad, *ws1, *ws2)

    return out_padded[..., :out_c]


# ------------------------------ parameter init ------------------------------------
def init_mamba_ln_params(key, d_model, out_c, d_state=16, expand=2, d_conv=4):
    d_inner = expand * d_model
    dt_rank = max(1, math.ceil(d_model / 16))
    ks = jax.random.split(key, 6)
    s = 0.1
    return {
        "w_in": jax.random.normal(ks[0], (d_model, 2 * d_inner), jnp.float32) * s,
        "w_conv": jax.random.normal(ks[1], (d_conv, d_inner), jnp.float32) * s,
        "b_conv": jnp.zeros((1, d_inner), jnp.float32),
        "w_xproj": jax.random.normal(ks[2], (d_inner, dt_rank + 2 * d_state),
                                     jnp.float32) * s,
        "w_dt": jax.random.normal(ks[3], (dt_rank, d_inner), jnp.float32) * s,
        "b_dt": jax.random.normal(ks[4], (1, d_inner), jnp.float32) * s,
        "a_log": jnp.log(jnp.broadcast_to(
            jnp.arange(1, d_state + 1, dtype=jnp.float32), (d_inner, d_state))),
        "d": jnp.ones((1, d_inner), jnp.float32),
        "w_out": jax.random.normal(ks[5], (d_inner, out_c), jnp.float32) * s,
        "ln_w": jnp.ones((1, out_c), jnp.float32),
        "ln_b": jnp.zeros((1, out_c), jnp.float32),
    }


# ------------------------------ pure-JAX reference --------------------------------
def _mamba_ln_reference(x, p):
    """One (Mamba + LayerNorm) stage in plain JAX, for correctness checking."""
    d_inner = p["w_dt"].shape[1]
    dt_rank = p["w_dt"].shape[0]
    ns = p["a_log"].shape[1]
    K = p["w_conv"].shape[0]
    hp = jax.lax.Precision.HIGHEST
    L = x.shape[1]

    xr = jnp.einsum("bld,de->ble", x, p["w_in"], precision=hp)
    xz, res = xr[..., :d_inner], xr[..., d_inner:]

    xpad = jnp.pad(xz, ((0, 0), (K - 1, 0), (0, 0)))
    xc = sum(xpad[:, k:k + L, :] * p["w_conv"][k] for k in range(K)) + p["b_conv"]
    xc = xc * jax.nn.sigmoid(xc)

    xdbl = jnp.einsum("bld,de->ble", xc, p["w_xproj"], precision=hp)
    delta_in = xdbl[..., :dt_rank]
    Bm = xdbl[..., dt_rank:dt_rank + ns]
    Cm = xdbl[..., dt_rank + ns:]
    dt = jnp.einsum("blr,rd->bld", delta_in, p["w_dt"], precision=hp) + p["b_dt"]
    sp = jnp.maximum(dt, 0.0) + jnp.log(1.0 + jnp.exp(-jnp.abs(dt)))
    delta = jnp.where(dt > 20.0, dt, sp)
    A = -jnp.exp(p["a_log"])                          # (d_inner, ns)

    def step(h, inp):
        d_t, u_t, b_t, c_t = inp
        dA = jnp.exp(d_t[:, :, None] * A[None])
        dBu = (d_t * u_t)[:, :, None] * b_t[:, None, :]
        h = dA * h + dBu
        return h, jnp.sum(h * c_t[:, None, :], axis=-1)

    h0 = jnp.zeros((x.shape[0], d_inner, ns), jnp.float32)
    _, ys = jax.lax.scan(step, h0, (jnp.moveaxis(delta, 1, 0),
                                    jnp.moveaxis(xc, 1, 0),
                                    jnp.moveaxis(Bm, 1, 0),
                                    jnp.moveaxis(Cm, 1, 0)))
    y = jnp.moveaxis(ys, 0, 1)
    y = y + xc * p["d"]
    y = y * (res * jax.nn.sigmoid(res))
    out = jnp.einsum("bld,de->ble", y, p["w_out"], precision=hp)
    mean = jnp.mean(out, axis=-1, keepdims=True)
    var = jnp.mean((out - mean) ** 2, axis=-1, keepdims=True)
    return (out - mean) * jax.lax.rsqrt(var + 1e-5) * p["ln_w"] + p["ln_b"]


if __name__ == "__main__":
    key = jax.random.PRNGKey(0)
    B, L = 2, 8
    n_channels, out_channels = 4, 8

    k_x, k1, k2 = jax.random.split(key, 3)
    x = jax.random.normal(k_x, (B, L, n_channels), jnp.float32)

    # ssm1: d_model=n_channels -> out_channels ; ssm2: out_channels -> out_channels
    p1 = init_mamba_ln_params(k1, n_channels, out_channels)
    p2 = init_mamba_ln_params(k2, out_channels, out_channels)

    y = double_ssm_block(x, p1, p2)
    jax.block_until_ready(y)
    assert y.shape == (B, L, out_channels)

    ref = _mamba_ln_reference(_mamba_ln_reference(x, p1), p2)
    err = float(jnp.max(jnp.abs(y - ref)))
    assert err < 5e-3, f"kernel/reference mismatch: max abs err {err}"
    print("KERNEL_OK")
</pallas_src>

<mosaic_0001>
module attributes {stable_mosaic.version = 11 : i64} {
  func.func @kernel(%arg0: i32, %arg1: memref<1x8x128xf32, #tpu.memory_space<vmem>>, %arg2: memref<128x256xf32, #tpu.memory_space<vmem>>, %arg3: memref<4x128xf32, #tpu.memory_space<vmem>>, %arg4: memref<1x128xf32, #tpu.memory_space<vmem>>, %arg5: memref<128x128xf32, #tpu.memory_space<vmem>>, %arg6: memref<1x128xf32, #tpu.memory_space<vmem>>, %arg7: memref<1x128xf32, #tpu.memory_space<vmem>>, %arg8: memref<16x128xf32, #tpu.memory_space<vmem>>, %arg9: memref<1x128xf32, #tpu.memory_space<vmem>>, %arg10: memref<128x128xf32, #tpu.memory_space<vmem>>, %arg11: memref<1x128xf32, #tpu.memory_space<vmem>>, %arg12: memref<1x128xf32, #tpu.memory_space<vmem>>, %arg13: memref<128x256xf32, #tpu.memory_space<vmem>>, %arg14: memref<4x128xf32, #tpu.memory_space<vmem>>, %arg15: memref<1x128xf32, #tpu.memory_space<vmem>>, %arg16: memref<128x128xf32, #tpu.memory_space<vmem>>, %arg17: memref<1x128xf32, #tpu.memory_space<vmem>>, %arg18: memref<1x128xf32, #tpu.memory_space<vmem>>, %arg19: memref<16x128xf32, #tpu.memory_space<vmem>>, %arg20: memref<1x128xf32, #tpu.memory_space<vmem>>, %arg21: memref<128x128xf32, #tpu.memory_space<vmem>>, %arg22: memref<1x128xf32, #tpu.memory_space<vmem>>, %arg23: memref<1x128xf32, #tpu.memory_space<vmem>>, %arg24: memref<1x8x128xf32, #tpu.memory_space<vmem>>, %arg25: memref<16x128xf32, #tpu.memory_space<vmem>>, %arg26: memref<8x128xf32, #tpu.memory_space<vmem>>, %arg27: memref<8x128xf32, #tpu.memory_space<vmem>>, %arg28: memref<8x32xf32, #tpu.memory_space<vmem>>, %arg29: memref<8x128xf32, #tpu.memory_space<vmem>>) attributes {dimension_semantics = [#tpu.dimension_semantics<parallel>], iteration_bounds = array<i64: 2>, scalar_prefetch = 0 : i64, scratch_operands = 5 : i64, tpu.core_type = #tpu.core_type<tc>, window_params = [{transform_indices = @transform_0, window_bounds = array<i64: 1, 8, 128>}, {pipeline_mode = #tpu.pipeline_mode<synchronous>, transform_indices = @transform_1, window_bounds = array<i64: 128, 256>}, {pipeline_mode = #tpu.pipeline_mode<synchronous>, transform_indices = @transform_2, window_bounds = array<i64: 4, 128>}, {pipeline_mode = #tpu.pipeline_mode<synchronous>, transform_indices = @transform_3, window_bounds = array<i64: 1, 128>}, {pipeline_mode = #tpu.pipeline_mode<synchronous>, transform_indices = @transform_4, window_bounds = array<i64: 128, 128>}, {pipeline_mode = #tpu.pipeline_mode<synchronous>, transform_indices = @transform_5, window_bounds = array<i64: 1, 128>}, {pipeline_mode = #tpu.pipeline_mode<synchronous>, transform_indices = @transform_6, window_bounds = array<i64: 1, 128>}, {pipeline_mode = #tpu.pipeline_mode<synchronous>, transform_indices = @transform_7, window_bounds = array<i64: 16, 128>}, {pipeline_mode = #tpu.pipeline_mode<synchronous>, transform_indices = @transform_8, window_bounds = array<i64: 1, 128>}, {pipeline_mode = #tpu.pipeline_mode<synchronous>, transform_indices = @transform_9, window_bounds = array<i64: 128, 128>}, {pipeline_mode = #tpu.pipeline_mode<synchronous>, transform_indices = @transform_10, window_bounds = array<i64: 1, 128>}, {pipeline_mode = #tpu.pipeline_mode<synchronous>, transform_indices = @transform_11, window_bounds = array<i64: 1, 128>}, {pipeline_mode = #tpu.pipeline_mode<synchronous>, transform_indices = @transform_12, window_bounds = array<i64: 128, 256>}, {pipeline_mode = #tpu.pipeline_mode<synchronous>, transform_indices = @transform_13, window_bounds = array<i64: 4, 128>}, {pipeline_mode = #tpu.pipeline_mode<synchronous>, transform_indices = @transform_14, window_bounds = array<i64: 1, 128>}, {pipeline_mode = #tpu.pipeline_mode<synchronous>, transform_indices = @transform_15, window_bounds = array<i64: 128, 128>}, {pipeline_mode = #tpu.pipeline_mode<synchronous>, transform_indices = @transform_16, window_bounds = array<i64: 1, 128>}, {pipeline_mode = #tpu.pipeline_mode<synchronous>, transform_indices = @transform_17, window_bounds = array<i64: 1, 128>}, {pipeline_mode = #tpu.pipeline_mode<synchronous>, transform_indices = @transform_18, window_bounds = array<i64: 16, 128>}, {pipeline_mode = #tpu.pipeline_mode<synchronous>, transform_indices = @transform_19, window_bounds = array<i64: 1, 128>}, {pipeline_mode = #tpu.pipeline_mode<synchronous>, transform_indices = @transform_20, window_bounds = array<i64: 128, 128>}, {pipeline_mode = #tpu.pipeline_mode<synchronous>, transform_indices = @transform_21, window_bounds = array<i64: 1, 128>}, {pipeline_mode = #tpu.pipeline_mode<synchronous>, transform_indices = @transform_22, window_bounds = array<i64: 1, 128>}, {transform_indices = @transform_23, window_bounds = array<i64: 1, 8, 128>}]} {
    %c0 = arith.constant 0 : index
    %c0_0 = arith.constant 0 : index
    %c0_1 = arith.constant 0 : index
    %0 = vector.load %arg1[%c0, %c0_0, %c0_1] : memref<1x8x128xf32, #tpu.memory_space<vmem>>, vector<1x8x128xf32>
    %1 = vector.shape_cast %0 : vector<1x8x128xf32> to vector<8x128xf32>
    %c0_2 = arith.constant 0 : index
    %c0_3 = arith.constant 0 : index
    %2 = vector.load %arg2[%c0_2, %c0_3] : memref<128x256xf32, #tpu.memory_space<vmem>>, vector<128x256xf32>
    %cst = arith.constant dense<0.000000e+00> : vector<8x256xf32>
    %3 = tpu.matmul %1, %2, %cst {dimension_numbers = #tpu.dot_dimension_numbers<[1], [0], [0], [1], [0, 0, 1, 1], [], []>} : vector<8x128xf32>, vector<128x256xf32>, vector<8x256xf32> -> vector<8x256xf32>
    %4 = vector.extract_strided_slice %3 {offsets = [0, 0], sizes = [8, 128], strides = [1, 1]} : vector<8x256xf32> to vector<8x128xf32>
    %5 = vector.extract_strided_slice %3 {offsets = [0, 128], sizes = [8, 128], strides = [1, 1]} : vector<8x256xf32> to vector<8x128xf32>
    %cst_4 = arith.constant 0.000000e+00 : f32
    %6 = vector.broadcast %cst_4 : f32 to vector<8x128xf32>
    %c0_5 = arith.constant 0 : index
    %c0_6 = arith.constant 0 : index
    %7 = vector.load %arg25[%c0_5, %c0_6] : memref<16x128xf32, #tpu.memory_space<vmem>>, vector<8x128xf32>
    tpu.vector_store %arg25[%c0_5, %c0_6], %6 {strides = array<i32>} : memref<16x128xf32, #tpu.memory_space<vmem>>, vector<8x128xf32>,
    %c8 = arith.constant 8 : index
    %c0_7 = arith.constant 0 : index
    %8 = vector.load %arg25[%c8, %c0_7] : memref<16x128xf32, #tpu.memory_space<vmem>>, vector<8x128xf32>
    tpu.vector_store %arg25[%c8, %c0_7], %4 {strides = array<i32>} : memref<16x128xf32, #tpu.memory_space<vmem>>, vector<8x128xf32>,
    %c3 = arith.constant 3 : index
    %c0_8 = arith.constant 0 : index
    %9 = vector.load %arg3[%c3, %c0_8] : memref<4x128xf32, #tpu.memory_space<vmem>>, vector<1x128xf32>
    %10 = vector.broadcast %9 : vector<1x128xf32> to vector<8x128xf32>
    %11 = arith.mulf %4, %10 : vector<8x128xf32>
    %c5 = arith.constant 5 : index
    %c0_9 = arith.constant 0 : index
    %12 = vector.load %arg25[%c5, %c0_9] : memref<16x128xf32, #tpu.memory_space<vmem>>, vector<8x128xf32>
    %c0_10 = arith.constant 0 : index
    %c0_11 = arith.constant 0 : index
    %13 = vector.load %arg3[%c0_10, %c0_11] : memref<4x128xf32, #tpu.memory_space<vmem>>, vector<1x128xf32>
    %14 = vector.broadcast %13 : vector<1x128xf32> to vector<8x128xf32>
    %15 = arith.mulf %12, %14 : vector<8x128xf32>
    %16 = arith.addf %11, %15 : vector<8x128xf32>
    %c6 = arith.constant 6 : index
    %c0_12 = arith.constant 0 : index
    %17 = vector.load %arg25[%c6, %c0_12] : memref<16x128xf32, #tpu.memory_space<vmem>>, vector<8x128xf32>
    %c1 = arith.constant 1 : index
    %c0_13 = arith.constant 0 : index
    %18 = vector.load %arg3[%c1, %c0_13] : memref<4x128xf32, #tpu.memory_space<vmem>>, vector<1x128xf32>
    %19 = vector.broadcast %18 : vector<1x128xf32> to vector<8x128xf32>
    %20 = arith.mulf %17, %19 : vector<8x128xf32>
    %21 = arith.addf %16, %20 : vector<8x128xf32>
    %c7 = arith.constant 7 : index
    %c0_14 = arith.constant 0 : index
    %22 = vector.load %arg25[%c7, %c0_14] : memref<16x128xf32, #tpu.memory_space<vmem>>, vector<8x128xf32>
    %c2 = arith.constant 2 : index
    %c0_15 = arith.constant 0 : index
    %23 = vector.load %arg3[%c2, %c0_15] : memref<4x128xf32, #tpu.memory_space<vmem>>, vector<1x128xf32>
    %24 = vector.broadcast %23 : vector<1x128xf32> to vector<8x128xf32>
    %25 = arith.mulf %22, %24 : vector<8x128xf32>
    %26 = arith.addf %21, %25 : vector<8x128xf32>
    %c0_16 = arith.constant 0 : index
    %c0_17 = arith.constant 0 : index
    %27 = vector.load %arg4[%c0_16, %c0_17] : memref<1x128xf32, #tpu.memory_space<vmem>>, vector<1x128xf32>
    %28 = vector.broadcast %27 : vector<1x128xf32> to vector<8x128xf32>
    %29 = arith.addf %26, %28 : vector<8x128xf32>
    %30 = arith.negf %29 : vector<8x128xf32>
    %31 = math.exp %30 : vector<8x128xf32>
    %cst_18 = arith.constant 1.000000e+00 : f32
    %32 = vector.broadcast %cst_18 : f32 to vector<8x128xf32>
    %33 = arith.addf %32, %31 : vector<8x128xf32>
    %34 = arith.divf %32, %33 : vector<8x128xf32>
    %35 = arith.mulf %29, %34 : vector<8x128xf32>
    %c0_19 = arith.constant 0 : index
    %c0_20 = arith.constant 0 : index
    %36 = vector.load %arg5[%c0_19, %c0_20] : memref<128x128xf32, #tpu.memory_space<vmem>>, vector<128x128xf32>
    %cst_21 = arith.constant dense<0.000000e+00> : vector<8x128xf32>
    %37 = tpu.matmul %35, %36, %cst_21 {dimension_numbers = #tpu.dot_dimension_numbers<[1], [0], [0], [1], [0, 0, 1, 1], [], []>} : vector<8x128xf32>, vector<128x128xf32>, vector<8x128xf32> -> vector<8x128xf32>
    %38 = vector.extract_strided_slice %37 {offsets = [0, 0], sizes = [8, 1], strides = [1, 1]} : vector<8x128xf32> to vector<8x1xf32>
    %39 = vector.extract_strided_slice %37 {offsets = [0, 1], sizes = [8, 16], strides = [1, 1]} : vector<8x128xf32> to vector<8x16xf32>
    %40 = vector.extract_strided_slice %37 {offsets = [0, 17], sizes = [8, 16], strides = [1, 1]} : vector<8x128xf32> to vector<8x16xf32>
    %c0_22 = arith.constant 0 : index
    %c0_23 = arith.constant 0 : index
    %41 = vector.load %arg6[%c0_22, %c0_23] : memref<1x128xf32, #tpu.memory_space<vmem>>, vector<1x128xf32>
    %42 = vector.broadcast %38 : vector<8x1xf32> to vector<8x128xf32>
    %43 = vector.broadcast %41 : vector<1x128xf32> to vector<8x128xf32>
    %44 = arith.mulf %42, %43 : vector<8x128xf32>
    %c0_24 = arith.constant 0 : index
    %c0_25 = arith.constant 0 : index
    %45 = vector.load %arg7[%c0_24, %c0_25] : memref<1x128xf32, #tpu.memory_space<vmem>>, vector<1x128xf32>
    %46 = vector.broadcast %45 : vector<1x128xf32> to vector<8x128xf32>
    %47 = arith.addf %44, %46 : vector<8x128xf32>
    %cst_26 = arith.constant 0.000000e+00 : f32
    %48 = vector.broadcast %cst_26 : f32 to vector<8x128xf32>
    %49 = arith.maximumf %47, %48 : vector<8x128xf32>
    %50 = math.absf %47 : vector<8x128xf32>
    %cst_27 = arith.constant 0.000000e+00 : f32
    %51 = vector.broadcast %cst_27 : f32 to vector<8x128xf32>
    %52 = arith.subf %51, %50 : vector<8x128xf32>
    %53 = math.exp %52 : vector<8x128xf32>
    %cst_28 = arith.constant 1.000000e+00 : f32
    %54 = vector.broadcast %cst_28 : f32 to vector<8x128xf32>
    %55 = arith.addf %54, %53 : vector<8x128xf32>
    %56 = math.log %55 : vector<8x128xf32>
    %57 = arith.addf %49, %56 : vector<8x128xf32>
    %cst_29 = arith.constant 2.000000e+01 : f32
    %58 = vector.broadcast %cst_29 : f32 to vector<8x128xf32>
    %59 = arith.cmpf ogt, %47, %58 : vector<8x128xf32>
    %60 = arith.select %59, %47, %57 : vector<8x128xi1>, vector<8x128xf32>
    %c0_30 = arith.constant 0 : index
    %c0_31 = arith.constant 0 : index
    %61 = vector.load %arg8[%c0_30, %c0_31] : memref<16x128xf32, #tpu.memory_space<vmem>>, vector<16x128xf32>
    %62 = math.exp %61 : vector<16x128xf32>
    %cst_32 = arith.constant 0.000000e+00 : f32
    %63 = vector.broadcast %cst_32 : f32 to vector<16x128xf32>
    %64 = arith.subf %63, %62 : vector<16x128xf32>
    %c0_33 = arith.constant 0 : index
    %c0_34 = arith.constant 0 : index
    %65 = vector.load %arg26[%c0_33, %c0_34] : memref<8x128xf32, #tpu.memory_space<vmem>>, vector<8x128xf32>
    tpu.vector_store %arg26[%c0_33, %c0_34], %60 {strides = array<i32>} : memref<8x128xf32, #tpu.memory_space<vmem>>, vector<8x128xf32>,
    %66 = arith.mulf %60, %35 : vector<8x128xf32>
    %c0_35 = arith.constant 0 : index
    %c0_36 = arith.constant 0 : index
    %67 = vector.load %arg27[%c0_35, %c0_36] : memref<8x128xf32, #tpu.memory_space<vmem>>, vector<8x128xf32>
    tpu.vector_store %arg27[%c0_35, %c0_36], %66 {strides = array<i32>} : memref<8x128xf32, #tpu.memory_space<vmem>>, vector<8x128xf32>,
    %68 = tpu.concatenate %39, %40 in 1 : vector<8x16xf32>, vector<8x16xf32> -> vector<8x32xf32>
    %c0_37 = arith.constant 0 : index
    %c0_38 = arith.constant 0 : index
    %69 = vector.load %arg28[%c0_37, %c0_38] : memref<8x32xf32, #tpu.memory_space<vmem>>, vector<8x32xf32>
    tpu.vector_store %arg28[%c0_37, %c0_38], %68 {strides = array<i32>} : memref<8x32xf32, #tpu.memory_space<vmem>>, vector<8x32xf32>,
    %70 = tpu.iota {dimensions = array<i32: 0>} : vector<16x16xi32>
    %71 = tpu.iota {dimensions = array<i32: 1>} : vector<16x16xi32>
    %72 = arith.cmpi eq, %70, %71 : vector<16x16xi32>
    %cst_39 = arith.constant 0.000000e+00 : f32
    %73 = vector.broadcast %cst_39 : f32 to vector<16x128xf32>
    %c0_i32 = arith.constant 0 : i32
    %c0_i32_40 = arith.constant 0 : i32
    %74 = arith.addi %c0_i32_40, %c0_i32 : i32
    %75 = arith.index_cast %74 : i32 to index
    %c0_41 = arith.constant 0 : index
    %76 = vector.load %arg26[%75, %c0_41] : memref<8x128xf32, #tpu.memory_space<vmem>>, vector<1x128xf32>
    %77 = arith.index_cast %74 : i32 to index
    %c0_42 = arith.constant 0 : index
    %78 = vector.load %arg27[%77, %c0_42] : memref<8x128xf32, #tpu.memory_space<vmem>>, vector<1x128xf32>
    %79 = arith.index_cast %74 : i32 to index
    %c0_43 = arith.constant 0 : index
    %80 = vector.load %arg28[%79, %c0_43] : memref<8x32xf32, #tpu.memory_space<vmem>>, vector<1x32xf32>
    %81 = vector.extract_strided_slice %80 {offsets = [0, 0], sizes = [1, 16], strides = [1, 1]} : vector<1x32xf32> to vector<1x16xf32>
    %82 = vector.extract_strided_slice %80 {offsets = [0, 16], sizes = [1, 16], strides = [1, 1]} : vector<1x32xf32> to vector<1x16xf32>
    %83 = vector.shape_cast %81 : vector<1x16xf32> to vector<1x16xf32>
    %84 = vector.broadcast %83 : vector<1x16xf32> to vector<16x16xf32>
    %cst_44 = arith.constant 0.000000e+00 : f32
    %85 = vector.broadcast %cst_44 : f32 to vector<16x16xf32>
    %86 = arith.select %72, %84, %85 : vector<16x16xi1>, vector<16x16xf32>
    %cst_45 = arith.constant dense<0.000000e+00> : vector<16xf32>
    %87 = vector.multi_reduction <add>, %86, %cst_45 [1] : vector<16x16xf32> to vector<16xf32>
    %88 = vector.shape_cast %87 : vector<16xf32> to vector<16x1xf32>
    %89 = vector.broadcast %76 : vector<1x128xf32> to vector<16x128xf32>
    %90 = arith.mulf %89, %64 : vector<16x128xf32>
    %91 = math.exp %90 : vector<16x128xf32>
    %92 = arith.mulf %91, %73 : vector<16x128xf32>
    %93 = vector.broadcast %88 : vector<16x1xf32> to vector<16x128xf32>
    %94 = vector.broadcast %78 : vector<1x128xf32> to vector<16x128xf32>
    %95 = arith.mulf %93, %94 : vector<16x128xf32>
    %96 = arith.addf %92, %95 : vector<16x128xf32>
    %cst_46 = arith.constant dense<0.000000e+00> : vector<1x128xf32>
    %97 = tpu.matmul %82, %96, %cst_46 {dimension_numbers = #tpu.dot_dimension_numbers<[1], [0], [0], [1], [0, 0, 1, 1], [], []>} : vector<1x16xf32>, vector<16x128xf32>, vector<1x128xf32> -> vector<1x128xf32>
    %98 = arith.index_cast %74 : i32 to index
    %c0_47 = arith.constant 0 : index
    %99 = vector.load %arg29[%98, %c0_47] : memref<8x128xf32, #tpu.memory_space<vmem>>, vector<1x128xf32>
    tpu.vector_store %arg29[%98, %c0_47], %97 {strides = array<i32>} : memref<8x128xf32, #tpu.memory_space<vmem>>, vector<1x128xf32>,
    %c1_i32 = arith.constant 1 : i32
    %c0_i32_48 = arith.constant 0 : i32
    %100 = arith.addi %c0_i32_48, %c1_i32 : i32
    %101 = arith.index_cast %100 : i32 to index
    %c0_49 = arith.constant 0 : index
    %102 = vector.load %arg26[%101, %c0_49] : memref<8x128xf32, #tpu.memory_space<vmem>>, vector<1x128xf32>
    %103 = arith.index_cast %100 : i32 to index
    %c0_50 = arith.constant 0 : index
    %104 = vector.load %arg27[%103, %c0_50] : memref<8x128xf32, #tpu.memory_space<vmem>>, vector<1x128xf32>
    %105 = arith.index_cast %100 : i32 to index
    %c0_51 = arith.constant 0 : index
    %106 = vector.load %arg28[%105, %c0_51] : memref<8x32xf32, #tpu.memory_space<vmem>>, vector<1x32xf32>
    %107 = vector.extract_strided_slice %106 {offsets = [0, 0], sizes = [1, 16], strides = [1, 1]} : vector<1x32xf32> to vector<1x16xf32>
    %108 = vector.extract_strided_slice %106 {offsets = [0, 16], sizes = [1, 16], strides = [1, 1]} : vector<1x32xf32> to vector<1x16xf32>
    %109 = vector.shape_cast %107 : vector<1x16xf32> to vector<1x16xf32>
    %110 = vector.broadcast %109 : vector<1x16xf32> to vector<16x16xf32>
    %cst_52 = arith.constant 0.000000e+00 : f32
    %111 = vector.broadcast %cst_52 : f32 to vector<16x16xf32>
    %112 = arith.select %72, %110, %111 : vector<16x16xi1>, vector<16x16xf32>
    %cst_53 = arith.constant dense<0.000000e+00> : vector<16xf32>
    %113 = vector.multi_reduction <add>, %112, %cst_53 [1] : vector<16x16xf32> to vector<16xf32>
    %114 = vector.shape_cast %113 : vector<16xf32> to vector<16x1xf32>
    %115 = vector.broadcast %102 : vector<1x128xf32> to vector<16x128xf32>
    %116 = arith.mulf %115, %64 : vector<16x128xf32>
    %117 = math.exp %116 : vector<16x128xf32>
    %118 = arith.mulf %117, %96 : vector<16x128xf32>
    %119 = vector.broadcast %114 : vector<16x1xf32> to vector<16x128xf32>
    %120 = vector.broadcast %104 : vector<1x128xf32> to vector<16x128xf32>
    %121 = arith.mulf %119, %120 : vector<16x128xf32>
    %122 = arith.addf %118, %121 : vector<16x128xf32>
    %cst_54 = arith.constant dense<0.000000e+00> : vector<1x128xf32>
    %123 = tpu.matmul %108, %122, %cst_54 {dimension_numbers = #tpu.dot_dimension_numbers<[1], [0], [0], [1], [0, 0, 1, 1], [], []>} : vector<1x16xf32>, vector<16x128xf32>, vector<1x128xf32> -> vector<1x128xf32>
    %124 = arith.index_cast %100 : i32 to index
    %c0_55 = arith.constant 0 : index
    %125 = vector.load %arg29[%124, %c0_55] : memref<8x128xf32, #tpu.memory_space<vmem>>, vector<1x128xf32>
    tpu.vector_store %arg29[%124, %c0_55], %123 {strides = array<i32>} : memref<8x128xf32, #tpu.memory_space<vmem>>, vector<1x128xf32>,
    %c2_i32 = arith.constant 2 : i32
    %c0_i32_56 = arith.constant 0 : i32
    %126 = arith.addi %c0_i32_56, %c2_i32 : i32
    %127 = arith.index_cast %126 : i32 to index
    %c0_57 = arith.constant 0 : index
    %128 = vector.load %arg26[%127, %c0_57] : memref<8x128xf32, #tpu.memory_space<vmem>>, vector<1x128xf32>
    %129 = arith.index_cast %126 : i32 to index
    %c0_58 = arith.constant 0 : index
    %130 = vector.load %arg27[%129, %c0_58] : memref<8x128xf32, #tpu.memory_space<vmem>>, vector<1x128xf32>
    %131 = arith.index_cast %126 : i32 to index
    %c0_59 = arith.constant 0 : index
    %132 = vector.load %arg28[%131, %c0_59] : memref<8x32xf32, #tpu.memory_space<vmem>>, vector<1x32xf32>
    %133 = vector.extract_strided_slice %132 {offsets = [0, 0], sizes = [1, 16], strides = [1, 1]} : vector<1x32xf32> to vector<1x16xf32>
    %134 = vector.extract_strided_slice %132 {offsets = [0, 16], sizes = [1, 16], strides = [1, 1]} : vector<1x32xf32> to vector<1x16xf32>
    %135 = vector.shape_cast %133 : vector<1x16xf32> to vector<1x16xf32>
    %136 = vector.broadcast %135 : vector<1x16xf32> to vector<16x16xf32>
    %cst_60 = arith.constant 0.000000e+00 : f32
    %137 = vector.broadcast %cst_60 : f32 to vector<16x16xf32>
    %138 = arith.select %72, %136, %137 : vector<16x16xi1>, vector<16x16xf32>
    %cst_61 = arith.constant dense<0.000000e+00> : vector<16xf32>
    %139 = vector.multi_reduction <add>, %138, %cst_61 [1] : vector<16x16xf32> to vector<16xf32>
    %140 = vector.shape_cast %139 : vector<16xf32> to vector<16x1xf32>
    %141 = vector.broadcast %128 : vector<1x128xf32> to vector<16x128xf32>
    %142 = arith.mulf %141, %64 : vector<16x128xf32>
    %143 = math.exp %142 : vector<16x128xf32>
    %144 = arith.mulf %143, %122 : vector<16x128xf32>
    %145 = vector.broadcast %140 : vector<16x1xf32> to vector<16x128xf32>
    %146 = vector.broadcast %130 : vector<1x128xf32> to vector<16x128xf32>
    %147 = arith.mulf %145, %146 : vector<16x128xf32>
    %148 = arith.addf %144, %147 : vector<16x128xf32>
    %cst_62 = arith.constant dense<0.000000e+00> : vector<1x128xf32>
    %149 = tpu.matmul %134, %148, %cst_62 {dimension_numbers = #tpu.dot_dimension_numbers<[1], [0], [0], [1], [0, 0, 1, 1], [], []>} : vector<1x16xf32>, vector<16x128xf32>, vector<1x128xf32> -> vector<1x128xf32>
    %150 = arith.index_cast %126 : i32 to index
    %c0_63 = arith.constant 0 : index
    %151 = vector.load %arg29[%150, %c0_63] : memref<8x128xf32, #tpu.memory_space<vmem>>, vector<1x128xf32>
    tpu.vector_store %arg29[%150, %c0_63], %149 {strides = array<i32>} : memref<8x128xf32, #tpu.memory_space<vmem>>, vector<1x128xf32>,
    %c3_i32 = arith.constant 3 : i32
    %c0_i32_64 = arith.constant 0 : i32
    %152 = arith.addi %c0_i32_64, %c3_i32 : i32
    %153 = arith.index_cast %152 : i32 to index
    %c0_65 = arith.constant 0 : index
    %154 = vector.load %arg26[%153, %c0_65] : memref<8x128xf32, #tpu.memory_space<vmem>>, vector<1x128xf32>
    %155 = arith.index_cast %152 : i32 to index
    %c0_66 = arith.constant 0 : index
    %156 = vector.load %arg27[%155, %c0_66] : memref<8x128xf32, #tpu.memory_space<vmem>>, vector<1x128xf32>
    %157 = arith.index_cast %152 : i32 to index
    %c0_67 = arith.constant 0 : index
    %158 = vector.load %arg28[%157, %c0_67] : memref<8x32xf32, #tpu.memory_space<vmem>>, vector<1x32xf32>
    %159 = vector.extract_strided_slice %158 {offsets = [0, 0], sizes = [1, 16], strides = [1, 1]} : vector<1x32xf32> to vector<1x16xf32>
    %160 = vector.extract_strided_slice %158 {offsets = [0, 16], sizes = [1, 16], strides = [1, 1]} : vector<1x32xf32> to vector<1x16xf32>
    %161 = vector.shape_cast %159 : vector<1x16xf32> to vector<1x16xf32>
    %162 = vector.broadcast %161 : vector<1x16xf32> to vector<16x16xf32>
    %cst_68 = arith.constant 0.000000e+00 : f32
    %163 = vector.broadcast %cst_68 : f32 to vector<16x16xf32>
    %164 = arith.select %72, %162, %163 : vector<16x16xi1>, vector<16x16xf32>
    %cst_69 = arith.constant dense<0.000000e+00> : vector<16xf32>
    %165 = vector.multi_reduction <add>, %164, %cst_69 [1] : vector<16x16xf32> to vector<16xf32>
    %166 = vector.shape_cast %165 : vector<16xf32> to vector<16x1xf32>
    %167 = vector.broadcast %154 : vector<1x128xf32> to vector<16x128xf32>
    %168 = arith.mulf %167, %64 : vector<16x128xf32>
    %169 = math.exp %168 : vector<16x128xf32>
    %170 = arith.mulf %169, %148 : vector<16x128xf32>
    %171 = vector.broadcast %166 : vector<16x1xf32> to vector<16x128xf32>
    %172 = vector.broadcast %156 : vector<1x128xf32> to vector<16x128xf32>
    %173 = arith.mulf %171, %172 : vector<16x128xf32>
    %174 = arith.addf %170, %173 : vector<16x128xf32>
    %cst_70 = arith.constant dense<0.000000e+00> : vector<1x128xf32>
    %175 = tpu.matmul %160, %174, %cst_70 {dimension_numbers = #tpu.dot_dimension_numbers<[1], [0], [0], [1], [0, 0, 1, 1], [], []>} : vector<1x16xf32>, vector<16x128xf32>, vector<1x128xf32> -> vector<1x128xf32>
    %176 = arith.index_cast %152 : i32 to index
    %c0_71 = arith.constant 0 : index
    %177 = vector.load %arg29[%176, %c0_71] : memref<8x128xf32, #tpu.memory_space<vmem>>, vector<1x128xf32>
    tpu.vector_store %arg29[%176, %c0_71], %175 {strides = array<i32>} : memref<8x128xf32, #tpu.memory_space<vmem>>, vector<1x128xf32>,
    %c4_i32 = arith.constant 4 : i32
    %c0_i32_72 = arith.constant 0 : i32
    %178 = arith.addi %c0_i32_72, %c4_i32 : i32
    %179 = arith.index_cast %178 : i32 to index
    %c0_73 = arith.constant 0 : index
    %180 = vector.load %arg26[%179, %c0_73] : memref<8x128xf32, #tpu.memory_space<vmem>>, vector<1x128xf32>
    %181 = arith.index_cast %178 : i32 to index
    %c0_74 = arith.constant 0 : index
    %182 = vector.load %arg27[%181, %c0_74] : memref<8x128xf32, #tpu.memory_space<vmem>>, vector<1x128xf32>
    %183 = arith.index_cast %178 : i32 to index
    %c0_75 = arith.constant 0 : index
    %184 = vector.load %arg28[%183, %c0_75] : memref<8x32xf32, #tpu.memory_space<vmem>>, vector<1x32xf32>
    %185 = vector.extract_strided_slice %184 {offsets = [0, 0], sizes = [1, 16], strides = [1, 1]} : vector<1x32xf32> to vector<1x16xf32>
    %186 = vector.extract_strided_slice %184 {offsets = [0, 16], sizes = [1, 16], strides = [1, 1]} : vector<1x32xf32> to vector<1x16xf32>
    %187 = vector.shape_cast %185 : vector<1x16xf32> to vector<1x16xf32>
    %188 = vector.broadcast %187 : vector<1x16xf32> to vector<16x16xf32>
    %cst_76 = arith.constant 0.000000e+00 : f32
    %189 = vector.broadcast %cst_76 : f32 to vector<16x16xf32>
    %190 = arith.select %72, %188, %189 : vector<16x16xi1>, vector<16x16xf32>
    %cst_77 = arith.constant dense<0.000000e+00> : vector<16xf32>
    %191 = vector.multi_reduction <add>, %190, %cst_77 [1] : vector<16x16xf32> to vector<16xf32>
    %192 = vector.shape_cast %191 : vector<16xf32> to vector<16x1xf32>
    %193 = vector.broadcast %180 : vector<1x128xf32> to vector<16x128xf32>
    %194 = arith.mulf %193, %64 : vector<16x128xf32>
    %195 = math.exp %194 : vector<16x128xf32>
    %196 = arith.mulf %195, %174 : vector<16x128xf32>
    %197 = vector.broadcast %192 : vector<16x1xf32> to vector<16x128xf32>
    %198 = vector.broadcast %182 : vector<1x128xf32> to vector<16x128xf32>
    %199 = arith.mulf %197, %198 : vector<16x128xf32>
    %200 = arith.addf %196, %199 : vector<16x128xf32>
    %cst_78 = arith.constant dense<0.000000e+00> : vector<1x128xf32>
    %201 = tpu.matmul %186, %200, %cst_78 {dimension_numbers = #tpu.dot_dimension_numbers<[1], [0], [0], [1], [0, 0, 1, 1], [], []>} : vector<1x16xf32>, vector<16x128xf32>, vector<1x128xf32> -> vector<1x128xf32>
    %202 = arith.index_cast %178 : i32 to index
    %c0_79 = arith.constant 0 : index
    %203 = vector.load %arg29[%202, %c0_79] : memref<8x128xf32, #tpu.memory_space<vmem>>, vector<1x128xf32>
    tpu.vector_store %arg29[%202, %c0_79], %201 {strides = array<i32>} : memref<8x128xf32, #tpu.memory_space<vmem>>, vector<1x128xf32>,
    %c5_i32 = arith.constant 5 : i32
    %c0_i32_80 = arith.constant 0 : i32
    %204 = arith.addi %c0_i32_80, %c5_i32 : i32
    %205 = arith.index_cast %204 : i32 to index
    %c0_81 = arith.constant 0 : index
    %206 = vector.load %arg26[%205, %c0_81] : memref<8x128xf32, #tpu.memory_space<vmem>>, vector<1x128xf32>
    %207 = arith.index_cast %204 : i32 to index
    %c0_82 = arith.constant 0 : index
    %208 = vector.load %arg27[%207, %c0_82] : memref<8x128xf32, #tpu.memory_space<vmem>>, vector<1x128xf32>
    %209 = arith.index_cast %204 : i32 to index
    %c0_83 = arith.constant 0 : index
    %210 = vector.load %arg28[%209, %c0_83] : memref<8x32xf32, #tpu.memory_space<vmem>>, vector<1x32xf32>
    %211 = vector.extract_strided_slice %210 {offsets = [0, 0], sizes = [1, 16], strides = [1, 1]} : vector<1x32xf32> to vector<1x16xf32>
    %212 = vector.extract_strided_slice %210 {offsets = [0, 16], sizes = [1, 16], strides = [1, 1]} : vector<1x32xf32> to vector<1x16xf32>
    %213 = vector.shape_cast %211 : vector<1x16xf32> to vector<1x16xf32>
    %214 = vector.broadcast %213 : vector<1x16xf32> to vector<16x16xf32>
    %cst_84 = arith.constant 0.000000e+00 : f32
    %215 = vector.broadcast %cst_84 : f32 to vector<16x16xf32>
    %216 = arith.select %72, %214, %215 : vector<16x16xi1>, vector<16x16xf32>
    %cst_85 = arith.constant dense<0.000000e+00> : vector<16xf32>
    %217 = vector.multi_reduction <add>, %216, %cst_85 [1] : vector<16x16xf32> to vector<16xf32>
    %218 = vector.shape_cast %217 : vector<16xf32> to vector<16x1xf32>
    %219 = vector.broadcast %206 : vector<1x128xf32> to vector<16x128xf32>
    %220 = arith.mulf %219, %64 : vector<16x128xf32>
    %221 = math.exp %220 : vector<16x128xf32>
    %222 = arith.mulf %221, %200 : vector<16x128xf32>
    %223 = vector.broadcast %218 : vector<16x1xf32> to vector<16x128xf32>
    %224 = vector.broadcast %208 : vector<1x128xf32> to vector<16x128xf32>
    %225 = arith.mulf %223, %224 : vector<16x128xf32>
    %226 = arith.addf %222, %225 : vector<16x128xf32>
    %cst_86 = arith.constant dense<0.000000e+00> : vector<1x128xf32>
    %227 = tpu.matmul %212, %226, %cst_86 {dimension_numbers = #tpu.dot_dimension_numbers<[1], [0], [0], [1], [0, 0, 1, 1], [], []>} : vector<1x16xf32>, vector<16x128xf32>, vector<1x128xf32> -> vector<1x128xf32>
    %228 = arith.index_cast %204 : i32 to index
    %c0_87 = arith.constant 0 : index
    %229 = vector.load %arg29[%228, %c0_87] : memref<8x128xf32, #tpu.memory_space<vmem>>, vector<1x128xf32>
    tpu.vector_store %arg29[%228, %c0_87], %227 {strides = array<i32>} : memref<8x128xf32, #tpu.memory_space<vmem>>, vector<1x128xf32>,
    %c6_i32 = arith.constant 6 : i32
    %c0_i32_88 = arith.constant 0 : i32
    %230 = arith.addi %c0_i32_88, %c6_i32 : i32
    %231 = arith.index_cast %230 : i32 to index
    %c0_89 = arith.constant 0 : index
    %232 = vector.load %arg26[%231, %c0_89] : memref<8x128xf32, #tpu.memory_space<vmem>>, vector<1x128xf32>
    %233 = arith.index_cast %230 : i32 to index
    %c0_90 = arith.constant 0 : index
    %234 = vector.load %arg27[%233, %c0_90] : memref<8x128xf32, #tpu.memory_space<vmem>>, vector<1x128xf32>
    %235 = arith.index_cast %230 : i32 to index
    %c0_91 = arith.constant 0 : index
    %236 = vector.load %arg28[%235, %c0_91] : memref<8x32xf32, #tpu.memory_space<vmem>>, vector<1x32xf32>
    %237 = vector.extract_strided_slice %236 {offsets = [0, 0], sizes = [1, 16], strides = [1, 1]} : vector<1x32xf32> to vector<1x16xf32>
    %238 = vector.extract_strided_slice %236 {offsets = [0, 16], sizes = [1, 16], strides = [1, 1]} : vector<1x32xf32> to vector<1x16xf32>
    %239 = vector.shape_cast %237 : vector<1x16xf32> to vector<1x16xf32>
    %240 = vector.broadcast %239 : vector<1x16xf32> to vector<16x16xf32>
    %cst_92 = arith.constant 0.000000e+00 : f32
    %241 = vector.broadcast %cst_92 : f32 to vector<16x16xf32>
    %242 = arith.select %72, %240, %241 : vector<16x16xi1>, vector<16x16xf32>
    %cst_93 = arith.constant dense<0.000000e+00> : vector<16xf32>
    %243 = vector.multi_reduction <add>, %242, %cst_93 [1] : vector<16x16xf32> to vector<16xf32>
    %244 = vector.shape_cast %243 : vector<16xf32> to vector<16x1xf32>
    %245 = vector.broadcast %232 : vector<1x128xf32> to vector<16x128xf32>
    %246 = arith.mulf %245, %64 : vector<16x128xf32>
    %247 = math.exp %246 : vector<16x128xf32>
    %248 = arith.mulf %247, %226 : vector<16x128xf32>
    %249 = vector.broadcast %244 : vector<16x1xf32> to vector<16x128xf32>
    %250 = vector.broadcast %234 : vector<1x128xf32> to vector<16x128xf32>
    %251 = arith.mulf %249, %250 : vector<16x128xf32>
    %252 = arith.addf %248, %251 : vector<16x128xf32>
    %cst_94 = arith.constant dense<0.000000e+00> : vector<1x128xf32>
    %253 = tpu.matmul %238, %252, %cst_94 {dimension_numbers = #tpu.dot_dimension_numbers<[1], [0], [0], [1], [0, 0, 1, 1], [], []>} : vector<1x16xf32>, vector<16x128xf32>, vector<1x128xf32> -> vector<1x128xf32>
    %254 = arith.index_cast %230 : i32 to index
    %c0_95 = arith.constant 0 : index
    %255 = vector.load %arg29[%254, %c0_95] : memref<8x128xf32, #tpu.memory_space<vmem>>, vector<1x128xf32>
    tpu.vector_store %arg29[%254, %c0_95], %253 {strides = array<i32>} : memref<8x128xf32, #tpu.memory_space<vmem>>, vector<1x128xf32>,
    %c7_i32 = arith.constant 7 : i32
    %c0_i32_96 = arith.constant 0 : i32
    %256 = arith.addi %c0_i32_96, %c7_i32 : i32
    %257 = arith.index_cast %256 : i32 to index
    %c0_97 = arith.constant 0 : index
    %258 = vector.load %arg26[%257, %c0_97] : memref<8x128xf32, #tpu.memory_space<vmem>>, vector<1x128xf32>
    %259 = arith.index_cast %256 : i32 to index
    %c0_98 = arith.constant 0 : index
    %260 = vector.load %arg27[%259, %c0_98] : memref<8x128xf32, #tpu.memory_space<vmem>>, vector<1x128xf32>
    %261 = arith.index_cast %256 : i32 to index
    %c0_99 = arith.constant 0 : index
    %262 = vector.load %arg28[%261, %c0_99] : memref<8x32xf32, #tpu.memory_space<vmem>>, vector<1x32xf32>
    %263 = vector.extract_strided_slice %262 {offsets = [0, 0], sizes = [1, 16], strides = [1, 1]} : vector<1x32xf32> to vector<1x16xf32>
    %264 = vector.extract_strided_slice %262 {offsets = [0, 16], sizes = [1, 16], strides = [1, 1]} : vector<1x32xf32> to vector<1x16xf32>
    %265 = vector.shape_cast %263 : vector<1x16xf32> to vector<1x16xf32>
    %266 = vector.broadcast %265 : vector<1x16xf32> to vector<16x16xf32>
    %cst_100 = arith.constant 0.000000e+00 : f32
    %267 = vector.broadcast %cst_100 : f32 to vector<16x16xf32>
    %268 = arith.select %72, %266, %267 : vector<16x16xi1>, vector<16x16xf32>
    %cst_101 = arith.constant dense<0.000000e+00> : vector<16xf32>
    %269 = vector.multi_reduction <add>, %268, %cst_101 [1] : vector<16x16xf32> to vector<16xf32>
    %270 = vector.shape_cast %269 : vector<16xf32> to vector<16x1xf32>
    %271 = vector.broadcast %258 : vector<1x128xf32> to vector<16x128xf32>
    %272 = arith.mulf %271, %64 : vector<16x128xf32>
    %273 = math.exp %272 : vector<16x128xf32>
    %274 = arith.mulf %273, %252 : vector<16x128xf32>
    %275 = vector.broadcast %270 : vector<16x1xf32> to vector<16x128xf32>
    %276 = vector.broadcast %260 : vector<1x128xf32> to vector<16x128xf32>
    %277 = arith.mulf %275, %276 : vector<16x128xf32>
    %278 = arith.addf %274, %277 : vector<16x128xf32>
    %cst_102 = arith.constant dense<0.000000e+00> : vector<1x128xf32>
    %279 = tpu.matmul %264, %278, %cst_102 {dimension_numbers = #tpu.dot_dimension_numbers<[1], [0], [0], [1], [0, 0, 1, 1], [], []>} : vector<1x16xf32>, vector<16x128xf32>, vector<1x128xf32> -> vector<1x128xf32>
    %280 = arith.index_cast %256 : i32 to index
    %c0_103 = arith.constant 0 : index
    %281 = vector.load %arg29[%280, %c0_103] : memref<8x128xf32, #tpu.memory_space<vmem>>, vector<1x128xf32>
    tpu.vector_store %arg29[%280, %c0_103], %279 {strides = array<i32>} : memref<8x128xf32, #tpu.memory_space<vmem>>, vector<1x128xf32>,
    %c8_i32 = arith.constant 8 : i32
    %c0_104 = arith.constant 0 : index
    %c0_105 = arith.constant 0 : index
    %282 = vector.load %arg29[%c0_104, %c0_105] : memref<8x128xf32, #tpu.memory_space<vmem>>, vector<8x128xf32>
    %c0_106 = arith.constant 0 : index
    %c0_107 = arith.constant 0 : index
    %283 = vector.load %arg9[%c0_106, %c0_107] : memref<1x128xf32, #tpu.memory_space<vmem>>, vector<1x128xf32>
    %284 = vector.broadcast %283 : vector<1x128xf32> to vector<8x128xf32>
    %285 = arith.mulf %35, %284 : vector<8x128xf32>
    %286 = arith.addf %282, %285 : vector<8x128xf32>
    %287 = arith.negf %5 : vector<8x128xf32>
    %288 = math.exp %287 : vector<8x128xf32>
    %cst_108 = arith.constant 1.000000e+00 : f32
    %289 = vector.broadcast %cst_108 : f32 to vector<8x128xf32>
    %290 = arith.addf %289, %288 : vector<8x128xf32>
    %291 = arith.divf %289, %290 : vector<8x128xf32>
    %292 = arith.mulf %5, %291 : vector<8x128xf32>
    %293 = arith.mulf %286, %292 : vector<8x128xf32>
    %c0_109 = arith.constant 0 : index
    %c0_110 = arith.constant 0 : index
    %294 = vector.load %arg10[%c0_109, %c0_110] : memref<128x128xf32, #tpu.memory_space<vmem>>, vector<128x128xf32>
    %cst_111 = arith.constant dense<0.000000e+00> : vector<8x128xf32>
    %295 = tpu.matmul %293, %294, %cst_111 {dimension_numbers = #tpu.dot_dimension_numbers<[1], [0], [0], [1], [0, 0, 1, 1], [], []>} : vector<8x128xf32>, vector<128x128xf32>, vector<8x128xf32> -> vector<8x128xf32>
    %296 = tpu.iota {dimensions = array<i32: 1>} : vector<8x128xi32>
    %c8_i32_112 = arith.constant 8 : i32
    %297 = vector.broadcast %c8_i32_112 : i32 to vector<8x128xi32>
    %298 = arith.cmpi slt, %296, %297 : vector<8x128xi32>
    %cst_113 = arith.constant 0.000000e+00 : f32
    %299 = vector.broadcast %cst_113 : f32 to vector<8x128xf32>
    %300 = arith.select %298, %295, %299 : vector<8x128xi1>, vector<8x128xf32>
    %cst_114 = arith.constant dense<0.000000e+00> : vector<8xf32>
    %301 = vector.multi_reduction <add>, %300, %cst_114 [1] : vector<8x128xf32> to vector<8xf32>
    %302 = vector.shape_cast %301 : vector<8xf32> to vector<8x1xf32>
    %cst_115 = arith.constant 1.250000e-01 : f32
    %303 = vector.broadcast %cst_115 : f32 to vector<8x1xf32>
    %304 = arith.mulf %302, %303 : vector<8x1xf32>
    %305 = vector.broadcast %304 : vector<8x1xf32> to vector<8x128xf32>
    %306 = arith.subf %295, %305 : vector<8x128xf32>
    %cst_116 = arith.constant 0.000000e+00 : f32
    %307 = vector.broadcast %cst_116 : f32 to vector<8x128xf32>
    %308 = arith.select %298, %306, %307 : vector<8x128xi1>, vector<8x128xf32>
    %309 = arith.mulf %308, %308 : vector<8x128xf32>
    %cst_117 = arith.constant dense<0.000000e+00> : vector<8xf32>
    %310 = vector.multi_reduction <add>, %309, %cst_117 [1] : vector<8x128xf32> to vector<8xf32>
    %311 = vector.shape_cast %310 : vector<8xf32> to vector<8x1xf32>
    %cst_118 = arith.constant 1.250000e-01 : f32
    %312 = vector.broadcast %cst_118 : f32 to vector<8x1xf32>
    %313 = arith.mulf %311, %312 : vector<8x1xf32>
    %cst_119 = arith.constant 9.99999974E-6 : f32
    %314 = vector.broadcast %cst_119 : f32 to vector<8x1xf32>
    %315 = arith.addf %313, %314 : vector<8x1xf32>
    %316 = math.rsqrt %315 : vector<8x1xf32>
    %317 = vector.broadcast %316 : vector<8x1xf32> to vector<8x128xf32>
    %318 = arith.mulf %308, %317 : vector<8x128xf32>
    %c0_120 = arith.constant 0 : index
    %c0_121 = arith.constant 0 : index
    %319 = vector.load %arg11[%c0_120, %c0_121] : memref<1x128xf32, #tpu.memory_space<vmem>>, vector<1x128xf32>
    %320 = vector.broadcast %319 : vector<1x128xf32> to vector<8x128xf32>
    %321 = arith.mulf %318, %320 : vector<8x128xf32>
    %c0_122 = arith.constant 0 : index
    %c0_123 = arith.constant 0 : index
    %322 = vector.load %arg12[%c0_122, %c0_123] : memref<1x128xf32, #tpu.memory_space<vmem>>, vector<1x128xf32>
    %323 = vector.broadcast %322 : vector<1x128xf32> to vector<8x128xf32>
    %324 = arith.addf %321, %323 : vector<8x128xf32>
    %c0_124 = arith.constant 0 : index
    %c0_125 = arith.constant 0 : index
    %325 = vector.load %arg13[%c0_124, %c0_125] : memref<128x256xf32, #tpu.memory_space<vmem>>, vector<128x256xf32>
    %cst_126 = arith.constant dense<0.000000e+00> : vector<8x256xf32>
    %326 = tpu.matmul %324, %325, %cst_126 {dimension_numbers = #tpu.dot_dimension_numbers<[1], [0], [0], [1], [0, 0, 1, 1], [], []>} : vector<8x128xf32>, vector<128x256xf32>, vector<8x256xf32> -> vector<8x256xf32>
    %327 = vector.extract_strided_slice %326 {offsets = [0, 0], sizes = [8, 128], strides = [1, 1]} : vector<8x256xf32> to vector<8x128xf32>
    %328 = vector.extract_strided_slice %326 {offsets = [0, 128], sizes = [8, 128], strides = [1, 1]} : vector<8x256xf32> to vector<8x128xf32>
    %cst_127 = arith.constant 0.000000e+00 : f32
    %329 = vector.broadcast %cst_127 : f32 to vector<8x128xf32>
    %c0_128 = arith.constant 0 : index
    %c0_129 = arith.constant 0 : index
    %330 = vector.load %arg25[%c0_128, %c0_129] : memref<16x128xf32, #tpu.memory_space<vmem>>, vector<8x128xf32>
    tpu.vector_store %arg25[%c0_128, %c0_129], %329 {strides = array<i32>} : memref<16x128xf32, #tpu.memory_space<vmem>>, vector<8x128xf32>,
    %c8_130 = arith.constant 8 : index
    %c0_131 = arith.constant 0 : index
    %331 = vector.load %arg25[%c8_130, %c0_131] : memref<16x128xf32, #tpu.memory_space<vmem>>, vector<8x128xf32>
    tpu.vector_store %arg25[%c8_130, %c0_131], %327 {strides = array<i32>} : memref<16x128xf32, #tpu.memory_space<vmem>>, vector<8x128xf32>,
    %c3_132 = arith.constant 3 : index
    %c0_133 = arith.constant 0 : index
    %332 = vector.load %arg14[%c3_132, %c0_133] : memref<4x128xf32, #tpu.memory_space<vmem>>, vector<1x128xf32>
    %333 = vector.broadcast %332 : vector<1x128xf32> to vector<8x128xf32>
    %334 = arith.mulf %327, %333 : vector<8x128xf32>
    %c5_134 = arith.constant 5 : index
    %c0_135 = arith.constant 0 : index
    %335 = vector.load %arg25[%c5_134, %c0_135] : memref<16x128xf32, #tpu.memory_space<vmem>>, vector<8x128xf32>
    %c0_136 = arith.constant 0 : index
    %c0_137 = arith.constant 0 : index
    %336 = vector.load %arg14[%c0_136, %c0_137] : memref<4x128xf32, #tpu.memory_space<vmem>>, vector<1x128xf32>
    %337 = vector.broadcast %336 : vector<1x128xf32> to vector<8x128xf32>
    %338 = arith.mulf %335, %337 : vector<8x128xf32>
    %339 = arith.addf %334, %338 : vector<8x128xf32>
    %c6_138 = arith.constant 6 : index
    %c0_139 = arith.constant 0 : index
    %340 = vector.load %arg25[%c6_138, %c0_139] : memref<16x128xf32, #tpu.memory_space<vmem>>, vector<8x128xf32>
    %c1_140 = arith.constant 1 : index
    %c0_141 = arith.constant 0 : index
    %341 = vector.load %arg14[%c1_140, %c0_141] : memref<4x128xf32, #tpu.memory_space<vmem>>, vector<1x128xf32>
    %342 = vector.broadcast %341 : vector<1x128xf32> to vector<8x128xf32>
    %343 = arith.mulf %340, %342 : vector<8x128xf32>
    %344 = arith.addf %339, %343 : vector<8x128xf32>
    %c7_142 = arith.constant 7 : index
    %c0_143 = arith.constant 0 : index
    %345 = vector.load %arg25[%c7_142, %c0_143] : memref<16x128xf32, #tpu.memory_space<vmem>>, vector<8x128xf32>
    %c2_144 = arith.constant 2 : index
    %c0_145 = arith.constant 0 : index
    %346 = vector.load %arg14[%c2_144, %c0_145] : memref<4x128xf32, #tpu.memory_space<vmem>>, vector<1x128xf32>
    %347 = vector.broadcast %346 : vector<1x128xf32> to vector<8x128xf32>
    %348 = arith.mulf %345, %347 : vector<8x128xf32>
    %349 = arith.addf %344, %348 : vector<8x128xf32>
    %c0_146 = arith.constant 0 : index
    %c0_147 = arith.constant 0 : index
    %350 = vector.load %arg15[%c0_146, %c0_147] : memref<1x128xf32, #tpu.memory_space<vmem>>, vector<1x128xf32>
    %351 = vector.broadcast %350 : vector<1x128xf32> to vector<8x128xf32>
    %352 = arith.addf %349, %351 : vector<8x128xf32>
    %353 = arith.negf %352 : vector<8x128xf32>
    %354 = math.exp %353 : vector<8x128xf32>
    %cst_148 = arith.constant 1.000000e+00 : f32
    %355 = vector.broadcast %cst_148 : f32 to vector<8x128xf32>
    %356 = arith.addf %355, %354 : vector<8x128xf32>
    %357 = arith.divf %355, %356 : vector<8x128xf32>
    %358 = arith.mulf %352, %357 : vector<8x128xf32>
    %c0_149 = arith.constant 0 : index
    %c0_150 = arith.constant 0 : index
    %359 = vector.load %arg16[%c0_149, %c0_150] : memref<128x128xf32, #tpu.memory_space<vmem>>, vector<128x128xf32>
    %cst_151 = arith.constant dense<0.000000e+00> : vector<8x128xf32>
    %360 = tpu.matmul %358, %359, %cst_151 {dimension_numbers = #tpu.dot_dimension_numbers<[1], [0], [0], [1], [0, 0, 1, 1], [], []>} : vector<8x128xf32>, vector<128x128xf32>, vector<8x128xf32> -> vector<8x128xf32>
    %361 = vector.extract_strided_slice %360 {offsets = [0, 0], sizes = [8, 1], strides = [1, 1]} : vector<8x128xf32> to vector<8x1xf32>
    %362 = vector.extract_strided_slice %360 {offsets = [0, 1], sizes = [8, 16], strides = [1, 1]} : vector<8x128xf32> to vector<8x16xf32>
    %363 = vector.extract_strided_slice %360 {offsets = [0, 17], sizes = [8, 16], strides = [1, 1]} : vector<8x128xf32> to vector<8x16xf32>
    %c0_152 = arith.constant 0 : index
    %c0_153 = arith.constant 0 : index
    %364 = vector.load %arg17[%c0_152, %c0_153] : memref<1x128xf32, #tpu.memory_space<vmem>>, vector<1x128xf32>
    %365 = vector.broadcast %361 : vector<8x1xf32> to vector<8x128xf32>
    %366 = vector.broadcast %364 : vector<1x128xf32> to vector<8x128xf32>
    %367 = arith.mulf %365, %366 : vector<8x128xf32>
    %c0_154 = arith.constant 0 : index
    %c0_155 = arith.constant 0 : index
    %368 = vector.load %arg18[%c0_154, %c0_155] : memref<1x128xf32, #tpu.memory_space<vmem>>, vector<1x128xf32>
    %369 = vector.broadcast %368 : vector<1x128xf32> to vector<8x128xf32>
    %370 = arith.addf %367, %369 : vector<8x128xf32>
    %cst_156 = arith.constant 0.000000e+00 : f32
    %371 = vector.broadcast %cst_156 : f32 to vector<8x128xf32>
    %372 = arith.maximumf %370, %371 : vector<8x128xf32>
    %373 = math.absf %370 : vector<8x128xf32>
    %cst_157 = arith.constant 0.000000e+00 : f32
    %374 = vector.broadcast %cst_157 : f32 to vector<8x128xf32>
    %375 = arith.subf %374, %373 : vector<8x128xf32>
    %376 = math.exp %375 : vector<8x128xf32>
    %cst_158 = arith.constant 1.000000e+00 : f32
    %377 = vector.broadcast %cst_158 : f32 to vector<8x128xf32>
    %378 = arith.addf %377, %376 : vector<8x128xf32>
    %379 = math.log %378 : vector<8x128xf32>
    %380 = arith.addf %372, %379 : vector<8x128xf32>
    %cst_159 = arith.constant 2.000000e+01 : f32
    %381 = vector.broadcast %cst_159 : f32 to vector<8x128xf32>
    %382 = arith.cmpf ogt, %370, %381 : vector<8x128xf32>
    %383 = arith.select %382, %370, %380 : vector<8x128xi1>, vector<8x128xf32>
    %c0_160 = arith.constant 0 : index
    %c0_161 = arith.constant 0 : index
    %384 = vector.load %arg19[%c0_160, %c0_161] : memref<16x128xf32, #tpu.memory_space<vmem>>, vector<16x128xf32>
    %385 = math.exp %384 : vector<16x128xf32>
    %cst_162 = arith.constant 0.000000e+00 : f32
    %386 = vector.broadcast %cst_162 : f32 to vector<16x128xf32>
    %387 = arith.subf %386, %385 : vector<16x128xf32>
    %c0_163 = arith.constant 0 : index
    %c0_164 = arith.constant 0 : index
    %388 = vector.load %arg26[%c0_163, %c0_164] : memref<8x128xf32, #tpu.memory_space<vmem>>, vector<8x128xf32>
    tpu.vector_store %arg26[%c0_163, %c0_164], %383 {strides = array<i32>} : memref<8x128xf32, #tpu.memory_space<vmem>>, vector<8x128xf32>,
    %389 = arith.mulf %383, %358 : vector<8x128xf32>
    %c0_165 = arith.constant 0 : index
    %c0_166 = arith.constant 0 : index
    %390 = vector.load %arg27[%c0_165, %c0_166] : memref<8x128xf32, #tpu.memory_space<vmem>>, vector<8x128xf32>
    tpu.vector_store %arg27[%c0_165, %c0_166], %389 {strides = array<i32>} : memref<8x128xf32, #tpu.memory_space<vmem>>, vector<8x128xf32>,
    %391 = tpu.concatenate %362, %363 in 1 : vector<8x16xf32>, vector<8x16xf32> -> vector<8x32xf32>
    %c0_167 = arith.constant 0 : index
    %c0_168 = arith.constant 0 : index
    %392 = vector.load %arg28[%c0_167, %c0_168] : memref<8x32xf32, #tpu.memory_space<vmem>>, vector<8x32xf32>
    tpu.vector_store %arg28[%c0_167, %c0_168], %391 {strides = array<i32>} : memref<8x32xf32, #tpu.memory_space<vmem>>, vector<8x32xf32>,
    %393 = tpu.iota {dimensions = array<i32: 0>} : vector<16x16xi32>
    %394 = tpu.iota {dimensions = array<i32: 1>} : vector<16x16xi32>
    %395 = arith.cmpi eq, %393, %394 : vector<16x16xi32>
    %cst_169 = arith.constant 0.000000e+00 : f32
    %396 = vector.broadcast %cst_169 : f32 to vector<16x128xf32>
    %c0_i32_170 = arith.constant 0 : i32
    %c0_i32_171 = arith.constant 0 : i32
    %397 = arith.addi %c0_i32_171, %c0_i32_170 : i32
    %398 = arith.index_cast %397 : i32 to index
    %c0_172 = arith.constant 0 : index
    %399 = vector.load %arg26[%398, %c0_172] : memref<8x128xf32, #tpu.memory_space<vmem>>, vector<1x128xf32>
    %400 = arith.index_cast %397 : i32 to index
    %c0_173 = arith.constant 0 : index
    %401 = vector.load %arg27[%400, %c0_173] : memref<8x128xf32, #tpu.memory_space<vmem>>, vector<1x128xf32>
    %402 = arith.index_cast %397 : i32 to index
    %c0_174 = arith.constant 0 : index
    %403 = vector.load %arg28[%402, %c0_174] : memref<8x32xf32, #tpu.memory_space<vmem>>, vector<1x32xf32>
    %404 = vector.extract_strided_slice %403 {offsets = [0, 0], sizes = [1, 16], strides = [1, 1]} : vector<1x32xf32> to vector<1x16xf32>
    %405 = vector.extract_strided_slice %403 {offsets = [0, 16], sizes = [1, 16], strides = [1, 1]} : vector<1x32xf32> to vector<1x16xf32>
    %406 = vector.shape_cast %404 : vector<1x16xf32> to vector<1x16xf32>
    %407 = vector.broadcast %406 : vector<1x16xf32> to vector<16x16xf32>
    %cst_175 = arith.constant 0.000000e+00 : f32
    %408 = vector.broadcast %cst_175 : f32 to vector<16x16xf32>
    %409 = arith.select %395, %407, %408 : vector<16x16xi1>, vector<16x16xf32>
    %cst_176 = arith.constant dense<0.000000e+00> : vector<16xf32>
    %410 = vector.multi_reduction <add>, %409, %cst_176 [1] : vector<16x16xf32> to vector<16xf32>
    %411 = vector.shape_cast %410 : vector<16xf32> to vector<16x1xf32>
    %412 = vector.broadcast %399 : vector<1x128xf32> to vector<16x128xf32>
    %413 = arith.mulf %412, %387 : vector<16x128xf32>
    %414 = math.exp %413 : vector<16x128xf32>
    %415 = arith.mulf %414, %396 : vector<16x128xf32>
    %416 = vector.broadcast %411 : vector<16x1xf32> to vector<16x128xf32>
    %417 = vector.broadcast %401 : vector<1x128xf32> to vector<16x128xf32>
    %418 = arith.mulf %416, %417 : vector<16x128xf32>
    %419 = arith.addf %415, %418 : vector<16x128xf32>
    %cst_177 = arith.constant dense<0.000000e+00> : vector<1x128xf32>
    %420 = tpu.matmul %405, %419, %cst_177 {dimension_numbers = #tpu.dot_dimension_numbers<[1], [0], [0], [1], [0, 0, 1, 1], [], []>} : vector<1x16xf32>, vector<16x128xf32>, vector<1x128xf32> -> vector<1x128xf32>
    %421 = arith.index_cast %397 : i32 to index
    %c0_178 = arith.constant 0 : index
    %422 = vector.load %arg29[%421, %c0_178] : memref<8x128xf32, #tpu.memory_space<vmem>>, vector<1x128xf32>
    tpu.vector_store %arg29[%421, %c0_178], %420 {strides = array<i32>} : memref<8x128xf32, #tpu.memory_space<vmem>>, vector<1x128xf32>,
    %c1_i32_179 = arith.constant 1 : i32
    %c0_i32_180 = arith.constant 0 : i32
    %423 = arith.addi %c0_i32_180, %c1_i32_179 : i32
    %424 = arith.index_cast %423 : i32 to index
    %c0_181 = arith.constant 0 : index
    %425 = vector.load %arg26[%424, %c0_181] : memref<8x128xf32, #tpu.memory_space<vmem>>, vector<1x128xf32>
    %426 = arith.index_cast %423 : i32 to index
    %c0_182 = arith.constant 0 : index
    %427 = vector.load %arg27[%426, %c0_182] : memref<8x128xf32, #tpu.memory_space<vmem>>, vector<1x128xf32>
    %428 = arith.index_cast %423 : i32 to index
    %c0_183 = arith.constant 0 : index
    %429 = vector.load %arg28[%428, %c0_183] : memref<8x32xf32, #tpu.memory_space<vmem>>, vector<1x32xf32>
    %430 = vector.extract_strided_slice %429 {offsets = [0, 0], sizes = [1, 16], strides = [1, 1]} : vector<1x32xf32> to vector<1x16xf32>
    %431 = vector.extract_strided_slice %429 {offsets = [0, 16], sizes = [1, 16], strides = [1, 1]} : vector<1x32xf32> to vector<1x16xf32>
    %432 = vector.shape_cast %430 : vector<1x16xf32> to vector<1x16xf32>
    %433 = vector.broadcast %432 : vector<1x16xf32> to vector<16x16xf32>
    %cst_184 = arith.constant 0.000000e+00 : f32
    %434 = vector.broadcast %cst_184 : f32 to vector<16x16xf32>
    %435 = arith.select %395, %433, %434 : vector<16x16xi1>, vector<16x16xf32>
    %cst_185 = arith.constant dense<0.000000e+00> : vector<16xf32>
    %436 = vector.multi_reduction <add>, %435, %cst_185 [1] : vector<16x16xf32> to vector<16xf32>
    %437 = vector.shape_cast %436 : vector<16xf32> to vector<16x1xf32>
    %438 = vector.broadcast %425 : vector<1x128xf32> to vector<16x128xf32>
    %439 = arith.mulf %438, %387 : vector<16x128xf32>
    %440 = math.exp %439 : vector<16x128xf32>
    %441 = arith.mulf %440, %419 : vector<16x128xf32>
    %442 = vector.broadcast %437 : vector<16x1xf32> to vector<16x128xf32>
    %443 = vector.broadcast %427 : vector<1x128xf32> to vector<16x128xf32>
    %444 = arith.mulf %442, %443 : vector<16x128xf32>
    %445 = arith.addf %441, %444 : vector<16x128xf32>
    %cst_186 = arith.constant dense<0.000000e+00> : vector<1x128xf32>
    %446 = tpu.matmul %431, %445, %cst_186 {dimension_numbers = #tpu.dot_dimension_numbers<[1], [0], [0], [1], [0, 0, 1, 1], [], []>} : vector<1x16xf32>, vector<16x128xf32>, vector<1x128xf32> -> vector<1x128xf32>
    %447 = arith.index_cast %423 : i32 to index
    %c0_187 = arith.constant 0 : index
    %448 = vector.load %arg29[%447, %c0_187] : memref<8x128xf32, #tpu.memory_space<vmem>>, vector<1x128xf32>
    tpu.vector_store %arg29[%447, %c0_187], %446 {strides = array<i32>} : memref<8x128xf32, #tpu.memory_space<vmem>>, vector<1x128xf32>,
    %c2_i32_188 = arith.constant 2 : i32
    %c0_i32_189 = arith.constant 0 : i32
    %449 = arith.addi %c0_i32_189, %c2_i32_188 : i32
    %450 = arith.index_cast %449 : i32 to index
    %c0_190 = arith.constant 0 : index
    %451 = vector.load %arg26[%450, %c0_190] : memref<8x128xf32, #tpu.memory_space<vmem>>, vector<1x128xf32>
    %452 = arith.index_cast %449 : i32 to index
    %c0_191 = arith.constant 0 : index
    %453 = vector.load %arg27[%452, %c0_191] : memref<8x128xf32, #tpu.memory_space<vmem>>, vector<1x128xf32>
    %454 = arith.index_cast %449 : i32 to index
    %c0_192 = arith.constant 0 : index
    %455 = vector.load %arg28[%454, %c0_192] : memref<8x32xf32, #tpu.memory_space<vmem>>, vector<1x32xf32>
    %456 = vector.extract_strided_slice %455 {offsets = [0, 0], sizes = [1, 16], strides = [1, 1]} : vector<1x32xf32> to vector<1x16xf32>
    %457 = vector.extract_strided_slice %455 {offsets = [0, 16], sizes = [1, 16], strides = [1, 1]} : vector<1x32xf32> to vector<1x16xf32>
    %458 = vector.shape_cast %456 : vector<1x16xf32> to vector<1x16xf32>
    %459 = vector.broadcast %458 : vector<1x16xf32> to vector<16x16xf32>
    %cst_193 = arith.constant 0.000000e+00 : f32
    %460 = vector.broadcast %cst_193 : f32 to vector<16x16xf32>
    %461 = arith.select %395, %459, %460 : vector<16x16xi1>, vector<16x16xf32>
    %cst_194 = arith.constant dense<0.000000e+00> : vector<16xf32>
    %462 = vector.multi_reduction <add>, %461, %cst_194 [1] : vector<16x16xf32> to vector<16xf32>
    %463 = vector.shape_cast %462 : vector<16xf32> to vector<16x1xf32>
    %464 = vector.broadcast %451 : vector<1x128xf32> to vector<16x128xf32>
    %465 = arith.mulf %464, %387 : vector<16x128xf32>
    %466 = math.exp %465 : vector<16x128xf32>
    %467 = arith.mulf %466, %445 : vector<16x128xf32>
    %468 = vector.broadcast %463 : vector<16x1xf32> to vector<16x128xf32>
    %469 = vector.broadcast %453 : vector<1x128xf32> to vector<16x128xf32>
    %470 = arith.mulf %468, %469 : vector<16x128xf32>
    %471 = arith.addf %467, %470 : vector<16x128xf32>
    %cst_195 = arith.constant dense<0.000000e+00> : vector<1x128xf32>
    %472 = tpu.matmul %457, %471, %cst_195 {dimension_numbers = #tpu.dot_dimension_numbers<[1], [0], [0], [1], [0, 0, 1, 1], [], []>} : vector<1x16xf32>, vector<16x128xf32>, vector<1x128xf32> -> vector<1x128xf32>
    %473 = arith.index_cast %449 : i32 to index
    %c0_196 = arith.constant 0 : index
    %474 = vector.load %arg29[%473, %c0_196] : memref<8x128xf32, #tpu.memory_space<vmem>>, vector<1x128xf32>
    tpu.vector_store %arg29[%473, %c0_196], %472 {strides = array<i32>} : memref<8x128xf32, #tpu.memory_space<vmem>>, vector<1x128xf32>,
    %c3_i32_197 = arith.constant 3 : i32
    %c0_i32_198 = arith.constant 0 : i32
    %475 = arith.addi %c0_i32_198, %c3_i32_197 : i32
    %476 = arith.index_cast %475 : i32 to index
    %c0_199 = arith.constant 0 : index
    %477 = vector.load %arg26[%476, %c0_199] : memref<8x128xf32, #tpu.memory_space<vmem>>, vector<1x128xf32>
    %478 = arith.index_cast %475 : i32 to index
    %c0_200 = arith.constant 0 : index
    %479 = vector.load %arg27[%478, %c0_200] : memref<8x128xf32, #tpu.memory_space<vmem>>, vector<1x128xf32>
    %480 = arith.index_cast %475 : i32 to index
    %c0_201 = arith.constant 0 : index
    %481 = vector.load %arg28[%480, %c0_201] : memref<8x32xf32, #tpu.memory_space<vmem>>, vector<1x32xf32>
    %482 = vector.extract_strided_slice %481 {offsets = [0, 0], sizes = [1, 16], strides = [1, 1]} : vector<1x32xf32> to vector<1x16xf32>
    %483 = vector.extract_strided_slice %481 {offsets = [0, 16], sizes = [1, 16], strides = [1, 1]} : vector<1x32xf32> to vector<1x16xf32>
    %484 = vector.shape_cast %482 : vector<1x16xf32> to vector<1x16xf32>
    %485 = vector.broadcast %484 : vector<1x16xf32> to vector<16x16xf32>
    %cst_202 = arith.constant 0.000000e+00 : f32
    %486 = vector.broadcast %cst_202 : f32 to vector<16x16xf32>
    %487 = arith.select %395, %485, %486 : vector<16x16xi1>, vector<16x16xf32>
    %cst_203 = arith.constant dense<0.000000e+00> : vector<16xf32>
    %488 = vector.multi_reduction <add>, %487, %cst_203 [1] : vector<16x16xf32> to vector<16xf32>
    %489 = vector.shape_cast %488 : vector<16xf32> to vector<16x1xf32>
    %490 = vector.broadcast %477 : vector<1x128xf32> to vector<16x128xf32>
    %491 = arith.mulf %490, %387 : vector<16x128xf32>
    %492 = math.exp %491 : vector<16x128xf32>
    %493 = arith.mulf %492, %471 : vector<16x128xf32>
    %494 = vector.broadcast %489 : vector<16x1xf32> to vector<16x128xf32>
    %495 = vector.broadcast %479 : vector<1x128xf32> to vector<16x128xf32>
    %496 = arith.mulf %494, %495 : vector<16x128xf32>
    %497 = arith.addf %493, %496 : vector<16x128xf32>
    %cst_204 = arith.constant dense<0.000000e+00> : vector<1x128xf32>
    %498 = tpu.matmul %483, %497, %cst_204 {dimension_numbers = #tpu.dot_dimension_numbers<[1], [0], [0], [1], [0, 0, 1, 1], [], []>} : vector<1x16xf32>, vector<16x128xf32>, vector<1x128xf32> -> vector<1x128xf32>
    %499 = arith.index_cast %475 : i32 to index
    %c0_205 = arith.constant 0 : index
    %500 = vector.load %arg29[%499, %c0_205] : memref<8x128xf32, #tpu.memory_space<vmem>>, vector<1x128xf32>
    tpu.vector_store %arg29[%499, %c0_205], %498 {strides = array<i32>} : memref<8x128xf32, #tpu.memory_space<vmem>>, vector<1x128xf32>,
    %c4_i32_206 = arith.constant 4 : i32
    %c0_i32_207 = arith.constant 0 : i32
    %501 = arith.addi %c0_i32_207, %c4_i32_206 : i32
    %502 = arith.index_cast %501 : i32 to index
    %c0_208 = arith.constant 0 : index
    %503 = vector.load %arg26[%502, %c0_208] : memref<8x128xf32, #tpu.memory_space<vmem>>, vector<1x128xf32>
    %504 = arith.index_cast %501 : i32 to index
    %c0_209 = arith.constant 0 : index
    %505 = vector.load %arg27[%504, %c0_209] : memref<8x128xf32, #tpu.memory_space<vmem>>, vector<1x128xf32>
    %506 = arith.index_cast %501 : i32 to index
    %c0_210 = arith.constant 0 : index
    %507 = vector.load %arg28[%506, %c0_210] : memref<8x32xf32, #tpu.memory_space<vmem>>, vector<1x32xf32>
    %508 = vector.extract_strided_slice %507 {offsets = [0, 0], sizes = [1, 16], strides = [1, 1]} : vector<1x32xf32> to vector<1x16xf32>
    %509 = vector.extract_strided_slice %507 {offsets = [0, 16], sizes = [1, 16], strides = [1, 1]} : vector<1x32xf32> to vector<1x16xf32>
    %510 = vector.shape_cast %508 : vector<1x16xf32> to vector<1x16xf32>
    %511 = vector.broadcast %510 : vector<1x16xf32> to vector<16x16xf32>
    %cst_211 = arith.constant 0.000000e+00 : f32
    %512 = vector.broadcast %cst_211 : f32 to vector<16x16xf32>
    %513 = arith.select %395, %511, %512 : vector<16x16xi1>, vector<16x16xf32>
    %cst_212 = arith.constant dense<0.000000e+00> : vector<16xf32>
    %514 = vector.multi_reduction <add>, %513, %cst_212 [1] : vector<16x16xf32> to vector<16xf32>
    %515 = vector.shape_cast %514 : vector<16xf32> to vector<16x1xf32>
    %516 = vector.broadcast %503 : vector<1x128xf32> to vector<16x128xf32>
    %517 = arith.mulf %516, %387 : vector<16x128xf32>
    %518 = math.exp %517 : vector<16x128xf32>
    %519 = arith.mulf %518, %497 : vector<16x128xf32>
    %520 = vector.broadcast %515 : vector<16x1xf32> to vector<16x128xf32>
    %521 = vector.broadcast %505 : vector<1x128xf32> to vector<16x128xf32>
    %522 = arith.mulf %520, %521 : vector<16x128xf32>
    %523 = arith.addf %519, %522 : vector<16x128xf32>
    %cst_213 = arith.constant dense<0.000000e+00> : vector<1x128xf32>
    %524 = tpu.matmul %509, %523, %cst_213 {dimension_numbers = #tpu.dot_dimension_numbers<[1], [0], [0], [1], [0, 0, 1, 1], [], []>} : vector<1x16xf32>, vector<16x128xf32>, vector<1x128xf32> -> vector<1x128xf32>
    %525 = arith.index_cast %501 : i32 to index
    %c0_214 = arith.constant 0 : index
    %526 = vector.load %arg29[%525, %c0_214] : memref<8x128xf32, #tpu.memory_space<vmem>>, vector<1x128xf32>
    tpu.vector_store %arg29[%525, %c0_214], %524 {strides = array<i32>} : memref<8x128xf32, #tpu.memory_space<vmem>>, vector<1x128xf32>,
    %c5_i32_215 = arith.constant 5 : i32
    %c0_i32_216 = arith.constant 0 : i32
    %527 = arith.addi %c0_i32_216, %c5_i32_215 : i32
    %528 = arith.index_cast %527 : i32 to index
    %c0_217 = arith.constant 0 : index
    %529 = vector.load %arg26[%528, %c0_217] : memref<8x128xf32, #tpu.memory_space<vmem>>, vector<1x128xf32>
    %530 = arith.index_cast %527 : i32 to index
    %c0_218 = arith.constant 0 : index
    %531 = vector.load %arg27[%530, %c0_218] : memref<8x128xf32, #tpu.memory_space<vmem>>, vector<1x128xf32>
    %532 = arith.index_cast %527 : i32 to index
    %c0_219 = arith.constant 0 : index
    %533 = vector.load %arg28[%532, %c0_219] : memref<8x32xf32, #tpu.memory_space<vmem>>, vector<1x32xf32>
    %534 = vector.extract_strided_slice %533 {offsets = [0, 0], sizes = [1, 16], strides = [1, 1]} : vector<1x32xf32> to vector<1x16xf32>
    %535 = vector.extract_strided_slice %533 {offsets = [0, 16], sizes = [1, 16], strides = [1, 1]} : vector<1x32xf32> to vector<1x16xf32>
    %536 = vector.shape_cast %534 : vector<1x16xf32> to vector<1x16xf32>
    %537 = vector.broadcast %536 : vector<1x16xf32> to vector<16x16xf32>
    %cst_220 = arith.constant 0.000000e+00 : f32
    %538 = vector.broadcast %cst_220 : f32 to vector<16x16xf32>
    %539 = arith.select %395, %537, %538 : vector<16x16xi1>, vector<16x16xf32>
    %cst_221 = arith.constant dense<0.000000e+00> : vector<16xf32>
    %540 = vector.multi_reduction <add>, %539, %cst_221 [1] : vector<16x16xf32> to vector<16xf32>
    %541 = vector.shape_cast %540 : vector<16xf32> to vector<16x1xf32>
    %542 = vector.broadcast %529 : vector<1x128xf32> to vector<16x128xf32>
    %543 = arith.mulf %542, %387 : vector<16x128xf32>
    %544 = math.exp %543 : vector<16x128xf32>
    %545 = arith.mulf %544, %523 : vector<16x128xf32>
    %546 = vector.broadcast %541 : vector<16x1xf32> to vector<16x128xf32>
    %547 = vector.broadcast %531 : vector<1x128xf32> to vector<16x128xf32>
    %548 = arith.mulf %546, %547 : vector<16x128xf32>
    %549 = arith.addf %545, %548 : vector<16x128xf32>
    %cst_222 = arith.constant dense<0.000000e+00> : vector<1x128xf32>
    %550 = tpu.matmul %535, %549, %cst_222 {dimension_numbers = #tpu.dot_dimension_numbers<[1], [0], [0], [1], [0, 0, 1, 1], [], []>} : vector<1x16xf32>, vector<16x128xf32>, vector<1x128xf32> -> vector<1x128xf32>
    %551 = arith.index_cast %527 : i32 to index
    %c0_223 = arith.constant 0 : index
    %552 = vector.load %arg29[%551, %c0_223] : memref<8x128xf32, #tpu.memory_space<vmem>>, vector<1x128xf32>
    tpu.vector_store %arg29[%551, %c0_223], %550 {strides = array<i32>} : memref<8x128xf32, #tpu.memory_space<vmem>>, vector<1x128xf32>,
    %c6_i32_224 = arith.constant 6 : i32
    %c0_i32_225 = arith.constant 0 : i32
    %553 = arith.addi %c0_i32_225, %c6_i32_224 : i32
    %554 = arith.index_cast %553 : i32 to index
    %c0_226 = arith.constant 0 : index
    %555 = vector.load %arg26[%554, %c0_226] : memref<8x128xf32, #tpu.memory_space<vmem>>, vector<1x128xf32>
    %556 = arith.index_cast %553 : i32 to index
    %c0_227 = arith.constant 0 : index
    %557 = vector.load %arg27[%556, %c0_227] : memref<8x128xf32, #tpu.memory_space<vmem>>, vector<1x128xf32>
    %558 = arith.index_cast %553 : i32 to index
    %c0_228 = arith.constant 0 : index
    %559 = vector.load %arg28[%558, %c0_228] : memref<8x32xf32, #tpu.memory_space<vmem>>, vector<1x32xf32>
    %560 = vector.extract_strided_slice %559 {offsets = [0, 0], sizes = [1, 16], strides = [1, 1]} : vector<1x32xf32> to vector<1x16xf32>
    %561 = vector.extract_strided_slice %559 {offsets = [0, 16], sizes = [1, 16], strides = [1, 1]} : vector<1x32xf32> to vector<1x16xf32>
    %562 = vector.shape_cast %560 : vector<1x16xf32> to vector<1x16xf32>
    %563 = vector.broadcast %562 : vector<1x16xf32> to vector<16x16xf32>
    %cst_229 = arith.constant 0.000000e+00 : f32
    %564 = vector.broadcast %cst_229 : f32 to vector<16x16xf32>
    %565 = arith.select %395, %563, %564 : vector<16x16xi1>, vector<16x16xf32>
    %cst_230 = arith.constant dense<0.000000e+00> : vector<16xf32>
    %566 = vector.multi_reduction <add>, %565, %cst_230 [1] : vector<16x16xf32> to vector<16xf32>
    %567 = vector.shape_cast %566 : vector<16xf32> to vector<16x1xf32>
    %568 = vector.broadcast %555 : vector<1x128xf32> to vector<16x128xf32>
    %569 = arith.mulf %568, %387 : vector<16x128xf32>
    %570 = math.exp %569 : vector<16x128xf32>
    %571 = arith.mulf %570, %549 : vector<16x128xf32>
    %572 = vector.broadcast %567 : vector<16x1xf32> to vector<16x128xf32>
    %573 = vector.broadcast %557 : vector<1x128xf32> to vector<16x128xf32>
    %574 = arith.mulf %572, %573 : vector<16x128xf32>
    %575 = arith.addf %571, %574 : vector<16x128xf32>
    %cst_231 = arith.constant dense<0.000000e+00> : vector<1x128xf32>
    %576 = tpu.matmul %561, %575, %cst_231 {dimension_numbers = #tpu.dot_dimension_numbers<[1], [0], [0], [1], [0, 0, 1, 1], [], []>} : vector<1x16xf32>, vector<16x128xf32>, vector<1x128xf32> -> vector<1x128xf32>
    %577 = arith.index_cast %553 : i32 to index
    %c0_232 = arith.constant 0 : index
    %578 = vector.load %arg29[%577, %c0_232] : memref<8x128xf32, #tpu.memory_space<vmem>>, vector<1x128xf32>
    tpu.vector_store %arg29[%577, %c0_232], %576 {strides = array<i32>} : memref<8x128xf32, #tpu.memory_space<vmem>>, vector<1x128xf32>,
    %c7_i32_233 = arith.constant 7 : i32
    %c0_i32_234 = arith.constant 0 : i32
    %579 = arith.addi %c0_i32_234, %c7_i32_233 : i32
    %580 = arith.index_cast %579 : i32 to index
    %c0_235 = arith.constant 0 : index
    %581 = vector.load %arg26[%580, %c0_235] : memref<8x128xf32, #tpu.memory_space<vmem>>, vector<1x128xf32>
    %582 = arith.index_cast %579 : i32 to index
    %c0_236 = arith.constant 0 : index
    %583 = vector.load %arg27[%582, %c0_236] : memref<8x128xf32, #tpu.memory_space<vmem>>, vector<1x128xf32>
    %584 = arith.index_cast %579 : i32 to index
    %c0_237 = arith.constant 0 : index
    %585 = vector.load %arg28[%584, %c0_237] : memref<8x32xf32, #tpu.memory_space<vmem>>, vector<1x32xf32>
    %586 = vector.extract_strided_slice %585 {offsets = [0, 0], sizes = [1, 16], strides = [1, 1]} : vector<1x32xf32> to vector<1x16xf32>
    %587 = vector.extract_strided_slice %585 {offsets = [0, 16], sizes = [1, 16], strides = [1, 1]} : vector<1x32xf32> to vector<1x16xf32>
    %588 = vector.shape_cast %586 : vector<1x16xf32> to vector<1x16xf32>
    %589 = vector.broadcast %588 : vector<1x16xf32> to vector<16x16xf32>
    %cst_238 = arith.constant 0.000000e+00 : f32
    %590 = vector.broadcast %cst_238 : f32 to vector<16x16xf32>
    %591 = arith.select %395, %589, %590 : vector<16x16xi1>, vector<16x16xf32>
    %cst_239 = arith.constant dense<0.000000e+00> : vector<16xf32>
    %592 = vector.multi_reduction <add>, %591, %cst_239 [1] : vector<16x16xf32> to vector<16xf32>
    %593 = vector.shape_cast %592 : vector<16xf32> to vector<16x1xf32>
    %594 = vector.broadcast %581 : vector<1x128xf32> to vector<16x128xf32>
    %595 = arith.mulf %594, %387 : vector<16x128xf32>
    %596 = math.exp %595 : vector<16x128xf32>
    %597 = arith.mulf %596, %575 : vector<16x128xf32>
    %598 = vector.broadcast %593 : vector<16x1xf32> to vector<16x128xf32>
    %599 = vector.broadcast %583 : vector<1x128xf32> to vector<16x128xf32>
    %600 = arith.mulf %598, %599 : vector<16x128xf32>
    %601 = arith.addf %597, %600 : vector<16x128xf32>
    %cst_240 = arith.constant dense<0.000000e+00> : vector<1x128xf32>
    %602 = tpu.matmul %587, %601, %cst_240 {dimension_numbers = #tpu.dot_dimension_numbers<[1], [0], [0], [1], [0, 0, 1, 1], [], []>} : vector<1x16xf32>, vector<16x128xf32>, vector<1x128xf32> -> vector<1x128xf32>
    %603 = arith.index_cast %579 : i32 to index
    %c0_241 = arith.constant 0 : index
    %604 = vector.load %arg29[%603, %c0_241] : memref<8x128xf32, #tpu.memory_space<vmem>>, vector<1x128xf32>
    tpu.vector_store %arg29[%603, %c0_241], %602 {strides = array<i32>} : memref<8x128xf32, #tpu.memory_space<vmem>>, vector<1x128xf32>,
    %c8_i32_242 = arith.constant 8 : i32
    %c0_243 = arith.constant 0 : index
    %c0_244 = arith.constant 0 : index
    %605 = vector.load %arg29[%c0_243, %c0_244] : memref<8x128xf32, #tpu.memory_space<vmem>>, vector<8x128xf32>
    %c0_245 = arith.constant 0 : index
    %c0_246 = arith.constant 0 : index
    %606 = vector.load %arg20[%c0_245, %c0_246] : memref<1x128xf32, #tpu.memory_space<vmem>>, vector<1x128xf32>
    %607 = vector.broadcast %606 : vector<1x128xf32> to vector<8x128xf32>
    %608 = arith.mulf %358, %607 : vector<8x128xf32>
    %609 = arith.addf %605, %608 : vector<8x128xf32>
    %610 = arith.negf %328 : vector<8x128xf32>
    %611 = math.exp %610 : vector<8x128xf32>
    %cst_247 = arith.constant 1.000000e+00 : f32
    %612 = vector.broadcast %cst_247 : f32 to vector<8x128xf32>
    %613 = arith.addf %612, %611 : vector<8x128xf32>
    %614 = arith.divf %612, %613 : vector<8x128xf32>
    %615 = arith.mulf %328, %614 : vector<8x128xf32>
    %616 = arith.mulf %609, %615 : vector<8x128xf32>
    %c0_248 = arith.constant 0 : index
    %c0_249 = arith.constant 0 : index
    %617 = vector.load %arg21[%c0_248, %c0_249] : memref<128x128xf32, #tpu.memory_space<vmem>>, vector<128x128xf32>
    %cst_250 = arith.constant dense<0.000000e+00> : vector<8x128xf32>
    %618 = tpu.matmul %616, %617, %cst_250 {dimension_numbers = #tpu.dot_dimension_numbers<[1], [0], [0], [1], [0, 0, 1, 1], [], []>} : vector<8x128xf32>, vector<128x128xf32>, vector<8x128xf32> -> vector<8x128xf32>
    %619 = tpu.iota {dimensions = array<i32: 1>} : vector<8x128xi32>
    %c8_i32_251 = arith.constant 8 : i32
    %620 = vector.broadcast %c8_i32_251 : i32 to vector<8x128xi32>
    %621 = arith.cmpi slt, %619, %620 : vector<8x128xi32>
    %cst_252 = arith.constant 0.000000e+00 : f32
    %622 = vector.broadcast %cst_252 : f32 to vector<8x128xf32>
    %623 = arith.select %621, %618, %622 : vector<8x128xi1>, vector<8x128xf32>
    %cst_253 = arith.constant dense<0.000000e+00> : vector<8xf32>
    %624 = vector.multi_reduction <add>, %623, %cst_253 [1] : vector<8x128xf32> to vector<8xf32>
    %625 = vector.shape_cast %624 : vector<8xf32> to vector<8x1xf32>
    %cst_254 = arith.constant 1.250000e-01 : f32
    %626 = vector.broadcast %cst_254 : f32 to vector<8x1xf32>
    %627 = arith.mulf %625, %626 : vector<8x1xf32>
    %628 = vector.broadcast %627 : vector<8x1xf32> to vector<8x128xf32>
    %629 = arith.subf %618, %628 : vector<8x128xf32>
    %cst_255 = arith.constant 0.000000e+00 : f32
    %630 = vector.broadcast %cst_255 : f32 to vector<8x128xf32>
    %631 = arith.select %621, %629, %630 : vector<8x128xi1>, vector<8x128xf32>
    %632 = arith.mulf %631, %631 : vector<8x128xf32>
    %cst_256 = arith.constant dense<0.000000e+00> : vector<8xf32>
    %633 = vector.multi_reduction <add>, %632, %cst_256 [1] : vector<8x128xf32> to vector<8xf32>
    %634 = vector.shape_cast %633 : vector<8xf32> to vector<8x1xf32>
    %cst_257 = arith.constant 1.250000e-01 : f32
    %635 = vector.broadcast %cst_257 : f32 to vector<8x1xf32>
    %636 = arith.mulf %634, %635 : vector<8x1xf32>
    %cst_258 = arith.constant 9.99999974E-6 : f32
    %637 = vector.broadcast %cst_258 : f32 to vector<8x1xf32>
    %638 = arith.addf %636, %637 : vector<8x1xf32>
    %639 = math.rsqrt %638 : vector<8x1xf32>
    %640 = vector.broadcast %639 : vector<8x1xf32> to vector<8x128xf32>
    %641 = arith.mulf %631, %640 : vector<8x128xf32>
    %c0_259 = arith.constant 0 : index
    %c0_260 = arith.constant 0 : index
    %642 = vector.load %arg22[%c0_259, %c0_260] : memref<1x128xf32, #tpu.memory_space<vmem>>, vector<1x128xf32>
    %643 = vector.broadcast %642 : vector<1x128xf32> to vector<8x128xf32>
    %644 = arith.mulf %641, %643 : vector<8x128xf32>
    %c0_261 = arith.constant 0 : index
    %c0_262 = arith.constant 0 : index
    %645 = vector.load %arg23[%c0_261, %c0_262] : memref<1x128xf32, #tpu.memory_space<vmem>>, vector<1x128xf32>
    %646 = vector.broadcast %645 : vector<1x128xf32> to vector<8x128xf32>
    %647 = arith.addf %644, %646 : vector<8x128xf32>
    %648 = vector.shape_cast %647 : vector<8x128xf32> to vector<1x8x128xf32>
    %c0_263 = arith.constant 0 : index
    %c0_264 = arith.constant 0 : index
    %c0_265 = arith.constant 0 : index
    %649 = vector.load %arg24[%c0_263, %c0_264, %c0_265] : memref<1x8x128xf32, #tpu.memory_space<vmem>>, vector<1x8x128xf32>
    tpu.vector_store %arg24[%c0_263, %c0_264, %c0_265], %648 {strides = array<i32>} : memref<1x8x128xf32, #tpu.memory_space<vmem>>, vector<1x8x128xf32>,
    return
  }
  func.func @transform_0(%arg0: i32) -> (i32, i32, i32) {
    %c0_i32 = arith.constant 0 : i32
    %c0_i32_0 = arith.constant 0 : i32
    %c0_i32_1 = arith.constant 0 : i32
    return %arg0, %c0_i32, %c0_i32_0 : i32, i32, i32
  }
  func.func @transform_1(%arg0: i32) -> (i32, i32) {
    %c0_i32 = arith.constant 0 : i32
    %c0_i32_0 = arith.constant 0 : i32
    %c0_i32_1 = arith.constant 0 : i32
    return %c0_i32, %c0_i32_0 : i32, i32
  }
  func.func @transform_2(%arg0: i32) -> (i32, i32) {
    %c0_i32 = arith.constant 0 : i32
    %c0_i32_0 = arith.constant 0 : i32
    %c0_i32_1 = arith.constant 0 : i32
    return %c0_i32, %c0_i32_0 : i32, i32
  }
  func.func @transform_3(%arg0: i32) -> (i32, i32) {
    %c0_i32 = arith.constant 0 : i32
    %c0_i32_0 = arith.constant 0 : i32
    %c0_i32_1 = arith.constant 0 : i32
    return %c0_i32, %c0_i32_0 : i32, i32
  }
  func.func @transform_4(%arg0: i32) -> (i32, i32) {
    %c0_i32 = arith.constant 0 : i32
    %c0_i32_0 = arith.constant 0 : i32
    %c0_i32_1 = arith.constant 0 : i32
    return %c0_i32, %c0_i32_0 : i32, i32
  }
  func.func @transform_5(%arg0: i32) -> (i32, i32) {
    %c0_i32 = arith.constant 0 : i32
    %c0_i32_0 = arith.constant 0 : i32
    %c0_i32_1 = arith.constant 0 : i32
    return %c0_i32, %c0_i32_0 : i32, i32
  }
  func.func @transform_6(%arg0: i32) -> (i32, i32) {
    %c0_i32 = arith.constant 0 : i32
    %c0_i32_0 = arith.constant 0 : i32
    %c0_i32_1 = arith.constant 0 : i32
    return %c0_i32, %c0_i32_0 : i32, i32
  }
  func.func @transform_7(%arg0: i32) -> (i32, i32) {
    %c0_i32 = arith.constant 0 : i32
    %c0_i32_0 = arith.constant 0 : i32
    %c0_i32_1 = arith.constant 0 : i32
    return %c0_i32, %c0_i32_0 : i32, i32
  }
  func.func @transform_8(%arg0: i32) -> (i32, i32) {
    %c0_i32 = arith.constant 0 : i32
    %c0_i32_0 = arith.constant 0 : i32
    %c0_i32_1 = arith.constant 0 : i32
    return %c0_i32, %c0_i32_0 : i32, i32
  }
  func.func @transform_9(%arg0: i32) -> (i32, i32) {
    %c0_i32 = arith.constant 0 : i32
    %c0_i32_0 = arith.constant 0 : i32
    %c0_i32_1 = arith.constant 0 : i32
    return %c0_i32, %c0_i32_0 : i32, i32
  }
  func.func @transform_10(%arg0: i32) -> (i32, i32) {
    %c0_i32 = arith.constant 0 : i32
    %c0_i32_0 = arith.constant 0 : i32
    %c0_i32_1 = arith.constant 0 : i32
    return %c0_i32, %c0_i32_0 : i32, i32
  }
  func.func @transform_11(%arg0: i32) -> (i32, i32) {
    %c0_i32 = arith.constant 0 : i32
    %c0_i32_0 = arith.constant 0 : i32
    %c0_i32_1 = arith.constant 0 : i32
    return %c0_i32, %c0_i32_0 : i32, i32
  }
  func.func @transform_12(%arg0: i32) -> (i32, i32) {
    %c0_i32 = arith.constant 0 : i32
    %c0_i32_0 = arith.constant 0 : i32
    %c0_i32_1 = arith.constant 0 : i32
    return %c0_i32, %c0_i32_0 : i32, i32
  }
  func.func @transform_13(%arg0: i32) -> (i32, i32) {
    %c0_i32 = arith.constant 0 : i32
    %c0_i32_0 = arith.constant 0 : i32
    %c0_i32_1 = arith.constant 0 : i32
    return %c0_i32, %c0_i32_0 : i32, i32
  }
  func.func @transform_14(%arg0: i32) -> (i32, i32) {
    %c0_i32 = arith.constant 0 : i32
    %c0_i32_0 = arith.constant 0 : i32
    %c0_i32_1 = arith.constant 0 : i32
    return %c0_i32, %c0_i32_0 : i32, i32
  }
  func.func @transform_15(%arg0: i32) -> (i32, i32) {
    %c0_i32 = arith.constant 0 : i32
    %c0_i32_0 = arith.constant 0 : i32
    %c0_i32_1 = arith.constant 0 : i32
    return %c0_i32, %c0_i32_0 : i32, i32
  }
  func.func @transform_16(%arg0: i32) -> (i32, i32) {
    %c0_i32 = arith.constant 0 : i32
    %c0_i32_0 = arith.constant 0 : i32
    %c0_i32_1 = arith.constant 0 : i32
    return %c0_i32, %c0_i32_0 : i32, i32
  }
  func.func @transform_17(%arg0: i32) -> (i32, i32) {
    %c0_i32 = arith.constant 0 : i32
    %c0_i32_0 = arith.constant 0 : i32
    %c0_i32_1 = arith.constant 0 : i32
    return %c0_i32, %c0_i32_0 : i32, i32
  }
  func.func @transform_18(%arg0: i32) -> (i32, i32) {
    %c0_i32 = arith.constant 0 : i32
    %c0_i32_0 = arith.constant 0 : i32
    %c0_i32_1 = arith.constant 0 : i32
    return %c0_i32, %c0_i32_0 : i32, i32
  }
  func.func @transform_19(%arg0: i32) -> (i32, i32) {
    %c0_i32 = arith.constant 0 : i32
    %c0_i32_0 = arith.constant 0 : i32
    %c0_i32_1 = arith.constant 0 : i32
    return %c0_i32, %c0_i32_0 : i32, i32
  }
  func.func @transform_20(%arg0: i32) -> (i32, i32) {
    %c0_i32 = arith.constant 0 : i32
    %c0_i32_0 = arith.constant 0 : i32
    %c0_i32_1 = arith.constant 0 : i32
    return %c0_i32, %c0_i32_0 : i32, i32
  }
  func.func @transform_21(%arg0: i32) -> (i32, i32) {
    %c0_i32 = arith.constant 0 : i32
    %c0_i32_0 = arith.constant 0 : i32
    %c0_i32_1 = arith.constant 0 : i32
    return %c0_i32, %c0_i32_0 : i32, i32
  }
  func.func @transform_22(%arg0: i32) -> (i32, i32) {
    %c0_i32 = arith.constant 0 : i32
    %c0_i32_0 = arith.constant 0 : i32
    %c0_i32_1 = arith.constant 0 : i32
    return %c0_i32, %c0_i32_0 : i32, i32
  }
  func.func @transform_23(%arg0: i32) -> (i32, i32, i32) {
    %c0_i32 = arith.constant 0 : i32
    %c0_i32_0 = arith.constant 0 : i32
    %c0_i32_1 = arith.constant 0 : i32
    return %arg0, %c0_i32, %c0_i32_0 : i32, i32, i32
  }
}

</mosaic_0001>

<llo_original>
// kernel: double_ssm_block.1
$region0: #{double_ssm_block.1}
  #allocation0 [shape = 'u32[]', space=smem, size = 0x4, offset = 0x4, fixed_abs, tag = 'smem constant byte address 0x4 - core index']
  #allocation1 [shape = 'u32[144,128]{1,0:T(1,128)}', space=vmem, size = 0x12000, scoped, tag = 'internal scratch']
  #allocation2 [shape = 'f32[16,128]{1,0:T(8,128)}', space=vmem, size = 0x2000, scoped, tag = 'scratch operand']
  #allocation3 [shape = 'f32[8,128]{1,0:T(8,128)}', space=vmem, size = 0x1000, scoped, tag = 'scratch operand']
  #allocation4 [shape = 'f32[8,128]{1,0:T(8,128)}', space=vmem, size = 0x1000, scoped, tag = 'scratch operand']
  #allocation5 [shape = 'f32[8,32]{1,0:T(8,128)}', space=vmem, size = 0x1000, scoped, tag = 'scratch operand']
  #allocation6 [shape = 'f32[8,128]{1,0:T(8,128)}', space=vmem, size = 0x1000, scoped, tag = 'scratch operand']
  %s0 = inlined_call_operand.vmem [shape: f32[2,8,128], index: 0, kind: input, shape index: {}]
  %s1 = inlined_call_operand.vmem [shape: f32[128,256], index: 1, kind: input, shape index: {}]
  %s2 = inlined_call_operand.vmem [shape: f32[4,128], index: 2, kind: input, shape index: {}]
  %s3 = inlined_call_operand.vmem [shape: f32[1,128], index: 3, kind: input, shape index: {}]
  %s4 = inlined_call_operand.vmem [shape: f32[128,128], index: 4, kind: input, shape index: {}]
  %s5 = inlined_call_operand.vmem [shape: f32[1,128], index: 5, kind: input, shape index: {}]
  %s6 = inlined_call_operand.vmem [shape: f32[1,128], index: 6, kind: input, shape index: {}]
  %s7 = inlined_call_operand.vmem [shape: f32[16,128], index: 7, kind: input, shape index: {}]
  %s8 = inlined_call_operand.vmem [shape: f32[1,128], index: 8, kind: input, shape index: {}]
  %s9 = inlined_call_operand.vmem [shape: f32[128,128], index: 9, kind: input, shape index: {}]
  %s10 = inlined_call_operand.vmem [shape: f32[1,128], index: 10, kind: input, shape index: {}]
  %s11 = inlined_call_operand.vmem [shape: f32[1,128], index: 11, kind: input, shape index: {}]
  %s12 = inlined_call_operand.vmem [shape: f32[128,256], index: 12, kind: input, shape index: {}]
  %s13 = inlined_call_operand.vmem [shape: f32[4,128], index: 13, kind: input, shape index: {}]
  %s14 = inlined_call_operand.vmem [shape: f32[1,128], index: 14, kind: input, shape index: {}]
  %s15 = inlined_call_operand.vmem [shape: f32[128,128], index: 15, kind: input, shape index: {}]
  %s16 = inlined_call_operand.vmem [shape: f32[1,128], index: 16, kind: input, shape index: {}]
  %s17 = inlined_call_operand.vmem [shape: f32[1,128], index: 17, kind: input, shape index: {}]
  %s18 = inlined_call_operand.vmem [shape: f32[16,128], index: 18, kind: input, shape index: {}]
  %s19 = inlined_call_operand.vmem [shape: f32[1,128], index: 19, kind: input, shape index: {}]
  %s20 = inlined_call_operand.vmem [shape: f32[128,128], index: 20, kind: input, shape index: {}]
  %s21 = inlined_call_operand.vmem [shape: f32[1,128], index: 21, kind: input, shape index: {}]
  %s22 = inlined_call_operand.vmem [shape: f32[1,128], index: 22, kind: input, shape index: {}]
  %s23 = inlined_call_operand.hbm [shape: f32[2,8,128], index: 23, kind: output, shape index: {}]
  %s24 = sld [smem:[#allocation0]]
  $region125: #{double_ssm_block.1} parent=0
    _
  %s26 = ssub.s32 1, %s24
  %s27 = scalar_select 0, %s26, %s24
  $region1: #{double_ssm_block.1} parent=0
    #allocation7 [shape = 'u8[8192]{0}', space=vmem, size = 0x2000, scoped, tag = 'output window, operand 0']
    #allocation8 [shape = 's32[2]{0}', space=sflag, size = 0x8, scoped, tag = 'scoped memory for double_ssm_block.1']
    %28 = vsyncpa [#allocation8], 0
    %s29 = scalar_lea.sflag [#allocation8], 1
    %30 = vsyncpa %s29, 0
    loop: start=0, step=1, limit=4
    $region2: #{double_ssm_block.1} parent=1 // loop_pre_header
      _
    $region3: #{double_ssm_block.1} parent=1 // loop_header
      %s32 = sphi 0, %s36
      %p33 = scmp.ge.s32.totalorder %s32, 4
      %s42 = sphi 0, %s44
      %s45 = sphi 0, %s42
      %s46 = sphi 0, %s45
      %s62 = sphi 0, %s46
      %s66 = sphi 0, %s66
      %s68 = sphi 0, %s66
      %s69 = sphi 0, %s68
      %s83 = sphi 0, %s69
      %s87 = sphi 0, %s87
      %s89 = sphi 0, %s87
      %s90 = sphi 0, %s89
      %s104 = sphi 0, %s90
      %s108 = sphi 0, %s108
      %s110 = sphi 0, %s108
      %s111 = sphi 0, %s110
      %s125 = sphi 0, %s111
      %s129 = sphi 0, %s129
      %s131 = sphi 0, %s129
      %s132 = sphi 0, %s131
      %s146 = sphi 0, %s132
      %s150 = sphi 0, %s150
      %s152 = sphi 0, %s150
      %s153 = sphi 0, %s152
      %s167 = sphi 0, %s153
      %s171 = sphi 0, %s171
      %s173 = sphi 0, %s171
      %s174 = sphi 0, %s173
      %s188 = sphi 0, %s174
      %s192 = sphi 0, %s192
      %s194 = sphi 0, %s192
      %s195 = sphi 0, %s194
      %s209 = sphi 0, %s195
      %s213 = sphi 0, %s213
      %s215 = sphi 0, %s213
      %s216 = sphi 0, %s215
      %s230 = sphi 0, %s216
      %s234 = sphi 0, %s234
      %s236 = sphi 0, %s234
      %s237 = sphi 0, %s236
      %s251 = sphi 0, %s237
      %s255 = sphi 0, %s255
      %s257 = sphi 0, %s255
      %s258 = sphi 0, %s257
      %s272 = sphi 0, %s258
      %s276 = sphi 0, %s276
      %s278 = sphi 0, %s276
      %s279 = sphi 0, %s278
      %s293 = sphi 0, %s279
      %s297 = sphi 0, %s297
      %s299 = sphi 0, %s297
      %s300 = sphi 0, %s299
      %s314 = sphi 0, %s300
      %s318 = sphi 0, %s318
      %s320 = sphi 0, %s318
      %s321 = sphi 0, %s320
      %s335 = sphi 0, %s321
      %s339 = sphi 0, %s339
      %s341 = sphi 0, %s339
      %s342 = sphi 0, %s341
      %s356 = sphi 0, %s342
      %s360 = sphi 0, %s360
      %s362 = sphi 0, %s360
      %s363 = sphi 0, %s362
      %s377 = sphi 0, %s363
      %s381 = sphi 0, %s381
      %s383 = sphi 0, %s381
      %s384 = sphi 0, %s383
      %s398 = sphi 0, %s384
      %s402 = sphi 0, %s402
      %s404 = sphi 0, %s402
      %s405 = sphi 0, %s404
      %s419 = sphi 0, %s405
      %s423 = sphi 0, %s423
      %s425 = sphi 0, %s423
      %s426 = sphi 0, %s425
      %s440 = sphi 0, %s426
      %s444 = sphi 0, %s444
      %s446 = sphi 0, %s444
      %s447 = sphi 0, %s446
      %s461 = sphi 0, %s447
      %s465 = sphi 0, %s465
      %s467 = sphi 0, %s465
      %s468 = sphi 0, %s467
      %s482 = sphi 0, %s468
      %s486 = sphi 0, %s486
      %s488 = sphi 0, %s486
      %s489 = sphi 0, %s488
      %s503 = sphi 0, %s489
      %s507 = sphi 0, %s507
      %s509 = sphi 0, %s507
      %s510 = sphi 0, %s509
      %s524 = sphi 0, %s510
      %s530 = sphi 0, %s532
      %s533 = sphi 0, %s530
      %s534 = sphi 0, %s533
      %s550 = sphi 0, %s534
    $region4: #{double_ssm_block.1} parent=1 // loop_header_branch
      %35 = sbr.rel (%p33) target = $region8
    $region5: #{double_ssm_block.1} parent=1 // loop_body
      %s37 = ssub.s32 %s32, 1
      %s38 = ssub.s32 %s32, 2
      %s39 = sadd.s32 %s32, 1
      %s40 = ssub.s32 %s32, %s39
      %p41 = scmp.eq.s32.totalorder %s40, 0
      %s43 = sadd.s32 %s42, 1
      %s44 = scalar_select %p41, %s42, %s43
      %p47 = pneg %p41
      %p48 = scmp.eq.s32.totalorder %s32, 1
      %p49 = por %p47, %p48
      %p50 = scmp.ne.s32.totalorder %s42, %s45
      %p51 = scmp.eq.s32.totalorder %s32, 0
      %p52 = por %p50, %p51
      %p53 = scmp.ne.s32.totalorder %s42, %s45
      %p54 = scmp.eq.s32.totalorder %s37, 1
      %p55 = por %p53, %p54
      %p56 = scmp.ne.s32.totalorder %s45, %s46
      %p57 = scmp.eq.s32.totalorder %s37, 0
      %p58 = por %p56, %p57
      %p59 = scmp.ne.s32.totalorder %s45, %s46
      %p60 = scmp.eq.s32.totalorder %s38, 1
      %p61 = por %p59, %p60
      %p63 = scmp.ne.s32.totalorder %s46, %s62
      %p64 = scmp.eq.s32.totalorder %s38, 0
      %p65 = por %p63, %p64
      %s67 = sadd.s32 %s66, 1
      %p70 = scmp.eq.s32.totalorder %s32, 1
      %p71 = scmp.ne.s32.totalorder %s66, %s68
      %p72 = scmp.eq.s32.totalorder %s32, 0
      %p73 = por %p71, %p72
      %p74 = scmp.ne.s32.totalorder %s66, %s68
      %p75 = scmp.eq.s32.totalorder %s37, 1
      %p76 = por %p74, %p75
      %p77 = scmp.ne.s32.totalorder %s68, %s69
      %p78 = scmp.eq.s32.totalorder %s37, 0
      %p79 = por %p77, %p78
      %p80 = scmp.ne.s32.totalorder %s68, %s69
      %p81 = scmp.eq.s32.totalorder %s38, 1
      %p82 = por %p80, %p81
      %p84 = scmp.ne.s32.totalorder %s69, %s83
      %p85 = scmp.eq.s32.totalorder %s38, 0
      %p86 = por %p84, %p85
      %s88 = sadd.s32 %s87, 1
      %p91 = scmp.eq.s32.totalorder %s32, 1
      %p92 = scmp.ne.s32.totalorder %s87, %s89
      %p93 = scmp.eq.s32.totalorder %s32, 0
      %p94 = por %p92, %p93
      %p95 = scmp.ne.s32.totalorder %s87, %s89
      %p96 = scmp.eq.s32.totalorder %s37, 1
      %p97 = por %p95, %p96
      %p98 = scmp.ne.s32.totalorder %s89, %s90
      %p99 = scmp.eq.s32.totalorder %s37, 0
      %p100 = por %p98, %p99
      %p101 = scmp.ne.s32.totalorder %s89, %s90
      %p102 = scmp.eq.s32.totalorder %s38, 1
      %p103 = por %p101, %p102
      %p105 = scmp.ne.s32.totalorder %s90, %s104
      %p106 = scmp.eq.s32.totalorder %s38, 0
      %p107 = por %p105, %p106
      %s109 = sadd.s32 %s108, 1
      %p112 = scmp.eq.s32.totalorder %s32, 1
      %p113 = scmp.ne.s32.totalorder %s108, %s110
      %p114 = scmp.eq.s32.totalorder %s32, 0
      %p115 = por %p113, %p114
      %p116 = scmp.ne.s32.totalorder %s108, %s110
      %p117 = scmp.eq.s32.totalorder %s37, 1
      %p118 = por %p116, %p117
      %p119 = scmp.ne.s32.totalorder %s110, %s111
      %p120 = scmp.eq.s32.totalorder %s37, 0
      %p121 = por %p119, %p120
      %p122 = scmp.ne.s32.totalorder %s110, %s111
      %p123 = scmp.eq.s32.totalorder %s38, 1
      %p124 = por %p122, %p123
      %p126 = scmp.ne.s32.totalorder %s111, %s125
      %p127 = scmp.eq.s32.totalorder %s38, 0
      %p128 = por %p126, %p127
      %s130 = sadd.s32 %s129, 1
      %p133 = scmp.eq.s32.totalorder %s32, 1
      %p134 = scmp.ne.s32.totalorder %s129, %s131
      %p135 = scmp.eq.s32.totalorder %s32, 0
      %p136 = por %p134, %p135
      %p137 = scmp.ne.s32.totalorder %s129, %s131
      %p138 = scmp.eq.s32.totalorder %s37, 1
      %p139 = por %p137, %p138
      %p140 = scmp.ne.s32.totalorder %s131, %s132
      %p141 = scmp.eq.s32.totalorder %s37, 0
      %p142 = por %p140, %p141
      %p143 = scmp.ne.s32.totalorder %s131, %s132
      %p144 = scmp.eq.s32.totalorder %s38, 1
      %p145 = por %p143, %p144
      %p147 = scmp.ne.s32.totalorder %s132, %s146
      %p148 = scmp.eq.s32.totalorder %s38, 0
      %p149 = por %p147, %p148
      %s151 = sadd.s32 %s150, 1
      %p154 = scmp.eq.s32.totalorder %s32, 1
      %p155 = scmp.ne.s32.totalorder %s150, %s152
      %p156 = scmp.eq.s32.totalorder %s32, 0
      %p157 = por %p155, %p156
      %p158 = scmp.ne.s32.totalorder %s150, %s152
      %p159 = scmp.eq.s32.totalorder %s37, 1
      %p160 = por %p158, %p159
      %p161 = scmp.ne.s32.totalorder %s152, %s153
      %p162 = scmp.eq.s32.totalorder %s37, 0
      %p163 = por %p161, %p162
      %p164 = scmp.ne.s32.totalorder %s152, %s153
      %p165 = scmp.eq.s32.totalorder %s38, 1
      %p166 = por %p164, %p165
      %p168 = scmp.ne.s32.totalorder %s153, %s167
      %p169 = scmp.eq.s32.totalorder %s38, 0
      %p170 = por %p168, %p169
      %s172 = sadd.s32 %s171, 1
      %p175 = scmp.eq.s32.totalorder %s32, 1
      %p176 = scmp.ne.s32.totalorder %s171, %s173
      %p177 = scmp.eq.s32.totalorder %s32, 0
      %p178 = por %p176, %p177
      %p179 = scmp.ne.s32.totalorder %s171, %s173
      %p180 = scmp.eq.s32.totalorder %s37, 1
      %p181 = por %p179, %p180
      %p182 = scmp.ne.s32.totalorder %s173, %s174
      %p183 = scmp.eq.s32.totalorder %s37, 0
      %p184 = por %p182, %p183
      %p185 = scmp.ne.s32.totalorder %s173, %s174
      %p186 = scmp.eq.s32.totalorder %s38, 1
      %p187 = por %p185, %p186
      %p189 = scmp.ne.s32.totalorder %s174, %s188
      %p190 = scmp.eq.s32.totalorder %s38, 0
      %p191 = por %p189, %p190
      %s193 = sadd.s32 %s192, 1
      %p196 = scmp.eq.s32.totalorder %s32, 1
      %p197 = scmp.ne.s32.totalorder %s192, %s194
      %p198 = scmp.eq.s32.totalorder %s32, 0
      %p199 = por %p197, %p198
      %p200 = scmp.ne.s32.totalorder %s192, %s194
      %p201 = scmp.eq.s32.totalorder %s37, 1
      %p202 = por %p200, %p201
      %p203 = scmp.ne.s32.totalorder %s194, %s195
      %p204 = scmp.eq.s32.totalorder %s37, 0
      %p205 = por %p203, %p204
      %p206 = scmp.ne.s32.totalorder %s194, %s195
      %p207 = scmp.eq.s32.totalorder %s38, 1
      %p208 = por %p206, %p207
      %p210 = scmp.ne.s32.totalorder %s195, %s209
      %p211 = scmp.eq.s32.totalorder %s38, 0
      %p212 = por %p210, %p211
      %s214 = sadd.s32 %s213, 1
      %p217 = scmp.eq.s32.totalorder %s32, 1
      %p218 = scmp.ne.s32.totalorder %s213, %s215
      %p219 = scmp.eq.s32.totalorder %s32, 0
      %p220 = por %p218, %p219
      %p221 = scmp.ne.s32.totalorder %s213, %s215
      %p222 = scmp.eq.s32.totalorder %s37, 1
      %p223 = por %p221, %p222
      %p224 = scmp.ne.s32.totalorder %s215, %s216
      %p225 = scmp.eq.s32.totalorder %s37, 0
      %p226 = por %p224, %p225
      %p227 = scmp.ne.s32.totalorder %s215, %s216
      %p228 = scmp.eq.s32.totalorder %s38, 1
      %p229 = por %p227, %p228
      %p231 = scmp.ne.s32.totalorder %s216, %s230
      %p232 = scmp.eq.s32.totalorder %s38, 0
      %p233 = por %p231, %p232
      %s235 = sadd.s32 %s234, 1
      %p238 = scmp.eq.s32.totalorder %s32, 1
      %p239 = scmp.ne.s32.totalorder %s234, %s236
      %p240 = scmp.eq.s32.totalorder %s32, 0
      %p241 = por %p239, %p240
      %p242 = scmp.ne.s32.totalorder %s234, %s236
      %p243 = scmp.eq.s32.totalorder %s37, 1
      %p244 = por %p242, %p243
      %p245 = scmp.ne.s32.totalorder %s236, %s237
      %p246 = scmp.eq.s32.totalorder %s37, 0
      %p247 = por %p245, %p246
      %p248 = scmp.ne.s32.totalorder %s236, %s237
      %p249 = scmp.eq.s32.totalorder %s38, 1
      %p250 = por %p248, %p249
      %p252 = scmp.ne.s32.totalorder %s237, %s251
      %p253 = scmp.eq.s32.totalorder %s38, 0
      %p254 = por %p252, %p253
      %s256 = sadd.s32 %s255, 1
      %p259 = scmp.eq.s32.totalorder %s32, 1
      %p260 = scmp.ne.s32.totalorder %s255, %s257
      %p261 = scmp.eq.s32.totalorder %s32, 0
      %p262 = por %p260, %p261
      %p263 = scmp.ne.s32.totalorder %s255, %s257
      %p264 = scmp.eq.s32.totalorder %s37, 1
      %p265 = por %p263, %p264
      %p266 = scmp.ne.s32.totalorder %s257, %s258
      %p267 = scmp.eq.s32.totalorder %s37, 0
      %p268 = por %p266, %p267
      %p269 = scmp.ne.s32.totalorder %s257, %s258
      %p270 = scmp.eq.s32.totalorder %s38, 1
      %p271 = por %p269, %p270
      %p273 = scmp.ne.s32.totalorder %s258, %s272
      %p274 = scmp.eq.s32.totalorder %s38, 0
      %p275 = por %p273, %p274
      %s277 = sadd.s32 %s276, 1
      %p280 = scmp.eq.s32.totalorder %s32, 1
      %p281 = scmp.ne.s32.totalorder %s276, %s278
      %p282 = scmp.eq.s32.totalorder %s32, 0
      %p283 = por %p281, %p282
      %p284 = scmp.ne.s32.totalorder %s276, %s278
      %p285 = scmp.eq.s32.totalorder %s37, 1
      %p286 = por %p284, %p285
      %p287 = scmp.ne.s32.totalorder %s278, %s279
      %p288 = scmp.eq.s32.totalorder %s37, 0
      %p289 = por %p287, %p288
      %p290 = scmp.ne.s32.totalorder %s278, %s279
      %p291 = scmp.eq.s32.totalorder %s38, 1
      %p292 = por %p290, %p291
      %p294 = scmp.ne.s32.totalorder %s279, %s293
      %p295 = scmp.eq.s32.totalorder %s38, 0
      %p296 = por %p294, %p295
      %s298 = sadd.s32 %s297, 1
      %p301 = scmp.eq.s32.totalorder %s32, 1
      %p302 = scmp.ne.s32.totalorder %s297, %s299
      %p303 = scmp.eq.s32.totalorder %s32, 0
      %p304 = por %p302, %p303
      %p305 = scmp.ne.s32.totalorder %s297, %s299
      %p306 = scmp.eq.s32.totalorder %s37, 1
      %p307 = por %p305, %p306
      %p308 = scmp.ne.s32.totalorder %s299, %s300
      %p309 = scmp.eq.s32.totalorder %s37, 0
      %p310 = por %p308, %p309
      %p311 = scmp.ne.s32.totalorder %s299, %s300
      %p312 = scmp.eq.s32.totalorder %s38, 1
      %p313 = por %p311, %p312
      %p315 = scmp.ne.s32.totalorder %s300, %s314
      %p316 = scmp.eq.s32.totalorder %s38, 0
      %p317 = por %p315, %p316
      %s319 = sadd.s32 %s318, 1
      %p322 = scmp.eq.s32.totalorder %s32, 1
      %p323 = scmp.ne.s32.totalorder %s318, %s320
      %p324 = scmp.eq.s32.totalorder %s32, 0
      %p325 = por %p323, %p324
      %p326 = scmp.ne.s32.totalorder %s318, %s320
      %p327 = scmp.eq.s32.totalorder %s37, 1
      %p328 = por %p326, %p327
      %p329 = scmp.ne.s32.totalorder %s320, %s321
      %p330 = scmp.eq.s32.totalorder %s37, 0
      %p331 = por %p329, %p330
      %p332 = scmp.ne.s32.totalorder %s320, %s321
      %p333 = scmp.eq.s32.totalorder %s38, 1
      %p334 = por %p332, %p333
      %p336 = scmp.ne.s32.totalorder %s321, %s335
      %p337 = scmp.eq.s32.totalorder %s38, 0
      %p338 = por %p336, %p337
      %s340 = sadd.s32 %s339, 1
      %p343 = scmp.eq.s32.totalorder %s32, 1
      %p344 = scmp.ne.s32.totalorder %s339, %s341
      %p345 = scmp.eq.s32.totalorder %s32, 0
      %p346 = por %p344, %p345
      %p347 = scmp.ne.s32.totalorder %s339, %s341
      %p348 = scmp.eq.s32.totalorder %s37, 1
      %p349 = por %p347, %p348
      %p350 = scmp.ne.s32.totalorder %s341, %s342
      %p351 = scmp.eq.s32.totalorder %s37, 0
      %p352 = por %p350, %p351
      %p353 = scmp.ne.s32.totalorder %s341, %s342
      %p354 = scmp.eq.s32.totalorder %s38, 1
      %p355 = por %p353, %p354
      %p357 = scmp.ne.s32.totalorder %s342, %s356
      %p358 = scmp.eq.s32.totalorder %s38, 0
      %p359 = por %p357, %p358
      %s361 = sadd.s32 %s360, 1
      %p364 = scmp.eq.s32.totalorder %s32, 1
      %p365 = scmp.ne.s32.totalorder %s360, %s362
      %p366 = scmp.eq.s32.totalorder %s32, 0
      %p367 = por %p365, %p366
      %p368 = scmp.ne.s32.totalorder %s360, %s362
      %p369 = scmp.eq.s32.totalorder %s37, 1
      %p370 = por %p368, %p369
      %p371 = scmp.ne.s32.totalorder %s362, %s363
      %p372 = scmp.eq.s32.totalorder %s37, 0
      %p373 = por %p371, %p372
      %p374 = scmp.ne.s32.totalorder %s362, %s363
      %p375 = scmp.eq.s32.totalorder %s38, 1
      %p376 = por %p374, %p375
      %p378 = scmp.ne.s32.totalorder %s363, %s377
      %p379 = scmp.eq.s32.totalorder %s38, 0
      %p380 = por %p378, %p379
      %s382 = sadd.s32 %s381, 1
      %p385 = scmp.eq.s32.totalorder %s32, 1
      %p386 = scmp.ne.s32.totalorder %s381, %s383
      %p387 = scmp.eq.s32.totalorder %s32, 0
      %p388 = por %p386, %p387
      %p389 = scmp.ne.s32.totalorder %s381, %s383
      %p390 = scmp.eq.s32.totalorder %s37, 1
      %p391 = por %p389, %p390
      %p392 = scmp.ne.s32.totalorder %s383, %s384
      %p393 = scmp.eq.s32.totalorder %s37, 0
      %p394 = por %p392, %p393
      %p395 = scmp.ne.s32.totalorder %s383, %s384
      %p396 = scmp.eq.s32.totalorder %s38, 1
      %p397 = por %p395, %p396
      %p399 = scmp.ne.s32.totalorder %s384, %s398
      %p400 = scmp.eq.s32.totalorder %s38, 0
      %p401 = por %p399, %p400
      %s403 = sadd.s32 %s402, 1
      %p406 = scmp.eq.s32.totalorder %s32, 1
      %p407 = scmp.ne.s32.totalorder %s402, %s404
      %p408 = scmp.eq.s32.totalorder %s32, 0
      %p409 = por %p407, %p408
      %p410 = scmp.ne.s32.totalorder %s402, %s404
      %p411 = scmp.eq.s32.totalorder %s37, 1
      %p412 = por %p410, %p411
      %p413 = scmp.ne.s32.totalorder %s404, %s405
      %p414 = scmp.eq.s32.totalorder %s37, 0
      %p415 = por %p413, %p414
      %p416 = scmp.ne.s32.totalorder %s404, %s405
      %p417 = scmp.eq.s32.totalorder %s38, 1
      %p418 = por %p416, %p417
      %p420 = scmp.ne.s32.totalorder %s405, %s419
      %p421 = scmp.eq.s32.totalorder %s38, 0
      %p422 = por %p420, %p421
      %s424 = sadd.s32 %s423, 1
      %p427 = scmp.eq.s32.totalorder %s32, 1
      %p428 = scmp.ne.s32.totalorder %s423, %s425
      %p429 = scmp.eq.s32.totalorder %s32, 0
      %p430 = por %p428, %p429
      %p431 = scmp.ne.s32.totalorder %s423, %s425
      %p432 = scmp.eq.s32.totalorder %s37, 1
      %p433 = por %p431, %p432
      %p434 = scmp.ne.s32.totalorder %s425, %s426
      %p435 = scmp.eq.s32.totalorder %s37, 0
      %p436 = por %p434, %p435
      %p437 = scmp.ne.s32.totalorder %s425, %s426
      %p438 = scmp.eq.s32.totalorder %s38, 1
      %p439 = por %p437, %p438
      %p441 = scmp.ne.s32.totalorder %s426, %s440
      %p442 = scmp.eq.s32.totalorder %s38, 0
      %p443 = por %p441, %p442
      %s445 = sadd.s32 %s444, 1
      %p448 = scmp.eq.s32.totalorder %s32, 1
      %p449 = scmp.ne.s32.totalorder %s444, %s446
      %p450 = scmp.eq.s32.totalorder %s32, 0
      %p451 = por %p449, %p450
      %p452 = scmp.ne.s32.totalorder %s444, %s446
      %p453 = scmp.eq.s32.totalorder %s37, 1
      %p454 = por %p452, %p453
      %p455 = scmp.ne.s32.totalorder %s446, %s447
      %p456 = scmp.eq.s32.totalorder %s37, 0
      %p457 = por %p455, %p456
      %p458 = scmp.ne.s32.totalorder %s446, %s447
      %p459 = scmp.eq.s32.totalorder %s38, 1
      %p460 = por %p458, %p459
      %p462 = scmp.ne.s32.totalorder %s447, %s461
      %p463 = scmp.eq.s32.totalorder %s38, 0
      %p464 = por %p462, %p463
      %s466 = sadd.s32 %s465, 1
      %p469 = scmp.eq.s32.totalorder %s32, 1
      %p470 = scmp.ne.s32.totalorder %s465, %s467
      %p471 = scmp.eq.s32.totalorder %s32, 0
      %p472 = por %p470, %p471
      %p473 = scmp.ne.s32.totalorder %s465, %s467
      %p474 = scmp.eq.s32.totalorder %s37, 1
      %p475 = por %p473, %p474
      %p476 = scmp.ne.s32.totalorder %s467, %s468
      %p477 = scmp.eq.s32.totalorder %s37, 0
      %p478 = por %p476, %p477
      %p479 = scmp.ne.s32.totalorder %s467, %s468
      %p480 = scmp.eq.s32.totalorder %s38, 1
      %p481 = por %p479, %p480
      %p483 = scmp.ne.s32.totalorder %s468, %s482
      %p484 = scmp.eq.s32.totalorder %s38, 0
      %p485 = por %p483, %p484
      %s487 = sadd.s32 %s486, 1
      %p490 = scmp.eq.s32.totalorder %s32, 1
      %p491 = scmp.ne.s32.totalorder %s486, %s488
      %p492 = scmp.eq.s32.totalorder %s32, 0
      %p493 = por %p491, %p492
      %p494 = scmp.ne.s32.totalorder %s486, %s488
      %p495 = scmp.eq.s32.totalorder %s37, 1
      %p496 = por %p494, %p495
      %p497 = scmp.ne.s32.totalorder %s488, %s489
      %p498 = scmp.eq.s32.totalorder %s37, 0
      %p499 = por %p497, %p498
      %p500 = scmp.ne.s32.totalorder %s488, %s489
      %p501 = scmp.eq.s32.totalorder %s38, 1
      %p502 = por %p500, %p501
      %p504 = scmp.ne.s32.totalorder %s489, %s503
      %p505 = scmp.eq.s32.totalorder %s38, 0
      %p506 = por %p504, %p505
      %s508 = sadd.s32 %s507, 1
      %p511 = scmp.eq.s32.totalorder %s32, 1
      %p512 = scmp.ne.s32.totalorder %s507, %s509
      %p513 = scmp.eq.s32.totalorder %s32, 0
      %p514 = por %p512, %p513
      %p515 = scmp.ne.s32.totalorder %s507, %s509
      %p516 = scmp.eq.s32.totalorder %s37, 1
      %p517 = por %p515, %p516
      %p518 = scmp.ne.s32.totalorder %s509, %s510
      %p519 = scmp.eq.s32.totalorder %s37, 0
      %p520 = por %p518, %p519
      %p521 = scmp.ne.s32.totalorder %s509, %s510
      %p522 = scmp.eq.s32.totalorder %s38, 1
      %p523 = por %p521, %p522
      %p525 = scmp.ne.s32.totalorder %s510, %s524
      %p526 = scmp.eq.s32.totalorder %s38, 0
      %p527 = por %p525, %p526
      %s528 = ssub.s32 %s32, %s39
      %p529 = scmp.eq.s32.totalorder %s528, 0
      %s531 = sadd.s32 %s530, 1
      %s532 = scalar_select %p529, %s530, %s531
      %p535 = pneg %p529
      %p536 = scmp.eq.s32.totalorder %s32, 1
      %p537 = por %p535, %p536
      %p538 = scmp.ne.s32.totalorder %s530, %s533
      %p539 = scmp.eq.s32.totalorder %s32, 0
      %p540 = por %p538, %p539
      %p541 = scmp.ne.s32.totalorder %s530, %s533
      %p542 = scmp.eq.s32.totalorder %s37, 1
      %p543 = por %p541, %p542
      %p544 = scmp.ne.s32.totalorder %s533, %s534
      %p545 = scmp.eq.s32.totalorder %s37, 0
      %p546 = por %p544, %p545
      %p547 = scmp.ne.s32.totalorder %s533, %s534
      %p548 = scmp.eq.s32.totalorder %s38, 1
      %p549 = por %p547, %p548
      %p551 = scmp.ne.s32.totalorder %s534, %s550
      %p552 = scmp.eq.s32.totalorder %s38, 0
      %p553 = por %p551, %p552
      %p554 = scmp.le.s32.totalorder 1, %s32
      %p555 = scmp.lt.s32.totalorder %s32, 3
      %p556 = pnand %p554, %p555
      %p557 = pneg %p556
      // Predicated region
      $region9: #{double_ssm_block.1} parent=5 // pred_check
        _
      $region10: #{double_ssm_block.1} parent=5 // pred_check_branch
        %559 = sbr.rel (%p556) target = $region12
      $region11: #{double_ssm_block.1} parent=5 // pred_region
        %s560 = ssub.s32 %s32, 1
        // Predicated region
        $region13: #{double_ssm_block.1} parent=11 // pred_check
          %p561 = pneg %p79
        $region14: #{double_ssm_block.1} parent=11 // pred_check_branch
          %563 = sbr.rel (%p561) target = $region16
        $region15: #{double_ssm_block.1} parent=11 // pred_region
          _
        $region16: #{double_ssm_block.1} parent=11 // pred_fallthru
          _
        // Predicated region
        $region17: #{double_ssm_block.1} parent=11 // pred_check
          %p564 = pneg %p100
        $region18: #{double_ssm_block.1} parent=11 // pred_check_branch
          %566 = sbr.rel (%p564) target = $region20
        $region19: #{double_ssm_block.1} parent=11 // pred_region
          _
        $region20: #{double_ssm_block.1} parent=11 // pred_fallthru
          _
        // Predicated region
        $region21: #{double_ssm_block.1} parent=11 // pred_check
          %p567 = pneg %p121
        $region22: #{double_ssm_block.1} parent=11 // pred_check_branch
          %569 = sbr.rel (%p567) target = $region24
        $region23: #{double_ssm_block.1} parent=11 // pred_region
          _
        $region24: #{double_ssm_block.1} parent=11 // pred_fallthru
          _
        // Predicated region
        $region25: #{double_ssm_block.1} parent=11 // pred_check
          %p570 = pneg %p142
        $region26: #{double_ssm_block.1} parent=11 // pred_check_branch
          %572 = sbr.rel (%p570) target = $region28
        $region27: #{double_ssm_block.1} parent=11 // pred_region
          _
        $region28: #{double_ssm_block.1} parent=11 // pred_fallthru
          _
        // Predicated region
        $region29: #{double_ssm_block.1} parent=11 // pred_check
          %p573 = pneg %p163
        $region30: #{double_ssm_block.1} parent=11 // pred_check_branch
          %575 = sbr.rel (%p573) target = $region32
        $region31: #{double_ssm_block.1} parent=11 // pred_region
          _
        $region32: #{double_ssm_block.1} parent=11 // pred_fallthru
          _
        // Predicated region
        $region33: #{double_ssm_block.1} parent=11 // pred_check
          %p576 = pneg %p184
        $region34: #{double_ssm_block.1} parent=11 // pred_check_branch
          %578 = sbr.rel (%p576) target = $region36
        $region35: #{double_ssm_block.1} parent=11 // pred_region
          _
        $region36: #{double_ssm_block.1} parent=11 // pred_fallthru
          _
        // Predicated region
        $region37: #{double_ssm_block.1} parent=11 // pred_check
          %p579 = pneg %p205
        $region38: #{double_ssm_block.1} parent=11 // pred_check_branch
          %581 = sbr.rel (%p579) target = $region40
        $region39: #{double_ssm_block.1} parent=11 // pred_region
          _
        $region40: #{double_ssm_block.1} parent=11 // pred_fallthru
          _
        // Predicated region
        $region41: #{double_ssm_block.1} parent=11 // pred_check
          %p582 = pneg %p226
        $region42: #{double_ssm_block.1} parent=11 // pred_check_branch
          %584 = sbr.rel (%p582) target = $region44
        $region43: #{double_ssm_block.1} parent=11 // pred_region
          _
        $region44: #{double_ssm_block.1} parent=11 // pred_fallthru
          _
        // Predicated region
        $region45: #{double_ssm_block.1} parent=11 // pred_check
          %p585 = pneg %p247
        $region46: #{double_ssm_block.1} parent=11 // pred_check_branch
          %587 = sbr.rel (%p585) target = $region48
        $region47: #{double_ssm_block.1} parent=11 // pred_region
          _
        $region48: #{double_ssm_block.1} parent=11 // pred_fallthru
          _
        // Predicated region
        $region49: #{double_ssm_block.1} parent=11 // pred_check
          %p588 = pneg %p268
        $region50: #{double_ssm_block.1} parent=11 // pred_check_branch
          %590 = sbr.rel (%p588) target = $region52
        $region51: #{double_ssm_block.1} parent=11 // pred_region
          _
        $region52: #{double_ssm_block.1} parent=11 // pred_fallthru
          _
        // Predicated region
        $region53: #{double_ssm_block.1} parent=11 // pred_check
          %p591 = pneg %p289
        $region54: #{double_ssm_block.1} parent=11 // pred_check_branch
          %593 = sbr.rel (%p591) target = $region56
        $region55: #{double_ssm_block.1} parent=11 // pred_region
          _
        $region56: #{double_ssm_block.1} parent=11 // pred_fallthru
          _
        // Predicated region
        $region57: #{double_ssm_block.1} parent=11 // pred_check
          %p594 = pneg %p310
        $region58: #{double_ssm_block.1} parent=11 // pred_check_branch
          %596 = sbr.rel (%p594) target = $region60
        $region59: #{double_ssm_block.1} parent=11 // pred_region
          _
        $region60: #{double_ssm_block.1} parent=11 // pred_fallthru
          _
        // Predicated region
        $region61: #{double_ssm_block.1} parent=11 // pred_check
          %p597 = pneg %p331
        $region62: #{double_ssm_block.1} parent=11 // pred_check_branch
          %599 = sbr.rel (%p597) target = $region64
        $region63: #{double_ssm_block.1} parent=11 // pred_region
          _
        $region64: #{double_ssm_block.1} parent=11 // pred_fallthru
          _
        // Predicated region
        $region65: #{double_ssm_block.1} parent=11 // pred_check
          %p600 = pneg %p352
        $region66: #{double_ssm_block.1} parent=11 // pred_check_branch
          %602 = sbr.rel (%p600) target = $region68
        $region67: #{double_ssm_block.1} parent=11 // pred_region
          _
        $region68: #{double_ssm_block.1} parent=11 // pred_fallthru
          _
        // Predicated region
        $region69: #{double_ssm_block.1} parent=11 // pred_check
          %p603 = pneg %p373
        $region70: #{double_ssm_block.1} parent=11 // pred_check_branch
          %605 = sbr.rel (%p603) target = $region72
        $region71: #{double_ssm_block.1} parent=11 // pred_region
          _
        $region72: #{double_ssm_block.1} parent=11 // pred_fallthru
          _
        // Predicated region
        $region73: #{double_ssm_block.1} parent=11 // pred_check
          %p606 = pneg %p394
        $region74: #{double_ssm_block.1} parent=11 // pred_check_branch
          %608 = sbr.rel (%p606) target = $region76
        $region75: #{double_ssm_block.1} parent=11 // pred_region
          _
        $region76: #{double_ssm_block.1} parent=11 // pred_fallthru
          _
        // Predicated region
        $region77: #{double_ssm_block.1} parent=11 // pred_check
          %p609 = pneg %p415
        $region78: #{double_ssm_block.1} parent=11 // pred_check_branch
          %611 = sbr.rel (%p609) target = $region80
        $region79: #{double_ssm_block.1} parent=11 // pred_region
          _
        $region80: #{double_ssm_block.1} parent=11 // pred_fallthru
          _
        // Predicated region
        $region81: #{double_ssm_block.1} parent=11 // pred_check
          %p612 = pneg %p436
        $region82: #{double_ssm_block.1} parent=11 // pred_check_branch
          %614 = sbr.rel (%p612) target = $region84
        $region83: #{double_ssm_block.1} parent=11 // pred_region
          _
        $region84: #{double_ssm_block.1} parent=11 // pred_fallthru
          _
        // Predicated region
        $region85: #{double_ssm_block.1} parent=11 // pred_check
          %p615 = pneg %p457
        $region86: #{double_ssm_block.1} parent=11 // pred_check_branch
          %617 = sbr.rel (%p615) target = $region88
        $region87: #{double_ssm_block.1} parent=11 // pred_region
          _
        $region88: #{double_ssm_block.1} parent=11 // pred_fallthru
          _
        // Predicated region
        $region89: #{double_ssm_block.1} parent=11 // pred_check
          %p618 = pneg %p478
        $region90: #{double_ssm_block.1} parent=11 // pred_check_branch
          %620 = sbr.rel (%p618) target = $region92
        $region91: #{double_ssm_block.1} parent=11 // pred_region
          _
        $region92: #{double_ssm_block.1} parent=11 // pred_fallthru
          _
        // Predicated region
        $region93: #{double_ssm_block.1} parent=11 // pred_check
          %p621 = pneg %p499
        $region94: #{double_ssm_block.1} parent=11 // pred_check_branch
          %623 = sbr.rel (%p621) target = $region96
        $region95: #{double_ssm_block.1} parent=11 // pred_region
          _
        $region96: #{double_ssm_block.1} parent=11 // pred_fallthru
          _
        // Predicated region
        $region97: #{double_ssm_block.1} parent=11 // pred_check
          %p624 = pneg %p520
        $region98: #{double_ssm_block.1} parent=11 // pred_check_branch
          %626 = sbr.rel (%p624) target = $region100
        $region99: #{double_ssm_block.1} parent=11 // pred_region
          _
        $region100: #{double_ssm_block.1} parent=11 // pred_fallthru
          _
      $region12: #{double_ssm_block.1} parent=5 // pred_fallthru
        _
      %p627 = scmp.lt.s32.totalorder %s32, 2
      // Predicated region
      $region101: #{double_ssm_block.1} parent=5 // pred_check
        %p628 = pneg %p627
      $region102: #{double_ssm_block.1} parent=5 // pred_check_branch
        %630 = sbr.rel (%p628) target = $region104
      $region103: #{double_ssm_block.1} parent=5 // pred_region
        // Predicated region
        $region105: #{double_ssm_block.1} parent=103 // pred_check
          %p631 = pneg %p52
        $region106: #{double_ssm_block.1} parent=103 // pred_check_branch
          %633 = sbr.rel (%p631) target = $region108
        $region107: #{double_ssm_block.1} parent=103 // pred_region
          %p634 = scmp.lt.s32.totalorder %s32, 1
          %s635 = scalar_select %p634, %s32, 1
          %s636 = smul.addr %s635, 8
          %s637 = scalar_lea.vmem %s0, %s636
        $region108: #{double_ssm_block.1} parent=103 // pred_fallthru
          _
      $region104: #{double_ssm_block.1} parent=5 // pred_fallthru
        _
      %p638 = scmp.le.s32.totalorder 1, %s32
      %p639 = scmp.lt.s32.totalorder %s32, 3
      %p640 = pnand %p638, %p639
      %p641 = pneg %p640
      // Predicated region
      $region109: #{double_ssm_block.1} parent=5 // pred_check
        _
      $region110: #{double_ssm_block.1} parent=5 // pred_check_branch
        %643 = sbr.rel (%p640) target = $region112
      $region111: #{double_ssm_block.1} parent=5 // pred_region
        %s644 = ssub.s32 %s32, 1
        %p645 = scmp.lt.s32.totalorder %s37, 1
        %s646 = scalar_select %p645, %s37, 1
        %s647 = smul.addr %s646, 8
        %s648 = scalar_lea.vmem %s0, %s647
        %p649 = pneg %p58
        %p650 = pneg %p55
        %p651 = pneg %p79
        %p652 = pneg %p76
        %p653 = pneg %p100
        %p654 = pneg %p97
        %p655 = pneg %p121
        %p656 = pneg %p118
        %p657 = pneg %p142
        %p658 = pneg %p139
        %p659 = pneg %p163
        %p660 = pneg %p160
        %p661 = pneg %p184
        %p662 = pneg %p181
        %p663 = pneg %p205
        %p664 = pneg %p202
        %p665 = pneg %p226
        %p666 = pneg %p223
        %p667 = pneg %p247
        %p668 = pneg %p244
        %p669 = pneg %p268
        %p670 = pneg %p265
        %p671 = pneg %p289
        %p672 = pneg %p286
        %p673 = pneg %p310
        %p674 = pneg %p307
        %p675 = pneg %p331
        %p676 = pneg %p328
        %p677 = pneg %p352
        %p678 = pneg %p349
        %p679 = pneg %p373
        %p680 = pneg %p370
        %p681 = pneg %p394
        %p682 = pneg %p391
        %p683 = pneg %p415
        %p684 = pneg %p412
        %p685 = pneg %p436
        %p686 = pneg %p433
        %p687 = pneg %p457
        %p688 = pneg %p454
        %p689 = pneg %p478
        %p690 = pneg %p475
        %p691 = pneg %p499
        %p692 = pneg %p496
        %p693 = pneg %p520
        %p694 = pneg %p517
        %p695 = pneg %p546
        %p696 = pneg %p543
        %s697 = sand.u32 %s533, 1
        %s698 = scalar_lea.sflag [#allocation8], %s697
        %s699 = sand.u32 %s533, 1
        %s700 = smul.addr %s699, 8
        %s701 = scalar_lea.vmem [#allocation7], %s700
        %p702 = scmp.lt.s32.totalorder %s37, 1
        %s703 = scalar_select %p702, %s37, 1
        %s704 = smul.addr %s703, 8
        %s705 = scalar_lea.vmem %s0, %s704
        %v706 = vld [vmem:[%s705] sm:$0xff]
        %v707 = vld [vmem:[%s1] sm:$0xff]
        %v708 = vld [vmem:[%s1 + $0x8] sm:$0xff]
        %v709 = vld [vmem:[%s1 + $0x10] sm:$0xff]
        %v710 = vld [vmem:[%s1 + $0x18] sm:$0xff]
        %v711 = vld [vmem:[%s1 + $0x20] sm:$0xff]
        %v712 = vld [vmem:[%s1 + $0x28] sm:$0xff]
        %v713 = vld [vmem:[%s1 + $0x30] sm:$0xff]
        %v714 = vld [vmem:[%s1 + $0x38] sm:$0xff]
        %v715 = vld [vmem:[%s1 + $0x40] sm:$0xff]
        %v716 = vld [vmem:[%s1 + $0x48] sm:$0xff]
        %v717 = vld [vmem:[%s1 + $0x50] sm:$0xff]
        %v718 = vld [vmem:[%s1 + $0x58] sm:$0xff]
        %v719 = vld [vmem:[%s1 + $0x60] sm:$0xff]
        %v720 = vld [vmem:[%s1 + $0x68] sm:$0xff]
        %v721 = vld [vmem:[%s1 + $0x70] sm:$0xff]
        %v722 = vld [vmem:[%s1 + $0x78] sm:$0xff]
        %v723 = vld [vmem:[%s1 + $0x80] sm:$0xff]
        %v724 = vld [vmem:[%s1 + $0x88] sm:$0xff]
        %v725 = vld [vmem:[%s1 + $0x90] sm:$0xff]
        %v726 = vld [vmem:[%s1 + $0x98] sm:$0xff]
        %v727 = vld [vmem:[%s1 + $0xa0] sm:$0xff]
        %v728 = vld [vmem:[%s1 + $0xa8] sm:$0xff]
        %v729 = vld [vmem:[%s1 + $0xb0] sm:$0xff]
        %v730 = vld [vmem:[%s1 + $0xb8] sm:$0xff]
        %v731 = vld [vmem:[%s1 + $0xc0] sm:$0xff]
        %v732 = vld [vmem:[%s1 + $0xc8] sm:$0xff]
        %v733 = vld [vmem:[%s1 + $0xd0] sm:$0xff]
        %v734 = vld [vmem:[%s1 + $0xd8] sm:$0xff]
        %v735 = vld [vmem:[%s1 + $0xe0] sm:$0xff]
        %v736 = vld [vmem:[%s1 + $0xe8] sm:$0xff]
        %v737 = vld [vmem:[%s1 + $0xf0] sm:$0xff]
        %v738 = vld [vmem:[%s1 + $0xf8] sm:$0xff]
        %739 = vmatprep.subr.mxu0 %v708
        %740 = vmatpush1.msra.mxu0 %v707
        %741 = vmatprep.subr.mxu0 %v710
        %742 = vmatpush1.msra.mxu0 %v709
        %743 = vmatprep.subr.mxu0 %v712
        %744 = vmatpush1.msra.mxu0 %v711
        %745 = vmatprep.subr.mxu0 %v714
        %746 = vmatpush1.msra.mxu0 %v713
        %747 = vmatprep.subr.mxu0 %v716
        %748 = vmatpush1.msra.mxu0 %v715
        %749 = vmatprep.subr.mxu0 %v718
        %750 = vmatpush1.msra.mxu0 %v717
        %751 = vmatprep.subr.mxu0 %v720
        %752 = vmatpush1.msra.mxu0 %v719
        %753 = vmatprep.subr.mxu0 %v722
        %754 = vmatpush1.msra.mxu0 %v721
        %755 = vmatprep.subr.mxu0 %v724
        %756 = vmatpush1.msra.mxu0 %v723
        %757 = vmatprep.subr.mxu0 %v726
        %758 = vmatpush1.msra.mxu0 %v725
        %759 = vmatprep.subr.mxu0 %v728
        %760 = vmatpush1.msra.mxu0 %v727
        %761 = vmatprep.subr.mxu0 %v730
        %762 = vmatpush1.msra.mxu0 %v729
        %763 = vmatprep.subr.mxu0 %v732
        %764 = vmatpush1.msra.mxu0 %v731
        %765 = vmatprep.subr.mxu0 %v734
        %766 = vmatpush1.msra.mxu0 %v733
        %767 = vmatprep.subr.mxu0 %v736
        %768 = vmatpush1.msra.mxu0 %v735
        %769 = vmatprep.subr.mxu0 %v738
        %770 = vmatpush1.msra.mxu0 %v737
        %771 = vmatprep.subr.mxu0 0.0
        %772 = vmatpush1.msra.mxu0 0.0
        %773 = vmatprep.subr.mxu0 0.0
        %774 = vmatpush1.msra.mxu0 0.0
        %775 = vmatprep.subr.mxu0 0.0
        %776 = vmatpush1.msra.mxu0 0.0
        %777 = vmatprep.subr.mxu0 0.0
        %778 = vmatpush1.msra.mxu0 0.0
        %779 = vmatprep.subr.mxu0 0.0
        %780 = vmatpush1.msra.mxu0 0.0
        %781 = vmatprep.subr.mxu0 0.0
        %782 = vmatpush1.msra.mxu0 0.0
        %783 = vmatprep.subr.mxu0 0.0
        %784 = vmatpush1.msra.mxu0 0.0
        %785 = vmatprep.subr.mxu0 0.0
        %786 = vmatpush1.msra.mxu0 0.0
        %787 = vmatprep.subr.mxu0 0.0
        %788 = vmatpush1.msra.mxu0 0.0
        %789 = vmatprep.subr.mxu0 0.0
        %790 = vmatpush1.msra.mxu0 0.0
        %791 = vmatprep.subr.mxu0 0.0
        %792 = vmatpush1.msra.mxu0 0.0
        %793 = vmatprep.subr.mxu0 0.0
        %794 = vmatpush1.msra.mxu0 0.0
        %795 = vmatprep.subr.mxu0 0.0
        %796 = vmatpush1.msra.mxu0 0.0
        %797 = vmatprep.subr.mxu0 0.0
        %798 = vmatpush1.msra.mxu0 0.0
        %799 = vmatprep.subr.mxu0 0.0
        %800 = vmatpush1.msra.mxu0 0.0
        %801 = vmatprep.subr.mxu0 0.0
        %802 = vmatpush1.msra.mxu0 0.0
        %803 = vmatprep.mubr.f32.mxu0 0.0
        %804 = vmatmul.mubr.f32.gmra.mrb[0].mxu0 %v706
        %v805 = vpop.f32.mrb[0].mxu0
        %v806 = vadd.f32 0.0, %v805
        %v807 = vpop.f32.mrb[0].mxu0
        %v808 = vadd.f32 0.0, %v807
        %809 = vdwg.mxu0
        %810 = vst [vmem:[#allocation2] sm:$0xff] 0.0
        %811 = vst [vmem:[#allocation2 + $0x8] sm:$0xff] %v806
        %v812 = vld [vmem:[%s2 + $0x3] sm:$0x1]
        %v813 = vlaneseq
        %v814 = vshrl.u32 %v813, 7
        %v815 = vsub.s32 0, %v814
        %v816 = vrot.slane %v812, %v815
        %v817 = vmul.f32 %v806, %v816
        %v818 = vld [vmem:[#allocation2 + $0x5] sm:$0xff]
        %v819 = vld [vmem:[%s2] sm:$0x1]
        %v820 = vlaneseq
        %v821 = vshrl.u32 %v820, 7
        %v822 = vsub.s32 0, %v821
        %v823 = vrot.slane %v819, %v822
        %v824 = vmul.f32 %v818, %v823
        %v825 = vadd.f32 %v817, %v824
        %v826 = vld [vmem:[#allocation2 + $0x6] sm:$0xff]
        %v827 = vld [vmem:[%s2 + $0x1] sm:$0x1]
        %v828 = vlaneseq
        %v829 = vshrl.u32 %v828, 7
        %v830 = vsub.s32 0, %v829
        %v831 = vrot.slane %v827, %v830
        %v832 = vmul.f32 %v826, %v831
        %v833 = vadd.f32 %v825, %v832
        %v834 = vld [vmem:[#allocation2 + $0x7] sm:$0xff]
        %v835 = vld [vmem:[%s2 + $0x2] sm:$0x1]
        %v836 = vlaneseq
        %v837 = vshrl.u32 %v836, 7
        %v838 = vsub.s32 0, %v837
        %v839 = vrot.slane %v835, %v838
        %v840 = vmul.f32 %v834, %v839
        %v841 = vadd.f32 %v833, %v840
        %v842 = vld [vmem:[%s3] sm:$0x1]
        %v844 = vlaneseq
        %v845 = vshrl.u32 %v844, 7
        %v846 = vsub.s32 0, %v845
        %v847 = vrot.slane %v842, %v846
        %v849 = vadd.f32 %v841, %v847
        %v850 = vxor.u32 %v849, 2147483648
        %v851 = vmul.f32 %v850, 1.442695
        %v852 = vpow.pop %v851
        %v853 = vadd.f32 %v852, 1.0
        %v854 = vrcp.pop %v853
        %v855 = vmul.f32 1.0, %v854
        %v856 = vmul.f32 %v849, %v855
        %v857 = vld [vmem:[%s4] sm:$0xff]
        %v858 = vld [vmem:[%s4 + $0x8] sm:$0xff]
        %v859 = vld [vmem:[%s4 + $0x10] sm:$0xff]
        %v860 = vld [vmem:[%s4 + $0x18] sm:$0xff]
        %v861 = vld [vmem:[%s4 + $0x20] sm:$0xff]
        %v862 = vld [vmem:[%s4 + $0x28] sm:$0xff]
        %v863 = vld [vmem:[%s4 + $0x30] sm:$0xff]
        %v864 = vld [vmem:[%s4 + $0x38] sm:$0xff]
        %v865 = vld [vmem:[%s4 + $0x40] sm:$0xff]
        %v866 = vld [vmem:[%s4 + $0x48] sm:$0xff]
        %v867 = vld [vmem:[%s4 + $0x50] sm:$0xff]
        %v868 = vld [vmem:[%s4 + $0x58] sm:$0xff]
        %v869 = vld [vmem:[%s4 + $0x60] sm:$0xff]
        %v870 = vld [vmem:[%s4 + $0x68] sm:$0xff]
        %v871 = vld [vmem:[%s4 + $0x70] sm:$0xff]
        %v872 = vld [vmem:[%s4 + $0x78] sm:$0xff]
        %873 = vmatprep.subr.mxu0 0.0
        %874 = vmatpush1.msra.mxu0 %v857
        %875 = vmatprep.subr.mxu0 0.0
        %876 = vmatpush1.msra.mxu0 %v858
        %877 = vmatprep.subr.mxu0 0.0
        %878 = vmatpush1.msra.mxu0 %v859
        %879 = vmatprep.subr.mxu0 0.0
        %880 = vmatpush1.msra.mxu0 %v860
        %881 = vmatprep.subr.mxu0 0.0
        %882 = vmatpush1.msra.mxu0 %v861
        %883 = vmatprep.subr.mxu0 0.0
        %884 = vmatpush1.msra.mxu0 %v862
        %885 = vmatprep.subr.mxu0 0.0
        %886 = vmatpush1.msra.mxu0 %v863
        %887 = vmatprep.subr.mxu0 0.0
        %888 = vmatpush1.msra.mxu0 %v864
        %889 = vmatprep.subr.mxu0 0.0
        %890 = vmatpush1.msra.mxu0 %v865
        %891 = vmatprep.subr.mxu0 0.0
        %892 = vmatpush1.msra.mxu0 %v866
        %893 = vmatprep.subr.mxu0 0.0
        %894 = vmatpush1.msra.mxu0 %v867
        %895 = vmatprep.subr.mxu0 0.0
        %896 = vmatpush1.msra.mxu0 %v868
        %897 = vmatprep.subr.mxu0 0.0
        %898 = vmatpush1.msra.mxu0 %v869
        %899 = vmatprep.subr.mxu0 0.0
        %900 = vmatpush1.msra.mxu0 %v870
        %901 = vmatprep.subr.mxu0 0.0
        %902 = vmatpush1.msra.mxu0 %v871
        %903 = vmatprep.subr.mxu0 0.0
        %904 = vmatpush1.msra.mxu0 %v872
        %905 = vmatprep.subr.mxu0 0.0
        %906 = vmatpush1.msra.mxu0 0.0
        %907 = vmatprep.subr.mxu0 0.0
        %908 = vmatpush1.msra.mxu0 0.0
        %909 = vmatprep.subr.mxu0 0.0
        %910 = vmatpush1.msra.mxu0 0.0
        %911 = vmatprep.subr.mxu0 0.0
        %912 = vmatpush1.msra.mxu0 0.0
        %913 = vmatprep.subr.mxu0 0.0
        %914 = vmatpush1.msra.mxu0 0.0
        %915 = vmatprep.subr.mxu0 0.0
        %916 = vmatpush1.msra.mxu0 0.0
        %917 = vmatprep.subr.mxu0 0.0
        %918 = vmatpush1.msra.mxu0 0.0
        %919 = vmatprep.subr.mxu0 0.0
        %920 = vmatpush1.msra.mxu0 0.0
        %921 = vmatprep.subr.mxu0 0.0
        %922 = vmatpush1.msra.mxu0 0.0
        %923 = vmatprep.subr.mxu0 0.0
        %924 = vmatpush1.msra.mxu0 0.0
        %925 = vmatprep.subr.mxu0 0.0
        %926 = vmatpush1.msra.mxu0 0.0
        %927 = vmatprep.subr.mxu0 0.0
        %928 = vmatpush1.msra.mxu0 0.0
        %929 = vmatprep.subr.mxu0 0.0
        %930 = vmatpush1.msra.mxu0 0.0
        %931 = vmatprep.subr.mxu0 0.0
        %932 = vmatpush1.msra.mxu0 0.0
        %933 = vmatprep.subr.mxu0 0.0
        %934 = vmatpush1.msra.mxu0 0.0
        %935 = vmatprep.subr.mxu0 0.0
        %936 = vmatpush1.msra.mxu0 0.0
        %937 = vmatprep.mubr.f32.mxu0 0.0
        %938 = vmatmul.mubr.f32.gmra.mrb[0].mxu0 %v856
        %v939 = vpop.f32.mrb[0].mxu0
        %v940 = vadd.f32 0.0, %v939
        %v941 = vpop.f32.mrb[0].mxu0
        %942 = vdwg.mxu0
        %v943 = vld [vmem:[%s5] sm:$0x1]
        %945 = vset.pattern.permute.xlu0 0
        %946 = vperm.xlu0 %945, %v940
        %v947 = vpop.permute.xlu0 %946
        %v950 = vlaneseq
        %v951 = vshrl.u32 %v950, 7
        %v952 = vsub.s32 0, %v951
        %v953 = vrot.slane %v943, %v952
        %v955 = vmul.f32 %v947, %v953
        %v956 = vld [vmem:[%s6] sm:$0x1]
        %v958 = vlaneseq
        %v959 = vshrl.u32 %v958, 7
        %v960 = vsub.s32 0, %v959
        %v961 = vrot.slane %v956, %v960
        %v963 = vadd.f32 %v955, %v961
        %v964 = vmax.f32 %v963, 0.0
        %v965 = vand.u32 2147483647, %v963
        %v966 = vsub.f32 0.0, %v965
        %v967 = vmul.f32 %v966, 1.442695
        %v968 = vpow.pop %v967
        %v969 = vadd.f32 %v968, 1.0
        %v970 = vlog2.pop %v969
        %v971 = vmul.f32 %v970, 0.6931472
        %v972 = vadd.f32 %v964, %v971
        %vm973 = vcmp.gt.f32.partialorder %v963, 20.0
        %v974 = vsel %vm973, %v963, %v972
        %v975 = vld [vmem:[%s7] sm:$0xff]
        %v976 = vld [vmem:[%s7 + $0x8] sm:$0xff]
        %v977 = vmul.f32 %v975, 1.442695
        %v978 = vpow.pop %v977
        %v979 = vmul.f32 %v976, 1.442695
        %v980 = vpow.pop %v979
        %v981 = vsub.f32 0.0, %v978
        %v982 = vsub.f32 0.0, %v980
        %983 = vst [vmem:[#allocation3] sm:$0xff] %v974
        %v984 = vmul.f32 %v974, %v856
        %985 = vst [vmem:[#allocation4] sm:$0xff] %v984
        %986 = vrot.lane.b32.xlu0 %v940, 127
        %v987 = vpop.permute.xlu0 %986
        %vm989 = vcmask 130048
        %vm990 = vcmask 261120
        %991 = vst.msk [vmem:[#allocation5] sm:$0xff] %vm990, %v987
        %v992 = vlaneseq
        %v993 = vshrl.u32 %v992, 7
        %v994 = vadd.s32 %v993, 8
        %v995 = vlaneseq
        %v996 = vand.u32 %v995, 127
        %vm997 = vcmp.eq.s32.totalorder %v993, %v996
        %vm998 = vcmp.eq.s32.totalorder %v994, %v996
        %v999 = vld [vmem:[#allocation3] sm:$0x1]
        %v1000 = vld [vmem:[#allocation4] sm:$0x1]
        %v1001 = vld [vmem:[#allocation5] sm:$0x1]
        %v1002 = vlaneseq
        %v1003 = vshrl.u32 %v1002, 7
        %v1004 = vsub.s32 0, %v1003
        %v1005 = vrot.slane %v1001, %v1004
        %v1006 = vsel %vm997, %v1005, 0.0
        %v1007 = vsel %vm998, %v1005, 0.0
        %v1008 = vsel %vm989, %v1006, 0.0
        %1009 = vadd.xlane.f32.xlu0 %v1008
        %v1010 = vpop.xlane.xlu0 %1009
        %v1011 = vsel %vm989, %v1007, 0.0
        %1012 = vadd.xlane.f32.xlu0 %v1011
        %v1013 = vpop.xlane.xlu0 %1012
        %v1014 = vlaneseq
        %v1015 = vshrl.u32 %v1014, 7
        %v1016 = vsub.s32 0, %v1015
        %v1017 = vrot.slane %v999, %v1016
        %v1018 = vmul.f32 %v1017, %v981
        %v1019 = vmul.f32 %v1017, %v982
        %v1020 = vmul.f32 %v1018, 1.442695
        %v1021 = vpow.pop %v1020
        %v1022 = vmul.f32 %v1019, 1.442695
        %v1023 = vpow.pop %v1022
        %v1024 = vmul.f32 %v1021, 0.0
        %v1025 = vmul.f32 %v1023, 0.0
        %v1026 = vlaneseq
        %v1027 = vshrl.u32 %v1026, 7
        %v1028 = vsub.s32 0, %v1027
        %v1029 = vrot.slane %v1000, %v1028
        %v1030 = vmul.f32 %v1010, %v1029
        %v1031 = vmul.f32 %v1013, %v1029
        %v1032 = vadd.f32 %v1024, %v1030
        %v1033 = vadd.f32 %v1025, %v1031
        %1035 = vrot.lane.b32.xlu0 %v1001, 112
        %v1036 = vpop.permute.xlu0 %1035
        %v1037 = vsel %vm989, %v1036, 0
        %1039 = vmatprep.subr.mxu0 0.0
        %1040 = vmatpush1.msra.mxu0 %v1032
        %1041 = vmatprep.subr.mxu0 0.0
        %1042 = vmatpush1.msra.mxu0 %v1033
        %1043 = vmatprep.subr.mxu0 0.0
        %1044 = vmatpush1.msra.mxu0 0.0
        %1045 = vmatprep.subr.mxu0 0.0
        %1046 = vmatpush1.msra.mxu0 0.0
        %1047 = vmatprep.subr.mxu0 0.0
        %1048 = vmatpush1.msra.mxu0 0.0
        %1049 = vmatprep.subr.mxu0 0.0
        %1050 = vmatpush1.msra.mxu0 0.0
        %1051 = vmatprep.subr.mxu0 0.0
        %1052 = vmatpush1.msra.mxu0 0.0
        %1053 = vmatprep.subr.mxu0 0.0
        %1054 = vmatpush1.msra.mxu0 0.0
        %1055 = vmatprep.subr.mxu0 0.0
        %1056 = vmatpush1.msra.mxu0 0.0
        %1057 = vmatprep.subr.mxu0 0.0
        %1058 = vmatpush1.msra.mxu0 0.0
        %1059 = vmatprep.subr.mxu0 0.0
        %1060 = vmatpush1.msra.mxu0 0.0
        %1061 = vmatprep.subr.mxu0 0.0
        %1062 = vmatpush1.msra.mxu0 0.0
        %1063 = vmatprep.subr.mxu0 0.0
        %1064 = vmatpush1.msra.mxu0 0.0
        %1065 = vmatprep.subr.mxu0 0.0
        %1066 = vmatpush1.msra.mxu0 0.0
        %1067 = vmatprep.subr.mxu0 0.0
        %1068 = vmatpush1.msra.mxu0 0.0
        %1069 = vmatprep.subr.mxu0 0.0
        %1070 = vmatpush1.msra.mxu0 0.0
        %1071 = vmatprep.subr.mxu0 0.0
        %1072 = vmatpush1.msra.mxu0 0.0
        %1073 = vmatprep.subr.mxu0 0.0
        %1074 = vmatpush1.msra.mxu0 0.0
        %1075 = vmatprep.subr.mxu0 0.0
        %1076 = vmatpush1.msra.mxu0 0.0
        %1077 = vmatprep.subr.mxu0 0.0
        %1078 = vmatpush1.msra.mxu0 0.0
        %1079 = vmatprep.subr.mxu0 0.0
        %1080 = vmatpush1.msra.mxu0 0.0
        %1081 = vmatprep.subr.mxu0 0.0
        %1082 = vmatpush1.msra.mxu0 0.0
        %1083 = vmatprep.subr.mxu0 0.0
        %1084 = vmatpush1.msra.mxu0 0.0
        %1085 = vmatprep.subr.mxu0 0.0
        %1086 = vmatpush1.msra.mxu0 0.0
        %1087 = vmatprep.subr.mxu0 0.0
        %1088 = vmatpush1.msra.mxu0 0.0
        %1089 = vmatprep.subr.mxu0 0.0
        %1090 = vmatpush1.msra.mxu0 0.0
        %1091 = vmatprep.subr.mxu0 0.0
        %1092 = vmatpush1.msra.mxu0 0.0
        %1093 = vmatprep.subr.mxu0 0.0
        %1094 = vmatpush1.msra.mxu0 0.0
        %1095 = vmatprep.subr.mxu0 0.0
        %1096 = vmatpush1.msra.mxu0 0.0
        %1097 = vmatprep.subr.mxu0 0.0
        %1098 = vmatpush1.msra.mxu0 0.0
        %1099 = vmatprep.subr.mxu0 0.0
        %1100 = vmatpush1.msra.mxu0 0.0
        %1101 = vmatprep.subr.mxu0 0.0
        %1102 = vmatpush1.msra.mxu0 0.0
        %1103 = vmatprep.mubr.f32.mxu0 0.0
        %1104 = vmatmul.mubr.f32.gmra.mrb[0].mxu0 %v1037
        %v1105 = vpop.f32.mrb[0].mxu0
        %v1106 = vadd.f32 0.0, %v1105
        %v1107 = vpop.f32.mrb[0].mxu0
        %1108 = vdwg.mxu0
        %1109 = vst [vmem:[#allocation6] sm:$0x1] %v1106
        %v1110 = vld [vmem:[#allocation3 + $0x1] sm:$0x1]
        %v1111 = vld [vmem:[#allocation4 + $0x1] sm:$0x1]
        %v1112 = vld [vmem:[#allocation5 + $0x1] sm:$0x1]
        %v1113 = vlaneseq
        %v1114 = vshrl.u32 %v1113, 7
        %v1115 = vsub.s32 0, %v1114
        %v1116 = vrot.slane %v1112, %v1115
        %v1117 = vsel %vm997, %v1116, 0.0
        %v1118 = vsel %vm998, %v1116, 0.0
        %v1119 = vsel %vm989, %v1117, 0.0
        %1120 = vadd.xlane.f32.xlu0 %v1119
        %v1121 = vpop.xlane.xlu0 %1120
        %v1122 = vsel %vm989, %v1118, 0.0
        %1123 = vadd.xlane.f32.xlu0 %v1122
        %v1124 = vpop.xlane.xlu0 %1123
        %v1125 = vlaneseq
        %v1126 = vshrl.u32 %v1125, 7
        %v1127 = vsub.s32 0, %v1126
        %v1128 = vrot.slane %v1110, %v1127
        %v1129 = vmul.f32 %v1128, %v981
        %v1130 = vmul.f32 %v1128, %v982
        %v1131 = vmul.f32 %v1129, 1.442695
        %v1132 = vpow.pop %v1131
        %v1133 = vmul.f32 %v1130, 1.442695
        %v1134 = vpow.pop %v1133
        %v1135 = vmul.f32 %v1132, %v1032
        %v1136 = vmul.f32 %v1134, %v1033
        %v1137 = vlaneseq
        %v1138 = vshrl.u32 %v1137, 7
        %v1139 = vsub.s32 0, %v1138
        %v1140 = vrot.slane %v1111, %v1139
        %v1141 = vmul.f32 %v1121, %v1140
        %v1142 = vmul.f32 %v1124, %v1140
        %v1143 = vadd.f32 %v1135, %v1141
        %v1144 = vadd.f32 %v1136, %v1142
        %1146 = vrot.lane.b32.xlu0 %v1112, 112
        %v1147 = vpop.permute.xlu0 %1146
        %v1148 = vsel %vm989, %v1147, 0
        %1150 = vmatprep.subr.mxu0 0.0
        %1151 = vmatpush1.msra.mxu0 %v1143
        %1152 = vmatprep.subr.mxu0 0.0
        %1153 = vmatpush1.msra.mxu0 %v1144
        %1154 = vmatprep.subr.mxu0 0.0
        %1155 = vmatpush1.msra.mxu0 0.0
        %1156 = vmatprep.subr.mxu0 0.0
        %1157 = vmatpush1.msra.mxu0 0.0
        %1158 = vmatprep.subr.mxu0 0.0
        %1159 = vmatpush1.msra.mxu0 0.0
        %1160 = vmatprep.subr.mxu0 0.0
        %1161 = vmatpush1.msra.mxu0 0.0
        %1162 = vmatprep.subr.mxu0 0.0
        %1163 = vmatpush1.msra.mxu0 0.0
        %1164 = vmatprep.subr.mxu0 0.0
        %1165 = vmatpush1.msra.mxu0 0.0
        %1166 = vmatprep.subr.mxu0 0.0
        %1167 = vmatpush1.msra.mxu0 0.0
        %1168 = vmatprep.subr.mxu0 0.0
        %1169 = vmatpush1.msra.mxu0 0.0
        %1170 = vmatprep.subr.mxu0 0.0
        %1171 = vmatpush1.msra.mxu0 0.0
        %1172 = vmatprep.subr.mxu0 0.0
        %1173 = vmatpush1.msra.mxu0 0.0
        %1174 = vmatprep.subr.mxu0 0.0
        %1175 = vmatpush1.msra.mxu0 0.0
        %1176 = vmatprep.subr.mxu0 0.0
        %1177 = vmatpush1.msra.mxu0 0.0
        %1178 = vmatprep.subr.mxu0 0.0
        %1179 = vmatpush1.msra.mxu0 0.0
        %1180 = vmatprep.subr.mxu0 0.0
        %1181 = vmatpush1.msra.mxu0 0.0
        %1182 = vmatprep.subr.mxu0 0.0
        %1183 = vmatpush1.msra.mxu0 0.0
        %1184 = vmatprep.subr.mxu0 0.0
        %1185 = vmatpush1.msra.mxu0 0.0
        %1186 = vmatprep.subr.mxu0 0.0
        %1187 = vmatpush1.msra.mxu0 0.0
        %1188 = vmatprep.subr.mxu0 0.0
        %1189 = vmatpush1.msra.mxu0 0.0
        %1190 = vmatprep.subr.mxu0 0.0
        %1191 = vmatpush1.msra.mxu0 0.0
        %1192 = vmatprep.subr.mxu0 0.0
        %1193 = vmatpush1.msra.mxu0 0.0
        %1194 = vmatprep.subr.mxu0 0.0
        %1195 = vmatpush1.msra.mxu0 0.0
        %1196 = vmatprep.subr.mxu0 0.0
        %1197 = vmatpush1.msra.mxu0 0.0
        %1198 = vmatprep.subr.mxu0 0.0
        %1199 = vmatpush1.msra.mxu0 0.0
        %1200 = vmatprep.subr.mxu0 0.0
        %1201 = vmatpush1.msra.mxu0 0.0
        %1202 = vmatprep.subr.mxu0 0.0
        %1203 = vmatpush1.msra.mxu0 0.0
        %1204 = vmatprep.subr.mxu0 0.0
        %1205 = vmatpush1.msra.mxu0 0.0
        %1206 = vmatprep.subr.mxu0 0.0
        %1207 = vmatpush1.msra.mxu0 0.0
        %1208 = vmatprep.subr.mxu0 0.0
        %1209 = vmatpush1.msra.mxu0 0.0
        %1210 = vmatprep.subr.mxu0 0.0
        %1211 = vmatpush1.msra.mxu0 0.0
        %1212 = vmatprep.subr.mxu0 0.0
        %1213 = vmatpush1.msra.mxu0 0.0
        %1214 = vmatprep.mubr.f32.mxu0 0.0
        %1215 = vmatmul.mubr.f32.gmra.mrb[0].mxu0 %v1148
        %v1216 = vpop.f32.mrb[0].mxu0
        %v1217 = vadd.f32 0.0, %v1216
        %v1218 = vpop.f32.mrb[0].mxu0
        %1219 = vdwg.mxu0
        %1220 = vst [vmem:[#allocation6 + $0x1] sm:$0x1] %v1217
        %v1221 = vld [vmem:[#allocation3 + $0x2] sm:$0x1]
        %v1222 = vld [vmem:[#allocation4 + $0x2] sm:$0x1]
        %v1223 = vld [vmem:[#allocation5 + $0x2] sm:$0x1]
        %v1224 = vlaneseq
        %v1225 = vshrl.u32 %v1224, 7
        %v1226 = vsub.s32 0, %v1225
        %v1227 = vrot.slane %v1223, %v1226
        %v1228 = vsel %vm997, %v1227, 0.0
        %v1229 = vsel %vm998, %v1227, 0.0
        %v1230 = vsel %vm989, %v1228, 0.0
        %1231 = vadd.xlane.f32.xlu0 %v1230
        %v1232 = vpop.xlane.xlu0 %1231
        %v1233 = vsel %vm989, %v1229, 0.0
        %1234 = vadd.xlane.f32.xlu0 %v1233
        %v1235 = vpop.xlane.xlu0 %1234
        %v1236 = vlaneseq
        %v1237 = vshrl.u32 %v1236, 7
        %v1238 = vsub.s32 0, %v1237
        %v1239 = vrot.slane %v1221, %v1238
        %v1240 = vmul.f32 %v1239, %v981
        %v1241 = vmul.f32 %v1239, %v982
        %v1242 = vmul.f32 %v1240, 1.442695
        %v1243 = vpow.pop %v1242
        %v1244 = vmul.f32 %v1241, 1.442695
        %v1245 = vpow.pop %v1244
        %v1246 = vmul.f32 %v1243, %v1143
        %v1247 = vmul.f32 %v1245, %v1144
        %v1248 = vlaneseq
        %v1249 = vshrl.u32 %v1248, 7
        %v1250 = vsub.s32 0, %v1249
        %v1251 = vrot.slane %v1222, %v1250
        %v1252 = vmul.f32 %v1232, %v1251
        %v1253 = vmul.f32 %v1235, %v1251
        %v1254 = vadd.f32 %v1246, %v1252
        %v1255 = vadd.f32 %v1247, %v1253
        %1257 = vrot.lane.b32.xlu0 %v1223, 112
        %v1258 = vpop.permute.xlu0 %1257
        %v1259 = vsel %vm989, %v1258, 0
        %1261 = vmatprep.subr.mxu0 0.0
        %1262 = vmatpush1.msra.mxu0 %v1254
        %1263 = vmatprep.subr.mxu0 0.0
        %1264 = vmatpush1.msra.mxu0 %v1255
        %1265 = vmatprep.subr.mxu0 0.0
        %1266 = vmatpush1.msra.mxu0 0.0
        %1267 = vmatprep.subr.mxu0 0.0
        %1268 = vmatpush1.msra.mxu0 0.0
        %1269 = vmatprep.subr.mxu0 0.0
        %1270 = vmatpush1.msra.mxu0 0.0
        %1271 = vmatprep.subr.mxu0 0.0
        %1272 = vmatpush1.msra.mxu0 0.0
        %1273 = vmatprep.subr.mxu0 0.0
        %1274 = vmatpush1.msra.mxu0 0.0
        %1275 = vmatprep.subr.mxu0 0.0
        %1276 = vmatpush1.msra.mxu0 0.0
        %1277 = vmatprep.subr.mxu0 0.0
        %1278 = vmatpush1.msra.mxu0 0.0
        %1279 = vmatprep.subr.mxu0 0.0
        %1280 = vmatpush1.msra.mxu0 0.0
        %1281 = vmatprep.subr.mxu0 0.0
        %1282 = vmatpush1.msra.mxu0 0.0
        %1283 = vmatprep.subr.mxu0 0.0
        %1284 = vmatpush1.msra.mxu0 0.0
        %1285 = vmatprep.subr.mxu0 0.0
        %1286 = vmatpush1.msra.mxu0 0.0
        %1287 = vmatprep.subr.mxu0 0.0
        %1288 = vmatpush1.msra.mxu0 0.0
        %1289 = vmatprep.subr.mxu0 0.0
        %1290 = vmatpush1.msra.mxu0 0.0
        %1291 = vmatprep.subr.mxu0 0.0
        %1292 = vmatpush1.msra.mxu0 0.0
        %1293 = vmatprep.subr.mxu0 0.0
        %1294 = vmatpush1.msra.mxu0 0.0
        %1295 = vmatprep.subr.mxu0 0.0
        %1296 = vmatpush1.msra.mxu0 0.0
        %1297 = vmatprep.subr.mxu0 0.0
        %1298 = vmatpush1.msra.mxu0 0.0
        %1299 = vmatprep.subr.mxu0 0.0
        %1300 = vmatpush1.msra.mxu0 0.0
        %1301 = vmatprep.subr.mxu0 0.0
        %1302 = vmatpush1.msra.mxu0 0.0
        %1303 = vmatprep.subr.mxu0 0.0
        %1304 = vmatpush1.msra.mxu0 0.0
        %1305 = vmatprep.subr.mxu0 0.0
        %1306 = vmatpush1.msra.mxu0 0.0
        %1307 = vmatprep.subr.mxu0 0.0
        %1308 = vmatpush1.msra.mxu0 0.0
        %1309 = vmatprep.subr.mxu0 0.0
        %1310 = vmatpush1.msra.mxu0 0.0
        %1311 = vmatprep.subr.mxu0 0.0
        %1312 = vmatpush1.msra.mxu0 0.0
        %1313 = vmatprep.subr.mxu0 0.0
        %1314 = vmatpush1.msra.mxu0 0.0
        %1315 = vmatprep.subr.mxu0 0.0
        %1316 = vmatpush1.msra.mxu0 0.0
        %1317 = vmatprep.subr.mxu0 0.0
        %1318 = vmatpush1.msra.mxu0 0.0
        %1319 = vmatprep.subr.mxu0 0.0
        %1320 = vmatpush1.msra.mxu0 0.0
        %1321 = vmatprep.subr.mxu0 0.0
        %1322 = vmatpush1.msra.mxu0 0.0
        %1323 = vmatprep.subr.mxu0 0.0
        %1324 = vmatpush1.msra.mxu0 0.0
        %1325 = vmatprep.mubr.f32.mxu0 0.0
        %1326 = vmatmul.mubr.f32.gmra.mrb[0].mxu0 %v1259
        %v1327 = vpop.f32.mrb[0].mxu0
        %v1328 = vadd.f32 0.0, %v1327
        %v1329 = vpop.f32.mrb[0].mxu0
        %1330 = vdwg.mxu0
        %1331 = vst [vmem:[#allocation6 + $0x2] sm:$0x1] %v1328
        %v1332 = vld [vmem:[#allocation3 + $0x3] sm:$0x1]
        %v1333 = vld [vmem:[#allocation4 + $0x3] sm:$0x1]
        %v1334 = vld [vmem:[#allocation5 + $0x3] sm:$0x1]
        %v1335 = vlaneseq
        %v1336 = vshrl.u32 %v1335, 7
        %v1337 = vsub.s32 0, %v1336
        %v1338 = vrot.slane %v1334, %v1337
        %v1339 = vsel %vm997, %v1338, 0.0
        %v1340 = vsel %vm998, %v1338, 0.0
        %v1341 = vsel %vm989, %v1339, 0.0
        %1342 = vadd.xlane.f32.xlu0 %v1341
        %v1343 = vpop.xlane.xlu0 %1342
        %v1344 = vsel %vm989, %v1340, 0.0
        %1345 = vadd.xlane.f32.xlu0 %v1344
        %v1346 = vpop.xlane.xlu0 %1345
        %v1347 = vlaneseq
        %v1348 = vshrl.u32 %v1347, 7
        %v1349 = vsub.s32 0, %v1348
        %v1350 = vrot.slane %v1332, %v1349
        %v1351 = vmul.f32 %v1350, %v981
        %v1352 = vmul.f32 %v1350, %v982
        %v1353 = vmul.f32 %v1351, 1.442695
        %v1354 = vpow.pop %v1353
        %v1355 = vmul.f32 %v1352, 1.442695
        %v1356 = vpow.pop %v1355
        %v1357 = vmul.f32 %v1354, %v1254
        %v1358 = vmul.f32 %v1356, %v1255
        %v1359 = vlaneseq
        %v1360 = vshrl.u32 %v1359, 7
        %v1361 = vsub.s32 0, %v1360
        %v1362 = vrot.slane %v1333, %v1361
        %v1363 = vmul.f32 %v1343, %v1362
        %v1364 = vmul.f32 %v1346, %v1362
        %v1365 = vadd.f32 %v1357, %v1363
        %v1366 = vadd.f32 %v1358, %v1364
        %1368 = vrot.lane.b32.xlu0 %v1334, 112
        %v1369 = vpop.permute.xlu0 %1368
        %v1370 = vsel %vm989, %v1369, 0
        %1372 = vmatprep.subr.mxu0 0.0
        %1373 = vmatpush1.msra.mxu0 %v1365
        %1374 = vmatprep.subr.mxu0 0.0
        %1375 = vmatpush1.msra.mxu0 %v1366
        %1376 = vmatprep.subr.mxu0 0.0
        %1377 = vmatpush1.msra.mxu0 0.0
        %1378 = vmatprep.subr.mxu0 0.0
        %1379 = vmatpush1.msra.mxu0 0.0
        %1380 = vmatprep.subr.mxu0 0.0
        %1381 = vmatpush1.msra.mxu0 0.0
        %1382 = vmatprep.subr.mxu0 0.0
        %1383 = vmatpush1.msra.mxu0 0.0
        %1384 = vmatprep.subr.mxu0 0.0
        %1385 = vmatpush1.msra.mxu0 0.0
        %1386 = vmatprep.subr.mxu0 0.0
        %1387 = vmatpush1.msra.mxu0 0.0
        %1388 = vmatprep.subr.mxu0 0.0
        %1389 = vmatpush1.msra.mxu0 0.0
        %1390 = vmatprep.subr.mxu0 0.0
        %1391 = vmatpush1.msra.mxu0 0.0
        %1392 = vmatprep.subr.mxu0 0.0
        %1393 = vmatpush1.msra.mxu0 0.0
        %1394 = vmatprep.subr.mxu0 0.0
        %1395 = vmatpush1.msra.mxu0 0.0
        %1396 = vmatprep.subr.mxu0 0.0
        %1397 = vmatpush1.msra.mxu0 0.0
        %1398 = vmatprep.subr.mxu0 0.0
        %1399 = vmatpush1.msra.mxu0 0.0
        %1400 = vmatprep.subr.mxu0 0.0
        %1401 = vmatpush1.msra.mxu0 0.0
        %1402 = vmatprep.subr.mxu0 0.0
        %1403 = vmatpush1.msra.mxu0 0.0
        %1404 = vmatprep.subr.mxu0 0.0
        %1405 = vmatpush1.msra.mxu0 0.0
        %1406 = vmatprep.subr.mxu0 0.0
        %1407 = vmatpush1.msra.mxu0 0.0
        %1408 = vmatprep.subr.mxu0 0.0
        %1409 = vmatpush1.msra.mxu0 0.0
        %1410 = vmatprep.subr.mxu0 0.0
        %1411 = vmatpush1.msra.mxu0 0.0
        %1412 = vmatprep.subr.mxu0 0.0
        %1413 = vmatpush1.msra.mxu0 0.0
        %1414 = vmatprep.subr.mxu0 0.0
        %1415 = vmatpush1.msra.mxu0 0.0
        %1416 = vmatprep.subr.mxu0 0.0
        %1417 = vmatpush1.msra.mxu0 0.0
        %1418 = vmatprep.subr.mxu0 0.0
        %1419 = vmatpush1.msra.mxu0 0.0
        %1420 = vmatprep.subr.mxu0 0.0
        %1421 = vmatpush1.msra.mxu0 0.0
        %1422 = vmatprep.subr.mxu0 0.0
        %1423 = vmatpush1.msra.mxu0 0.0
        %1424 = vmatprep.subr.mxu0 0.0
        %1425 = vmatpush1.msra.mxu0 0.0
        %1426 = vmatprep.subr.mxu0 0.0
        %1427 = vmatpush1.msra.mxu0 0.0
        %1428 = vmatprep.subr.mxu0 0.0
        %1429 = vmatpush1.msra.mxu0 0.0
        %1430 = vmatprep.subr.mxu0 0.0
        %1431 = vmatpush1.msra.mxu0 0.0
        %1432 = vmatprep.subr.mxu0 0.0
        %1433 = vmatpush1.msra.mxu0 0.0
        %1434 = vmatprep.subr.mxu0 0.0
        %1435 = vmatpush1.msra.mxu0 0.0
        %1436 = vmatprep.mubr.f32.mxu0 0.0
        %1437 = vmatmul.mubr.f32.gmra.mrb[0].mxu0 %v1370
        %v1438 = vpop.f32.mrb[0].mxu0
        %v1439 = vadd.f32 0.0, %v1438
        %v1440 = vpop.f32.mrb[0].mxu0
        %1441 = vdwg.mxu0
        %1442 = vst [vmem:[#allocation6 + $0x3] sm:$0x1] %v1439
        %v1443 = vld [vmem:[#allocation3 + $0x4] sm:$0x1]
        %v1444 = vld [vmem:[#allocation4 + $0x4] sm:$0x1]
        %v1445 = vld [vmem:[#allocation5 + $0x4] sm:$0x1]
        %v1446 = vlaneseq
        %v1447 = vshrl.u32 %v1446, 7
        %v1448 = vsub.s32 0, %v1447
        %v1449 = vrot.slane %v1445, %v1448
        %v1450 = vsel %vm997, %v1449, 0.0
        %v1451 = vsel %vm998, %v1449, 0.0
        %v1452 = vsel %vm989, %v1450, 0.0
        %1453 = vadd.xlane.f32.xlu0 %v1452
        %v1454 = vpop.xlane.xlu0 %1453
        %v1455 = vsel %vm989, %v1451, 0.0
        %1456 = vadd.xlane.f32.xlu0 %v1455
        %v1457 = vpop.xlane.xlu0 %1456
        %v1458 = vlaneseq
        %v1459 = vshrl.u32 %v1458, 7
        %v1460 = vsub.s32 0, %v1459
        %v1461 = vrot.slane %v1443, %v1460
        %v1462 = vmul.f32 %v1461, %v981
        %v1463 = vmul.f32 %v1461, %v982
        %v1464 = vmul.f32 %v1462, 1.442695
        %v1465 = vpow.pop %v1464
        %v1466 = vmul.f32 %v1463, 1.442695
        %v1467 = vpow.pop %v1466
        %v1468 = vmul.f32 %v1465, %v1365
        %v1469 = vmul.f32 %v1467, %v1366
        %v1470 = vlaneseq
        %v1471 = vshrl.u32 %v1470, 7
        %v1472 = vsub.s32 0, %v1471
        %v1473 = vrot.slane %v1444, %v1472
        %v1474 = vmul.f32 %v1454, %v1473
        %v1475 = vmul.f32 %v1457, %v1473
        %v1476 = vadd.f32 %v1468, %v1474
        %v1477 = vadd.f32 %v1469, %v1475
        %1479 = vrot.lane.b32.xlu0 %v1445, 112
        %v1480 = vpop.permute.xlu0 %1479
        %v1481 = vsel %vm989, %v1480, 0
        %1483 = vmatprep.subr.mxu0 0.0
        %1484 = vmatpush1.msra.mxu0 %v1476
        %1485 = vmatprep.subr.mxu0 0.0
        %1486 = vmatpush1.msra.mxu0 %v1477
        %1487 = vmatprep.subr.mxu0 0.0
        %1488 = vmatpush1.msra.mxu0 0.0
        %1489 = vmatprep.subr.mxu0 0.0
        %1490 = vmatpush1.msra.mxu0 0.0
        %1491 = vmatprep.subr.mxu0 0.0
        %1492 = vmatpush1.msra.mxu0 0.0
        %1493 = vmatprep.subr.mxu0 0.0
        %1494 = vmatpush1.msra.mxu0 0.0
        %1495 = vmatprep.subr.mxu0 0.0
        %1496 = vmatpush1.msra.mxu0 0.0
        %1497 = vmatprep.subr.mxu0 0.0
        %1498 = vmatpush1.msra.mxu0 0.0
        %1499 = vmatprep.subr.mxu0 0.0
        %1500 = vmatpush1.msra.mxu0 0.0
        %1501 = vmatprep.subr.mxu0 0.0
        %1502 = vmatpush1.msra.mxu0 0.0
        %1503 = vmatprep.subr.mxu0 0.0
        %1504 = vmatpush1.msra.mxu0 0.0
        %1505 = vmatprep.subr.mxu0 0.0
        %1506 = vmatpush1.msra.mxu0 0.0
        %1507 = vmatprep.subr.mxu0 0.0
        %1508 = vmatpush1.msra.mxu0 0.0
        %1509 = vmatprep.subr.mxu0 0.0
        %1510 = vmatpush1.msra.mxu0 0.0
        %1511 = vmatprep.subr.mxu0 0.0
        %1512 = vmatpush1.msra.mxu0 0.0
        %1513 = vmatprep.subr.mxu0 0.0
        %1514 = vmatpush1.msra.mxu0 0.0
        %1515 = vmatprep.subr.mxu0 0.0
        %1516 = vmatpush1.msra.mxu0 0.0
        %1517 = vmatprep.subr.mxu0 0.0
        %1518 = vmatpush1.msra.mxu0 0.0
        %1519 = vmatprep.subr.mxu0 0.0
        %1520 = vmatpush1.msra.mxu0 0.0
        %1521 = vmatprep.subr.mxu0 0.0
        %1522 = vmatpush1.msra.mxu0 0.0
        %1523 = vmatprep.subr.mxu0 0.0
        %1524 = vmatpush1.msra.mxu0 0.0
        %1525 = vmatprep.subr.mxu0 0.0
        %1526 = vmatpush1.msra.mxu0 0.0
        %1527 = vmatprep.subr.mxu0 0.0
        %1528 = vmatpush1.msra.mxu0 0.0
        %1529 = vmatprep.subr.mxu0 0.0
        %1530 = vmatpush1.msra.mxu0 0.0
        %1531 = vmatprep.subr.mxu0 0.0
        %1532 = vmatpush1.msra.mxu0 0.0
        %1533 = vmatprep.subr.mxu0 0.0
        %1534 = vmatpush1.msra.mxu0 0.0
        %1535 = vmatprep.subr.mxu0 0.0
        %1536 = vmatpush1.msra.mxu0 0.0
        %1537 = vmatprep.subr.mxu0 0.0
        %1538 = vmatpush1.msra.mxu0 0.0
        %1539 = vmatprep.subr.mxu0 0.0
        %1540 = vmatpush1.msra.mxu0 0.0
        %1541 = vmatprep.subr.mxu0 0.0
        %1542 = vmatpush1.msra.mxu0 0.0
        %1543 = vmatprep.subr.mxu0 0.0
        %1544 = vmatpush1.msra.mxu0 0.0
        %1545 = vmatprep.subr.mxu0 0.0
        %1546 = vmatpush1.msra.mxu0 0.0
        %1547 = vmatprep.mubr.f32.mxu0 0.0
        %1548 = vmatmul.mubr.f32.gmra.mrb[0].mxu0 %v1481
        %v1549 = vpop.f32.mrb[0].mxu0
        %v1550 = vadd.f32 0.0, %v1549
        %v1551 = vpop.f32.mrb[0].mxu0
        %1552 = vdwg.mxu0
        %1553 = vst [vmem:[#allocation6 + $0x4] sm:$0x1] %v1550
        %v1554 = vld [vmem:[#allocation3 + $0x5] sm:$0x1]
        %v1555 = vld [vmem:[#allocation4 + $0x5] sm:$0x1]
        %v1556 = vld [vmem:[#allocation5 + $0x5] sm:$0x1]
        %v1557 = vlaneseq
        %v1558 = vshrl.u32 %v1557, 7
        %v1559 = vsub.s32 0, %v1558
        %v1560 = vrot.slane %v1556, %v1559
        %v1561 = vsel %vm997, %v1560, 0.0
        %v1562 = vsel %vm998, %v1560, 0.0
        %v1563 = vsel %vm989, %v1561, 0.0
        %1564 = vadd.xlane.f32.xlu0 %v1563
        %v1565 = vpop.xlane.xlu0 %1564
        %v1566 = vsel %vm989, %v1562, 0.0
        %1567 = vadd.xlane.f32.xlu0 %v1566
        %v1568 = vpop.xlane.xlu0 %1567
        %v1569 = vlaneseq
        %v1570 = vshrl.u32 %v1569, 7
        %v1571 = vsub.s32 0, %v1570
        %v1572 = vrot.slane %v1554, %v1571
        %v1573 = vmul.f32 %v1572, %v981
        %v1574 = vmul.f32 %v1572, %v982
        %v1575 = vmul.f32 %v1573, 1.442695
        %v1576 = vpow.pop %v1575
        %v1577 = vmul.f32 %v1574, 1.442695
        %v1578 = vpow.pop %v1577
        %v1579 = vmul.f32 %v1576, %v1476
        %v1580 = vmul.f32 %v1578, %v1477
        %v1581 = vlaneseq
        %v1582 = vshrl.u32 %v1581, 7
        %v1583 = vsub.s32 0, %v1582
        %v1584 = vrot.slane %v1555, %v1583
        %v1585 = vmul.f32 %v1565, %v1584
        %v1586 = vmul.f32 %v1568, %v1584
        %v1587 = vadd.f32 %v1579, %v1585
        %v1588 = vadd.f32 %v1580, %v1586
        %1590 = vrot.lane.b32.xlu0 %v1556, 112
        %v1591 = vpop.permute.xlu0 %1590
        %v1592 = vsel %vm989, %v1591, 0
        %1594 = vmatprep.subr.mxu0 0.0
        %1595 = vmatpush1.msra.mxu0 %v1587
        %1596 = vmatprep.subr.mxu0 0.0
        %1597 = vmatpush1.msra.mxu0 %v1588
        %1598 = vmatprep.subr.mxu0 0.0
        %1599 = vmatpush1.msra.mxu0 0.0
        %1600 = vmatprep.subr.mxu0 0.0
        %1601 = vmatpush1.msra.mxu0 0.0
        %1602 = vmatprep.subr.mxu0 0.0
        %1603 = vmatpush1.msra.mxu0 0.0
        %1604 = vmatprep.subr.mxu0 0.0
        %1605 = vmatpush1.msra.mxu0 0.0
        %1606 = vmatprep.subr.mxu0 0.0
        %1607 = vmatpush1.msra.mxu0 0.0
        %1608 = vmatprep.subr.mxu0 0.0
        %1609 = vmatpush1.msra.mxu0 0.0
        %1610 = vmatprep.subr.mxu0 0.0
        %1611 = vmatpush1.msra.mxu0 0.0
        %1612 = vmatprep.subr.mxu0 0.0
        %1613 = vmatpush1.msra.mxu0 0.0
        %1614 = vmatprep.subr.mxu0 0.0
        %1615 = vmatpush1.msra.mxu0 0.0
        %1616 = vmatprep.subr.mxu0 0.0
        %1617 = vmatpush1.msra.mxu0 0.0
        %1618 = vmatprep.subr.mxu0 0.0
        %1619 = vmatpush1.msra.mxu0 0.0
        %1620 = vmatprep.subr.mxu0 0.0
        %1621 = vmatpush1.msra.mxu0 0.0
        %1622 = vmatprep.subr.mxu0 0.0
        %1623 = vmatpush1.msra.mxu0 0.0
        %1624 = vmatprep.subr.mxu0 0.0
        %1625 = vmatpush1.msra.mxu0 0.0
        %1626 = vmatprep.subr.mxu0 0.0
        %1627 = vmatpush1.msra.mxu0 0.0
        %1628 = vmatprep.subr.mxu0 0.0
        %1629 = vmatpush1.msra.mxu0 0.0
        %1630 = vmatprep.subr.mxu0 0.0
        %1631 = vmatpush1.msra.mxu0 0.0
        %1632 = vmatprep.subr.mxu0 0.0
        %1633 = vmatpush1.msra.mxu0 0.0
        %1634 = vmatprep.subr.mxu0 0.0
        %1635 = vmatpush1.msra.mxu0 0.0
        %1636 = vmatprep.subr.mxu0 0.0
        %1637 = vmatpush1.msra.mxu0 0.0
        %1638 = vmatprep.subr.mxu0 0.0
        %1639 = vmatpush1.msra.mxu0 0.0
        %1640 = vmatprep.subr.mxu0 0.0
        %1641 = vmatpush1.msra.mxu0 0.0
        %1642 = vmatprep.subr.mxu0 0.0
        %1643 = vmatpush1.msra.mxu0 0.0
        %1644 = vmatprep.subr.mxu0 0.0
        %1645 = vmatpush1.msra.mxu0 0.0
        %1646 = vmatprep.subr.mxu0 0.0
        %1647 = vmatpush1.msra.mxu0 0.0
        %1648 = vmatprep.subr.mxu0 0.0
        %1649 = vmatpush1.msra.mxu0 0.0
        %1650 = vmatprep.subr.mxu0 0.0
        %1651 = vmatpush1.msra.mxu0 0.0
        %1652 = vmatprep.subr.mxu0 0.0
        %1653 = vmatpush1.msra.mxu0 0.0
        %1654 = vmatprep.subr.mxu0 0.0
        %1655 = vmatpush1.msra.mxu0 0.0
        %1656 = vmatprep.subr.mxu0 0.0
        %1657 = vmatpush1.msra.mxu0 0.0
        %1658 = vmatprep.mubr.f32.mxu0 0.0
        %1659 = vmatmul.mubr.f32.gmra.mrb[0].mxu0 %v1592
        %v1660 = vpop.f32.mrb[0].mxu0
        %v1661 = vadd.f32 0.0, %v1660
        %v1662 = vpop.f32.mrb[0].mxu0
        %1663 = vdwg.mxu0
        %1664 = vst [vmem:[#allocation6 + $0x5] sm:$0x1] %v1661
        %v1665 = vld [vmem:[#allocation3 + $0x6] sm:$0x1]
        %v1666 = vld [vmem:[#allocation4 + $0x6] sm:$0x1]
        %v1667 = vld [vmem:[#allocation5 + $0x6] sm:$0x1]
        %v1668 = vlaneseq
        %v1669 = vshrl.u32 %v1668, 7
        %v1670 = vsub.s32 0, %v1669
        %v1671 = vrot.slane %v1667, %v1670
        %v1672 = vsel %vm997, %v1671, 0.0
        %v1673 = vsel %vm998, %v1671, 0.0
        %v1674 = vsel %vm989, %v1672, 0.0
        %1675 = vadd.xlane.f32.xlu0 %v1674
        %v1676 = vpop.xlane.xlu0 %1675
        %v1677 = vsel %vm989, %v1673, 0.0
        %1678 = vadd.xlane.f32.xlu0 %v1677
        %v1679 = vpop.xlane.xlu0 %1678
        %v1680 = vlaneseq
        %v1681 = vshrl.u32 %v1680, 7
        %v1682 = vsub.s32 0, %v1681
        %v1683 = vrot.slane %v1665, %v1682
        %v1684 = vmul.f32 %v1683, %v981
        %v1685 = vmul.f32 %v1683, %v982
        %v1686 = vmul.f32 %v1684, 1.442695
        %v1687 = vpow.pop %v1686
        %v1688 = vmul.f32 %v1685, 1.442695
        %v1689 = vpow.pop %v1688
        %v1690 = vmul.f32 %v1687, %v1587
        %v1691 = vmul.f32 %v1689, %v1588
        %v1692 = vlaneseq
        %v1693 = vshrl.u32 %v1692, 7
        %v1694 = vsub.s32 0, %v1693
        %v1695 = vrot.slane %v1666, %v1694
        %v1696 = vmul.f32 %v1676, %v1695
        %v1697 = vmul.f32 %v1679, %v1695
        %v1698 = vadd.f32 %v1690, %v1696
        %v1699 = vadd.f32 %v1691, %v1697
        %1701 = vrot.lane.b32.xlu0 %v1667, 112
        %v1702 = vpop.permute.xlu0 %1701
        %v1703 = vsel %vm989, %v1702, 0
        %1705 = vmatprep.subr.mxu0 0.0
        %1706 = vmatpush1.msra.mxu0 %v1698
        %1707 = vmatprep.subr.mxu0 0.0
        %1708 = vmatpush1.msra.mxu0 %v1699
        %1709 = vmatprep.subr.mxu0 0.0
        %1710 = vmatpush1.msra.mxu0 0.0
        %1711 = vmatprep.subr.mxu0 0.0
        %1712 = vmatpush1.msra.mxu0 0.0
        %1713 = vmatprep.subr.mxu0 0.0
        %1714 = vmatpush1.msra.mxu0 0.0
        %1715 = vmatprep.subr.mxu0 0.0
        %1716 = vmatpush1.msra.mxu0 0.0
        %1717 = vmatprep.subr.mxu0 0.0
        %1718 = vmatpush1.msra.mxu0 0.0
        %1719 = vmatprep.subr.mxu0 0.0
        %1720 = vmatpush1.msra.mxu0 0.0
        %1721 = vmatprep.subr.mxu0 0.0
        %1722 = vmatpush1.msra.mxu0 0.0
        %1723 = vmatprep.subr.mxu0 0.0
        %1724 = vmatpush1.msra.mxu0 0.0
        %1725 = vmatprep.subr.mxu0 0.0
        %1726 = vmatpush1.msra.mxu0 0.0
        %1727 = vmatprep.subr.mxu0 0.0
        %1728 = vmatpush1.msra.mxu0 0.0
        %1729 = vmatprep.subr.mxu0 0.0
        %1730 = vmatpush1.msra.mxu0 0.0
        %1731 = vmatprep.subr.mxu0 0.0
        %1732 = vmatpush1.msra.mxu0 0.0
        %1733 = vmatprep.subr.mxu0 0.0
        %1734 = vmatpush1.msra.mxu0 0.0
        %1735 = vmatprep.subr.mxu0 0.0
        %1736 = vmatpush1.msra.mxu0 0.0
        %1737 = vmatprep.subr.mxu0 0.0
        %1738 = vmatpush1.msra.mxu0 0.0
        %1739 = vmatprep.subr.mxu0 0.0
        %1740 = vmatpush1.msra.mxu0 0.0
        %1741 = vmatprep.subr.mxu0 0.0
        %1742 = vmatpush1.msra.mxu0 0.0
        %1743 = vmatprep.subr.mxu0 0.0
        %1744 = vmatpush1.msra.mxu0 0.0
        %1745 = vmatprep.subr.mxu0 0.0
        %1746 = vmatpush1.msra.mxu0 0.0
        %1747 = vmatprep.subr.mxu0 0.0
        %1748 = vmatpush1.msra.mxu0 0.0
        %1749 = vmatprep.subr.mxu0 0.0
        %1750 = vmatpush1.msra.mxu0 0.0
        %1751 = vmatprep.subr.mxu0 0.0
        %1752 = vmatpush1.msra.mxu0 0.0
        %1753 = vmatprep.subr.mxu0 0.0
        %1754 = vmatpush1.msra.mxu0 0.0
        %1755 = vmatprep.subr.mxu0 0.0
        %1756 = vmatpush1.msra.mxu0 0.0
        %1757 = vmatprep.subr.mxu0 0.0
        %1758 = vmatpush1.msra.mxu0 0.0
        %1759 = vmatprep.subr.mxu0 0.0
        %1760 = vmatpush1.msra.mxu0 0.0
        %1761 = vmatprep.subr.mxu0 0.0
        %1762 = vmatpush1.msra.mxu0 0.0
        %1763 = vmatprep.subr.mxu0 0.0
        %1764 = vmatpush1.msra.mxu0 0.0
        %1765 = vmatprep.subr.mxu0 0.0
        %1766 = vmatpush1.msra.mxu0 0.0
        %1767 = vmatprep.subr.mxu0 0.0
        %1768 = vmatpush1.msra.mxu0 0.0
        %1769 = vmatprep.mubr.f32.mxu0 0.0
        %1770 = vmatmul.mubr.f32.gmra.mrb[0].mxu0 %v1703
        %v1771 = vpop.f32.mrb[0].mxu0
        %v1772 = vadd.f32 0.0, %v1771
        %v1773 = vpop.f32.mrb[0].mxu0
        %1774 = vdwg.mxu0
        %1775 = vst [vmem:[#allocation6 + $0x6] sm:$0x1] %v1772
        %v1776 = vld [vmem:[#allocation3 + $0x7] sm:$0x1]
        %v1777 = vld [vmem:[#allocation4 + $0x7] sm:$0x1]
        %v1778 = vld [vmem:[#allocation5 + $0x7] sm:$0x1]
        %v1779 = vlaneseq
        %v1780 = vshrl.u32 %v1779, 7
        %v1781 = vsub.s32 0, %v1780
        %v1782 = vrot.slane %v1778, %v1781
        %v1783 = vsel %vm997, %v1782, 0.0
        %v1784 = vsel %vm998, %v1782, 0.0
        %v1785 = vsel %vm989, %v1783, 0.0
        %1786 = vadd.xlane.f32.xlu0 %v1785
        %v1787 = vpop.xlane.xlu0 %1786
        %v1788 = vsel %vm989, %v1784, 0.0
        %1789 = vadd.xlane.f32.xlu0 %v1788
        %v1790 = vpop.xlane.xlu0 %1789
        %v1791 = vlaneseq
        %v1792 = vshrl.u32 %v1791, 7
        %v1793 = vsub.s32 0, %v1792
        %v1794 = vrot.slane %v1776, %v1793
        %v1795 = vmul.f32 %v1794, %v981
        %v1796 = vmul.f32 %v1794, %v982
        %v1797 = vmul.f32 %v1795, 1.442695
        %v1798 = vpow.pop %v1797
        %v1799 = vmul.f32 %v1796, 1.442695
        %v1800 = vpow.pop %v1799
        %v1801 = vmul.f32 %v1798, %v1698
        %v1802 = vmul.f32 %v1800, %v1699
        %v1803 = vlaneseq
        %v1804 = vshrl.u32 %v1803, 7
        %v1805 = vsub.s32 0, %v1804
        %v1806 = vrot.slane %v1777, %v1805
        %v1807 = vmul.f32 %v1787, %v1806
        %v1808 = vmul.f32 %v1790, %v1806
        %v1809 = vadd.f32 %v1801, %v1807
        %v1810 = vadd.f32 %v1802, %v1808
        %1812 = vrot.lane.b32.xlu0 %v1778, 112
        %v1813 = vpop.permute.xlu0 %1812
        %v1814 = vsel %vm989, %v1813, 0
        %1816 = vmatprep.subr.mxu0 0.0
        %1817 = vmatpush1.msra.mxu0 %v1809
        %1818 = vmatprep.subr.mxu0 0.0
        %1819 = vmatpush1.msra.mxu0 %v1810
        %1820 = vmatprep.subr.mxu0 0.0
        %1821 = vmatpush1.msra.mxu0 0.0
        %1822 = vmatprep.subr.mxu0 0.0
        %1823 = vmatpush1.msra.mxu0 0.0
        %1824 = vmatprep.subr.mxu0 0.0
        %1825 = vmatpush1.msra.mxu0 0.0
        %1826 = vmatprep.subr.mxu0 0.0
        %1827 = vmatpush1.msra.mxu0 0.0
        %1828 = vmatprep.subr.mxu0 0.0
        %1829 = vmatpush1.msra.mxu0 0.0
        %1830 = vmatprep.subr.mxu0 0.0
        %1831 = vmatpush1.msra.mxu0 0.0
        %1832 = vmatprep.subr.mxu0 0.0
        %1833 = vmatpush1.msra.mxu0 0.0
        %1834 = vmatprep.subr.mxu0 0.0
        %1835 = vmatpush1.msra.mxu0 0.0
        %1836 = vmatprep.subr.mxu0 0.0
        %1837 = vmatpush1.msra.mxu0 0.0
        %1838 = vmatprep.subr.mxu0 0.0
        %1839 = vmatpush1.msra.mxu0 0.0
        %1840 = vmatprep.subr.mxu0 0.0
        %1841 = vmatpush1.msra.mxu0 0.0
        %1842 = vmatprep.subr.mxu0 0.0
        %1843 = vmatpush1.msra.mxu0 0.0
        %1844 = vmatprep.subr.mxu0 0.0
        %1845 = vmatpush1.msra.mxu0 0.0
        %1846 = vmatprep.subr.mxu0 0.0
        %1847 = vmatpush1.msra.mxu0 0.0
        %1848 = vmatprep.subr.mxu0 0.0
        %1849 = vmatpush1.msra.mxu0 0.0
        %1850 = vmatprep.subr.mxu0 0.0
        %1851 = vmatpush1.msra.mxu0 0.0
        %1852 = vmatprep.subr.mxu0 0.0
        %1853 = vmatpush1.msra.mxu0 0.0
        %1854 = vmatprep.subr.mxu0 0.0
        %1855 = vmatpush1.msra.mxu0 0.0
        %1856 = vmatprep.subr.mxu0 0.0
        %1857 = vmatpush1.msra.mxu0 0.0
        %1858 = vmatprep.subr.mxu0 0.0
        %1859 = vmatpush1.msra.mxu0 0.0
        %1860 = vmatprep.subr.mxu0 0.0
        %1861 = vmatpush1.msra.mxu0 0.0
        %1862 = vmatprep.subr.mxu0 0.0
        %1863 = vmatpush1.msra.mxu0 0.0
        %1864 = vmatprep.subr.mxu0 0.0
        %1865 = vmatpush1.msra.mxu0 0.0
        %1866 = vmatprep.subr.mxu0 0.0
        %1867 = vmatpush1.msra.mxu0 0.0
        %1868 = vmatprep.subr.mxu0 0.0
        %1869 = vmatpush1.msra.mxu0 0.0
        %1870 = vmatprep.subr.mxu0 0.0
        %1871 = vmatpush1.msra.mxu0 0.0
        %1872 = vmatprep.subr.mxu0 0.0
        %1873 = vmatpush1.msra.mxu0 0.0
        %1874 = vmatprep.subr.mxu0 0.0
        %1875 = vmatpush1.msra.mxu0 0.0
        %1876 = vmatprep.subr.mxu0 0.0
        %1877 = vmatpush1.msra.mxu0 0.0
        %1878 = vmatprep.subr.mxu0 0.0
        %1879 = vmatpush1.msra.mxu0 0.0
        %1880 = vmatprep.mubr.f32.mxu0 0.0
        %1881 = vmatmul.mubr.f32.gmra.mrb[0].mxu0 %v1814
        %v1882 = vpop.f32.mrb[0].mxu0
        %v1883 = vadd.f32 0.0, %v1882
        %v1884 = vpop.f32.mrb[0].mxu0
        %1885 = vdwg.mxu0
        %1886 = vst [vmem:[#allocation6 + $0x7] sm:$0x1] %v1883
        %v1887 = vld [vmem:[#allocation6] sm:$0xff]
        %v1888 = vld [vmem:[%s8] sm:$0x1]
        %v1890 = vlaneseq
        %v1891 = vshrl.u32 %v1890, 7
        %v1892 = vsub.s32 0, %v1891
        %v1893 = vrot.slane %v1888, %v1892
        %v1895 = vmul.f32 %v856, %v1893
        %v1896 = vadd.f32 %v1887, %v1895
        %v1897 = vxor.u32 %v808, 2147483648
        %v1898 = vmul.f32 %v1897, 1.442695
        %v1899 = vpow.pop %v1898
        %v1900 = vadd.f32 %v1899, 1.0
        %v1901 = vrcp.pop %v1900
        %v1902 = vmul.f32 1.0, %v1901
        %v1903 = vmul.f32 %v808, %v1902
        %v1904 = vmul.f32 %v1896, %v1903
        %v1905 = vld [vmem:[%s9] sm:$0xff]
        %v1906 = vld [vmem:[%s9 + $0x8] sm:$0xff]
        %v1907 = vld [vmem:[%s9 + $0x10] sm:$0xff]
        %v1908 = vld [vmem:[%s9 + $0x18] sm:$0xff]
        %v1909 = vld [vmem:[%s9 + $0x20] sm:$0xff]
        %v1910 = vld [vmem:[%s9 + $0x28] sm:$0xff]
        %v1911 = vld [vmem:[%s9 + $0x30] sm:$0xff]
        %v1912 = vld [vmem:[%s9 + $0x38] sm:$0xff]
        %v1913 = vld [vmem:[%s9 + $0x40] sm:$0xff]
        %v1914 = vld [vmem:[%s9 + $0x48] sm:$0xff]
        %v1915 = vld [vmem:[%s9 + $0x50] sm:$0xff]
        %v1916 = vld [vmem:[%s9 + $0x58] sm:$0xff]
        %v1917 = vld [vmem:[%s9 + $0x60] sm:$0xff]
        %v1918 = vld [vmem:[%s9 + $0x68] sm:$0xff]
        %v1919 = vld [vmem:[%s9 + $0x70] sm:$0xff]
        %v1920 = vld [vmem:[%s9 + $0x78] sm:$0xff]
        %1921 = vmatprep.subr.mxu0 0.0
        %1922 = vmatpush1.msra.mxu0 %v1905
        %1923 = vmatprep.subr.mxu0 0.0
        %1924 = vmatpush1.msra.mxu0 %v1906
        %1925 = vmatprep.subr.mxu0 0.0
        %1926 = vmatpush1.msra.mxu0 %v1907
        %1927 = vmatprep.subr.mxu0 0.0
        %1928 = vmatpush1.msra.mxu0 %v1908
        %1929 = vmatprep.subr.mxu0 0.0
        %1930 = vmatpush1.msra.mxu0 %v1909
        %1931 = vmatprep.subr.mxu0 0.0
        %1932 = vmatpush1.msra.mxu0 %v1910
        %1933 = vmatprep.subr.mxu0 0.0
        %1934 = vmatpush1.msra.mxu0 %v1911
        %1935 = vmatprep.subr.mxu0 0.0
        %1936 = vmatpush1.msra.mxu0 %v1912
        %1937 = vmatprep.subr.mxu0 0.0
        %1938 = vmatpush1.msra.mxu0 %v1913
        %1939 = vmatprep.subr.mxu0 0.0
        %1940 = vmatpush1.msra.mxu0 %v1914
        %1941 = vmatprep.subr.mxu0 0.0
        %1942 = vmatpush1.msra.mxu0 %v1915
        %1943 = vmatprep.subr.mxu0 0.0
        %1944 = vmatpush1.msra.mxu0 %v1916
        %1945 = vmatprep.subr.mxu0 0.0
        %1946 = vmatpush1.msra.mxu0 %v1917
        %1947 = vmatprep.subr.mxu0 0.0
        %1948 = vmatpush1.msra.mxu0 %v1918
        %1949 = vmatprep.subr.mxu0 0.0
        %1950 = vmatpush1.msra.mxu0 %v1919
        %1951 = vmatprep.subr.mxu0 0.0
        %1952 = vmatpush1.msra.mxu0 %v1920
        %1953 = vmatprep.subr.mxu0 0.0
        %1954 = vmatpush1.msra.mxu0 0.0
        %1955 = vmatprep.subr.mxu0 0.0
        %1956 = vmatpush1.msra.mxu0 0.0
        %1957 = vmatprep.subr.mxu0 0.0
        %1958 = vmatpush1.msra.mxu0 0.0
        %1959 = vmatprep.subr.mxu0 0.0
        %1960 = vmatpush1.msra.mxu0 0.0
        %1961 = vmatprep.subr.mxu0 0.0
        %1962 = vmatpush1.msra.mxu0 0.0
        %1963 = vmatprep.subr.mxu0 0.0
        %1964 = vmatpush1.msra.mxu0 0.0
        %1965 = vmatprep.subr.mxu0 0.0
        %1966 = vmatpush1.msra.mxu0 0.0
        %1967 = vmatprep.subr.mxu0 0.0
        %1968 = vmatpush1.msra.mxu0 0.0
        %1969 = vmatprep.subr.mxu0 0.0
        %1970 = vmatpush1.msra.mxu0 0.0
        %1971 = vmatprep.subr.mxu0 0.0
        %1972 = vmatpush1.msra.mxu0 0.0
        %1973 = vmatprep.subr.mxu0 0.0
        %1974 = vmatpush1.msra.mxu0 0.0
        %1975 = vmatprep.subr.mxu0 0.0
        %1976 = vmatpush1.msra.mxu0 0.0
        %1977 = vmatprep.subr.mxu0 0.0
        %1978 = vmatpush1.msra.mxu0 0.0
        %1979 = vmatprep.subr.mxu0 0.0
        %1980 = vmatpush1.msra.mxu0 0.0
        %1981 = vmatprep.subr.mxu0 0.0
        %1982 = vmatpush1.msra.mxu0 0.0
        %1983 = vmatprep.subr.mxu0 0.0
        %1984 = vmatpush1.msra.mxu0 0.0
        %1985 = vmatprep.mubr.f32.mxu0 0.0
        %1986 = vmatmul.mubr.f32.gmra.mrb[0].mxu0 %v1904
        %v1987 = vpop.f32.mrb[0].mxu0
        %v1988 = vadd.f32 0.0, %v1987
        %v1989 = vpop.f32.mrb[0].mxu0
        %1990 = vdwg.mxu0
        %vm1991 = vcmp.lt.s32.totalorder %v996, 8
        %v1992 = vsel %vm1991, %v1988, 0.0
        %1993 = vadd.xlane.f32.xlu0 %v1992
        %v1994 = vpop.xlane.xlu0 %1993
        %v1995 = vmul.f32 %v1994, 0.125
        %v1996 = vsub.f32 %v1988, %v1995
        %v1997 = vsel %vm1991, %v1996, 0.0
        %v1998 = vmul.f32 %v1997, %v1997
        %1999 = vadd.xlane.f32.xlu0 %v1998
        %v2000 = vpop.xlane.xlu0 %1999
        %v2001 = vmul.f32 %v2000, 0.125
        %v2002 = vadd.f32 %v2001, 1e-05
        %v2003 = vrsqrt.pop %v2002
        %v2004 = vmul.f32 %v1997, %v2003
        %v2005 = vld [vmem:[%s10] sm:$0x1]
        %v2007 = vlaneseq
        %v2008 = vshrl.u32 %v2007, 7
        %v2009 = vsub.s32 0, %v2008
        %v2010 = vrot.slane %v2005, %v2009
        %v2012 = vmul.f32 %v2004, %v2010
        %v2013 = vld [vmem:[%s11] sm:$0x1]
        %v2015 = vlaneseq
        %v2016 = vshrl.u32 %v2015, 7
        %v2017 = vsub.s32 0, %v2016
        %v2018 = vrot.slane %v2013, %v2017
        %v2020 = vadd.f32 %v2012, %v2018
        %v2021 = vld [vmem:[%s12] sm:$0xff]
        %v2022 = vld [vmem:[%s12 + $0x8] sm:$0xff]
        %v2023 = vld [vmem:[%s12 + $0x10] sm:$0xff]
        %v2024 = vld [vmem:[%s12 + $0x18] sm:$0xff]
        %v2025 = vld [vmem:[%s12 + $0x20] sm:$0xff]
        %v2026 = vld [vmem:[%s12 + $0x28] sm:$0xff]
        %v2027 = vld [vmem:[%s12 + $0x30] sm:$0xff]
        %v2028 = vld [vmem:[%s12 + $0x38] sm:$0xff]
        %v2029 = vld [vmem:[%s12 + $0x40] sm:$0xff]
        %v2030 = vld [vmem:[%s12 + $0x48] sm:$0xff]
        %v2031 = vld [vmem:[%s12 + $0x50] sm:$0xff]
        %v2032 = vld [vmem:[%s12 + $0x58] sm:$0xff]
        %v2033 = vld [vmem:[%s12 + $0x60] sm:$0xff]
        %v2034 = vld [vmem:[%s12 + $0x68] sm:$0xff]
        %v2035 = vld [vmem:[%s12 + $0x70] sm:$0xff]
        %v2036 = vld [vmem:[%s12 + $0x78] sm:$0xff]
        %v2037 = vld [vmem:[%s12 + $0x80] sm:$0xff]
        %v2038 = vld [vmem:[%s12 + $0x88] sm:$0xff]
        %v2039 = vld [vmem:[%s12 + $0x90] sm:$0xff]
        %v2040 = vld [vmem:[%s12 + $0x98] sm:$0xff]
        %v2041 = vld [vmem:[%s12 + $0xa0] sm:$0xff]
        %v2042 = vld [vmem:[%s12 + $0xa8] sm:$0xff]
        %v2043 = vld [vmem:[%s12 + $0xb0] sm:$0xff]
        %v2044 = vld [vmem:[%s12 + $0xb8] sm:$0xff]
        %v2045 = vld [vmem:[%s12 + $0xc0] sm:$0xff]
        %v2046 = vld [vmem:[%s12 + $0xc8] sm:$0xff]
        %v2047 = vld [vmem:[%s12 + $0xd0] sm:$0xff]
        %v2048 = vld [vmem:[%s12 + $0xd8] sm:$0xff]
        %v2049 = vld [vmem:[%s12 + $0xe0] sm:$0xff]
        %v2050 = vld [vmem:[%s12 + $0xe8] sm:$0xff]
        %v2051 = vld [vmem:[%s12 + $0xf0] sm:$0xff]
        %v2052 = vld [vmem:[%s12 + $0xf8] sm:$0xff]
        %2053 = vmatprep.subr.mxu0 %v2022
        %2054 = vmatpush1.msra.mxu0 %v2021
        %2055 = vmatprep.subr.mxu0 %v2024
        %2056 = vmatpush1.msra.mxu0 %v2023
        %2057 = vmatprep.subr.mxu0 %v2026
        %2058 = vmatpush1.msra.mxu0 %v2025
        %2059 = vmatprep.subr.mxu0 %v2028
        %2060 = vmatpush1.msra.mxu0 %v2027
        %2061 = vmatprep.subr.mxu0 %v2030
        %2062 = vmatpush1.msra.mxu0 %v2029
        %2063 = vmatprep.subr.mxu0 %v2032
        %2064 = vmatpush1.msra.mxu0 %v2031
        %2065 = vmatprep.subr.mxu0 %v2034
        %2066 = vmatpush1.msra.mxu0 %v2033
        %2067 = vmatprep.subr.mxu0 %v2036
        %2068 = vmatpush1.msra.mxu0 %v2035
        %2069 = vmatprep.subr.mxu0 %v2038
        %2070 = vmatpush1.msra.mxu0 %v2037
        %2071 = vmatprep.subr.mxu0 %v2040
        %2072 = vmatpush1.msra.mxu0 %v2039
        %2073 = vmatprep.subr.mxu0 %v2042
        %2074 = vmatpush1.msra.mxu0 %v2041
        %2075 = vmatprep.subr.mxu0 %v2044
        %2076 = vmatpush1.msra.mxu0 %v2043
        %2077 = vmatprep.subr.mxu0 %v2046
        %2078 = vmatpush1.msra.mxu0 %v2045
        %2079 = vmatprep.subr.mxu0 %v2048
        %2080 = vmatpush1.msra.mxu0 %v2047
        %2081 = vmatprep.subr.mxu0 %v2050
        %2082 = vmatpush1.msra.mxu0 %v2049
        %2083 = vmatprep.subr.mxu0 %v2052
        %2084 = vmatpush1.msra.mxu0 %v2051
        %2085 = vmatprep.subr.mxu0 0.0
        %2086 = vmatpush1.msra.mxu0 0.0
        %2087 = vmatprep.subr.mxu0 0.0
        %2088 = vmatpush1.msra.mxu0 0.0
        %2089 = vmatprep.subr.mxu0 0.0
        %2090 = vmatpush1.msra.mxu0 0.0
        %2091 = vmatprep.subr.mxu0 0.0
        %2092 = vmatpush1.msra.mxu0 0.0
        %2093 = vmatprep.subr.mxu0 0.0
        %2094 = vmatpush1.msra.mxu0 0.0
        %2095 = vmatprep.subr.mxu0 0.0
        %2096 = vmatpush1.msra.mxu0 0.0
        %2097 = vmatprep.subr.mxu0 0.0
        %2098 = vmatpush1.msra.mxu0 0.0
        %2099 = vmatprep.subr.mxu0 0.0
        %2100 = vmatpush1.msra.mxu0 0.0
        %2101 = vmatprep.subr.mxu0 0.0
        %2102 = vmatpush1.msra.mxu0 0.0
        %2103 = vmatprep.subr.mxu0 0.0
        %2104 = vmatpush1.msra.mxu0 0.0
        %2105 = vmatprep.subr.mxu0 0.0
        %2106 = vmatpush1.msra.mxu0 0.0
        %2107 = vmatprep.subr.mxu0 0.0
        %2108 = vmatpush1.msra.mxu0 0.0
        %2109 = vmatprep.subr.mxu0 0.0
        %2110 = vmatpush1.msra.mxu0 0.0
        %2111 = vmatprep.subr.mxu0 0.0
        %2112 = vmatpush1.msra.mxu0 0.0
        %2113 = vmatprep.subr.mxu0 0.0
        %2114 = vmatpush1.msra.mxu0 0.0
        %2115 = vmatprep.subr.mxu0 0.0
        %2116 = vmatpush1.msra.mxu0 0.0
        %2117 = vmatprep.mubr.f32.mxu0 0.0
        %2118 = vmatmul.mubr.f32.gmra.mrb[0].mxu0 %v2020
        %v2119 = vpop.f32.mrb[0].mxu0
        %v2120 = vadd.f32 0.0, %v2119
        %v2121 = vpop.f32.mrb[0].mxu0
        %v2122 = vadd.f32 0.0, %v2121
        %2123 = vdwg.mxu0
        %2124 = vst [vmem:[#allocation2] sm:$0xff] 0.0
        %2125 = vst [vmem:[#allocation2 + $0x8] sm:$0xff] %v2120
        %v2126 = vld [vmem:[%s13 + $0x3] sm:$0x1]
        %v2127 = vlaneseq
        %v2128 = vshrl.u32 %v2127, 7
        %v2129 = vsub.s32 0, %v2128
        %v2130 = vrot.slane %v2126, %v2129
        %v2131 = vmul.f32 %v2120, %v2130
        %v2132 = vld [vmem:[#allocation2 + $0x5] sm:$0xff]
        %v2133 = vld [vmem:[%s13] sm:$0x1]
        %v2134 = vlaneseq
        %v2135 = vshrl.u32 %v2134, 7
        %v2136 = vsub.s32 0, %v2135
        %v2137 = vrot.slane %v2133, %v2136
        %v2138 = vmul.f32 %v2132, %v2137
        %v2139 = vadd.f32 %v2131, %v2138
        %v2140 = vld [vmem:[#allocation2 + $0x6] sm:$0xff]
        %v2141 = vld [vmem:[%s13 + $0x1] sm:$0x1]
        %v2142 = vlaneseq
        %v2143 = vshrl.u32 %v2142, 7
        %v2144 = vsub.s32 0, %v2143
        %v2145 = vrot.slane %v2141, %v2144
        %v2146 = vmul.f32 %v2140, %v2145
        %v2147 = vadd.f32 %v2139, %v2146
        %v2148 = vld [vmem:[#allocation2 + $0x7] sm:$0xff]
        %v2149 = vld [vmem:[%s13 + $0x2] sm:$0x1]
        %v2150 = vlaneseq
        %v2151 = vshrl.u32 %v2150, 7
        %v2152 = vsub.s32 0, %v2151
        %v2153 = vrot.slane %v2149, %v2152
        %v2154 = vmul.f32 %v2148, %v2153
        %v2155 = vadd.f32 %v2147, %v2154
        %v2156 = vld [vmem:[%s14] sm:$0x1]
        %v2158 = vlaneseq
        %v2159 = vshrl.u32 %v2158, 7
        %v2160 = vsub.s32 0, %v2159
        %v2161 = vrot.slane %v2156, %v2160
        %v2163 = vadd.f32 %v2155, %v2161
        %v2164 = vxor.u32 %v2163, 2147483648
        %v2165 = vmul.f32 %v2164, 1.442695
        %v2166 = vpow.pop %v2165
        %v2167 = vadd.f32 %v2166, 1.0
        %v2168 = vrcp.pop %v2167
        %v2169 = vmul.f32 1.0, %v2168
        %v2170 = vmul.f32 %v2163, %v2169
        %v2171 = vld [vmem:[%s15] sm:$0xff]
        %v2172 = vld [vmem:[%s15 + $0x8] sm:$0xff]
        %v2173 = vld [vmem:[%s15 + $0x10] sm:$0xff]
        %v2174 = vld [vmem:[%s15 + $0x18] sm:$0xff]
        %v2175 = vld [vmem:[%s15 + $0x20] sm:$0xff]
        %v2176 = vld [vmem:[%s15 + $0x28] sm:$0xff]
        %v2177 = vld [vmem:[%s15 + $0x30] sm:$0xff]
        %v2178 = vld [vmem:[%s15 + $0x38] sm:$0xff]
        %v2179 = vld [vmem:[%s15 + $0x40] sm:$0xff]
        %v2180 = vld [vmem:[%s15 + $0x48] sm:$0xff]
        %v2181 = vld [vmem:[%s15 + $0x50] sm:$0xff]
        %v2182 = vld [vmem:[%s15 + $0x58] sm:$0xff]
        %v2183 = vld [vmem:[%s15 + $0x60] sm:$0xff]
        %v2184 = vld [vmem:[%s15 + $0x68] sm:$0xff]
        %v2185 = vld [vmem:[%s15 + $0x70] sm:$0xff]
        %v2186 = vld [vmem:[%s15 + $0x78] sm:$0xff]
        %2187 = vmatprep.subr.mxu0 0.0
        %2188 = vmatpush1.msra.mxu0 %v2171
        %2189 = vmatprep.subr.mxu0 0.0
        %2190 = vmatpush1.msra.mxu0 %v2172
        %2191 = vmatprep.subr.mxu0 0.0
        %2192 = vmatpush1.msra.mxu0 %v2173
        %2193 = vmatprep.subr.mxu0 0.0
        %2194 = vmatpush1.msra.mxu0 %v2174
        %2195 = vmatprep.subr.mxu0 0.0
        %2196 = vmatpush1.msra.mxu0 %v2175
        %2197 = vmatprep.subr.mxu0 0.0
        %2198 = vmatpush1.msra.mxu0 %v2176
        %2199 = vmatprep.subr.mxu0 0.0
        %2200 = vmatpush1.msra.mxu0 %v2177
        %2201 = vmatprep.subr.mxu0 0.0
        %2202 = vmatpush1.msra.mxu0 %v2178
        %2203 = vmatprep.subr.mxu0 0.0
        %2204 = vmatpush1.msra.mxu0 %v2179
        %2205 = vmatprep.subr.mxu0 0.0
        %2206 = vmatpush1.msra.mxu0 %v2180
        %2207 = vmatprep.subr.mxu0 0.0
        %2208 = vmatpush1.msra.mxu0 %v2181
        %2209 = vmatprep.subr.mxu0 0.0
        %2210 = vmatpush1.msra.mxu0 %v2182
        %2211 = vmatprep.subr.mxu0 0.0
        %2212 = vmatpush1.msra.mxu0 %v2183
        %2213 = vmatprep.subr.mxu0 0.0
        %2214 = vmatpush1.msra.mxu0 %v2184
        %2215 = vmatprep.subr.mxu0 0.0
        %2216 = vmatpush1.msra.mxu0 %v2185
        %2217 = vmatprep.subr.mxu0 0.0
        %2218 = vmatpush1.msra.mxu0 %v2186
        %2219 = vmatprep.subr.mxu0 0.0
        %2220 = vmatpush1.msra.mxu0 0.0
        %2221 = vmatprep.subr.mxu0 0.0
        %2222 = vmatpush1.msra.mxu0 0.0
        %2223 = vmatprep.subr.mxu0 0.0
        %2224 = vmatpush1.msra.mxu0 0.0
        %2225 = vmatprep.subr.mxu0 0.0
        %2226 = vmatpush1.msra.mxu0 0.0
        %2227 = vmatprep.subr.mxu0 0.0
        %2228 = vmatpush1.msra.mxu0 0.0
        %2229 = vmatprep.subr.mxu0 0.0
        %2230 = vmatpush1.msra.mxu0 0.0
        %2231 = vmatprep.subr.mxu0 0.0
        %2232 = vmatpush1.msra.mxu0 0.0
        %2233 = vmatprep.subr.mxu0 0.0
        %2234 = vmatpush1.msra.mxu0 0.0
        %2235 = vmatprep.subr.mxu0 0.0
        %2236 = vmatpush1.msra.mxu0 0.0
        %2237 = vmatprep.subr.mxu0 0.0
        %2238 = vmatpush1.msra.mxu0 0.0
        %2239 = vmatprep.subr.mxu0 0.0
        %2240 = vmatpush1.msra.mxu0 0.0
        %2241 = vmatprep.subr.mxu0 0.0
        %2242 = vmatpush1.msra.mxu0 0.0
        %2243 = vmatprep.subr.mxu0 0.0
        %2244 = vmatpush1.msra.mxu0 0.0
        %2245 = vmatprep.subr.mxu0 0.0
        %2246 = vmatpush1.msra.mxu0 0.0
        %2247 = vmatprep.subr.mxu0 0.0
        %2248 = vmatpush1.msra.mxu0 0.0
        %2249 = vmatprep.subr.mxu0 0.0
        %2250 = vmatpush1.msra.mxu0 0.0
        %2251 = vmatprep.mubr.f32.mxu0 0.0
        %2252 = vmatmul.mubr.f32.gmra.mrb[0].mxu0 %v2170
        %v2253 = vpop.f32.mrb[0].mxu0
        %v2254 = vadd.f32 0.0, %v2253
        %v2255 = vpop.f32.mrb[0].mxu0
        %2256 = vdwg.mxu0
        %v2257 = vld [vmem:[%s16] sm:$0x1]
        %2259 = vset.pattern.permute.xlu0 0
        %2260 = vperm.xlu0 %2259, %v2254
        %v2261 = vpop.permute.xlu0 %2260
        %v2264 = vlaneseq
        %v2265 = vshrl.u32 %v2264, 7
        %v2266 = vsub.s32 0, %v2265
        %v2267 = vrot.slane %v2257, %v2266
        %v2269 = vmul.f32 %v2261, %v2267
        %v2270 = vld [vmem:[%s17] sm:$0x1]
        %v2272 = vlaneseq
        %v2273 = vshrl.u32 %v2272, 7
        %v2274 = vsub.s32 0, %v2273
        %v2275 = vrot.slane %v2270, %v2274
        %v2277 = vadd.f32 %v2269, %v2275
        %v2278 = vmax.f32 %v2277, 0.0
        %v2279 = vand.u32 2147483647, %v2277
        %v2280 = vsub.f32 0.0, %v2279
        %v2281 = vmul.f32 %v2280, 1.442695
        %v2282 = vpow.pop %v2281
        %v2283 = vadd.f32 %v2282, 1.0
        %v2284 = vlog2.pop %v2283
        %v2285 = vmul.f32 %v2284, 0.6931472
        %v2286 = vadd.f32 %v2278, %v2285
        %vm2287 = vcmp.gt.f32.partialorder %v2277, 20.0
        %v2288 = vsel %vm2287, %v2277, %v2286
        %v2289 = vld [vmem:[%s18] sm:$0xff]
        %v2290 = vld [vmem:[%s18 + $0x8] sm:$0xff]
        %v2291 = vmul.f32 %v2289, 1.442695
        %v2292 = vpow.pop %v2291
        %v2293 = vmul.f32 %v2290, 1.442695
        %v2294 = vpow.pop %v2293
        %v2295 = vsub.f32 0.0, %v2292
        %v2296 = vsub.f32 0.0, %v2294
        %2297 = vst [vmem:[#allocation3] sm:$0xff] %v2288
        %v2298 = vmul.f32 %v2288, %v2170
        %2299 = vst [vmem:[#allocation4] sm:$0xff] %v2298
        %2300 = vrot.lane.b32.xlu0 %v2254, 127
        %v2301 = vpop.permute.xlu0 %2300
        %2303 = vst.msk [vmem:[#allocation5] sm:$0xff] %vm990, %v2301
        %v2304 = vld [vmem:[#allocation3] sm:$0x1]
        %v2305 = vld [vmem:[#allocation4] sm:$0x1]
        %v2306 = vld [vmem:[#allocation5] sm:$0x1]
        %v2307 = vlaneseq
        %v2308 = vshrl.u32 %v2307, 7
        %v2309 = vsub.s32 0, %v2308
        %v2310 = vrot.slane %v2306, %v2309
        %v2311 = vsel %vm997, %v2310, 0.0
        %v2312 = vsel %vm998, %v2310, 0.0
        %v2313 = vsel %vm989, %v2311, 0.0
        %2314 = vadd.xlane.f32.xlu0 %v2313
        %v2315 = vpop.xlane.xlu0 %2314
        %v2316 = vsel %vm989, %v2312, 0.0
        %2317 = vadd.xlane.f32.xlu0 %v2316
        %v2318 = vpop.xlane.xlu0 %2317
        %v2319 = vlaneseq
        %v2320 = vshrl.u32 %v2319, 7
        %v2321 = vsub.s32 0, %v2320
        %v2322 = vrot.slane %v2304, %v2321
        %v2323 = vmul.f32 %v2322, %v2295
        %v2324 = vmul.f32 %v2322, %v2296
        %v2325 = vmul.f32 %v2323, 1.442695
        %v2326 = vpow.pop %v2325
        %v2327 = vmul.f32 %v2324, 1.442695
        %v2328 = vpow.pop %v2327
        %v2329 = vmul.f32 %v2326, 0.0
        %v2330 = vmul.f32 %v2328, 0.0
        %v2331 = vlaneseq
        %v2332 = vshrl.u32 %v2331, 7
        %v2333 = vsub.s32 0, %v2332
        %v2334 = vrot.slane %v2305, %v2333
        %v2335 = vmul.f32 %v2315, %v2334
        %v2336 = vmul.f32 %v2318, %v2334
        %v2337 = vadd.f32 %v2329, %v2335
        %v2338 = vadd.f32 %v2330, %v2336
        %2340 = vrot.lane.b32.xlu0 %v2306, 112
        %v2341 = vpop.permute.xlu0 %2340
        %v2342 = vsel %vm989, %v2341, 0
        %2344 = vmatprep.subr.mxu0 0.0
        %2345 = vmatpush1.msra.mxu0 %v2337
        %2346 = vmatprep.subr.mxu0 0.0
        %2347 = vmatpush1.msra.mxu0 %v2338
        %2348 = vmatprep.subr.mxu0 0.0
        %2349 = vmatpush1.msra.mxu0 0.0
        %2350 = vmatprep.subr.mxu0 0.0
        %2351 = vmatpush1.msra.mxu0 0.0
        %2352 = vmatprep.subr.mxu0 0.0
        %2353 = vmatpush1.msra.mxu0 0.0
        %2354 = vmatprep.subr.mxu0 0.0
        %2355 = vmatpush1.msra.mxu0 0.0
        %2356 = vmatprep.subr.mxu0 0.0
        %2357 = vmatpush1.msra.mxu0 0.0
        %2358 = vmatprep.subr.mxu0 0.0
        %2359 = vmatpush1.msra.mxu0 0.0
        %2360 = vmatprep.subr.mxu0 0.0
        %2361 = vmatpush1.msra.mxu0 0.0
        %2362 = vmatprep.subr.mxu0 0.0
        %2363 = vmatpush1.msra.mxu0 0.0
        %2364 = vmatprep.subr.mxu0 0.0
        %2365 = vmatpush1.msra.mxu0 0.0
        %2366 = vmatprep.subr.mxu0 0.0
        %2367 = vmatpush1.msra.mxu0 0.0
        %2368 = vmatprep.subr.mxu0 0.0
        %2369 = vmatpush1.msra.mxu0 0.0
        %2370 = vmatprep.subr.mxu0 0.0
        %2371 = vmatpush1.msra.mxu0 0.0
        %2372 = vmatprep.subr.mxu0 0.0
        %2373 = vmatpush1.msra.mxu0 0.0
        %2374 = vmatprep.subr.mxu0 0.0
        %2375 = vmatpush1.msra.mxu0 0.0
        %2376 = vmatprep.subr.mxu0 0.0
        %2377 = vmatpush1.msra.mxu0 0.0
        %2378 = vmatprep.subr.mxu0 0.0
        %2379 = vmatpush1.msra.mxu0 0.0
        %2380 = vmatprep.subr.mxu0 0.0
        %2381 = vmatpush1.msra.mxu0 0.0
        %2382 = vmatprep.subr.mxu0 0.0
        %2383 = vmatpush1.msra.mxu0 0.0
        %2384 = vmatprep.subr.mxu0 0.0
        %2385 = vmatpush1.msra.mxu0 0.0
        %2386 = vmatprep.subr.mxu0 0.0
        %2387 = vmatpush1.msra.mxu0 0.0
        %2388 = vmatprep.subr.mxu0 0.0
        %2389 = vmatpush1.msra.mxu0 0.0
        %2390 = vmatprep.subr.mxu0 0.0
        %2391 = vmatpush1.msra.mxu0 0.0
        %2392 = vmatprep.subr.mxu0 0.0
        %2393 = vmatpush1.msra.mxu0 0.0
        %2394 = vmatprep.subr.mxu0 0.0
        %2395 = vmatpush1.msra.mxu0 0.0
        %2396 = vmatprep.subr.mxu0 0.0
        %2397 = vmatpush1.msra.mxu0 0.0
        %2398 = vmatprep.subr.mxu0 0.0
        %2399 = vmatpush1.msra.mxu0 0.0
        %2400 = vmatprep.subr.mxu0 0.0
        %2401 = vmatpush1.msra.mxu0 0.0
        %2402 = vmatprep.subr.mxu0 0.0
        %2403 = vmatpush1.msra.mxu0 0.0
        %2404 = vmatprep.subr.mxu0 0.0
        %2405 = vmatpush1.msra.mxu0 0.0
        %2406 = vmatprep.subr.mxu0 0.0
        %2407 = vmatpush1.msra.mxu0 0.0
        %2408 = vmatprep.mubr.f32.mxu0 0.0
        %2409 = vmatmul.mubr.f32.gmra.mrb[0].mxu0 %v2342
        %v2410 = vpop.f32.mrb[0].mxu0
        %v2411 = vadd.f32 0.0, %v2410
        %v2412 = vpop.f32.mrb[0].mxu0
        %2413 = vdwg.mxu0
        %2414 = vst [vmem:[#allocation6] sm:$0x1] %v2411
        %v2415 = vld [vmem:[#allocation3 + $0x1] sm:$0x1]
        %v2416 = vld [vmem:[#allocation4 + $0x1] sm:$0x1]
        %v2417 = vld [vmem:[#allocation5 + $0x1] sm:$0x1]
        %v2418 = vlaneseq
        %v2419 = vshrl.u32 %v2418, 7
        %v2420 = vsub.s32 0, %v2419
        %v2421 = vrot.slane %v2417, %v2420
        %v2422 = vsel %vm997, %v2421, 0.0
        %v2423 = vsel %vm998, %v2421, 0.0
        %v2424 = vsel %vm989, %v2422, 0.0
        %2425 = vadd.xlane.f32.xlu0 %v2424
        %v2426 = vpop.xlane.xlu0 %2425
        %v2427 = vsel %vm989, %v2423, 0.0
        %2428 = vadd.xlane.f32.xlu0 %v2427
        %v2429 = vpop.xlane.xlu0 %2428
        %v2430 = vlaneseq
        %v2431 = vshrl.u32 %v2430, 7
        %v2432 = vsub.s32 0, %v2431
        %v2433 = vrot.slane %v2415, %v2432
        %v2434 = vmul.f32 %v2433, %v2295
        %v2435 = vmul.f32 %v2433, %v2296
        %v2436 = vmul.f32 %v2434, 1.442695
        %v2437 = vpow.pop %v2436
        %v2438 = vmul.f32 %v2435, 1.442695
        %v2439 = vpow.pop %v2438
        %v2440 = vmul.f32 %v2437, %v2337
        %v2441 = vmul.f32 %v2439, %v2338
        %v2442 = vlaneseq
        %v2443 = vshrl.u32 %v2442, 7
        %v2444 = vsub.s32 0, %v2443
        %v2445 = vrot.slane %v2416, %v2444
        %v2446 = vmul.f32 %v2426, %v2445
        %v2447 = vmul.f32 %v2429, %v2445
        %v2448 = vadd.f32 %v2440, %v2446
        %v2449 = vadd.f32 %v2441, %v2447
        %2451 = vrot.lane.b32.xlu0 %v2417, 112
        %v2452 = vpop.permute.xlu0 %2451
        %v2453 = vsel %vm989, %v2452, 0
        %2455 = vmatprep.subr.mxu0 0.0
        %2456 = vmatpush1.msra.mxu0 %v2448
        %2457 = vmatprep.subr.mxu0 0.0
        %2458 = vmatpush1.msra.mxu0 %v2449
        %2459 = vmatprep.subr.mxu0 0.0
        %2460 = vmatpush1.msra.mxu0 0.0
        %2461 = vmatprep.subr.mxu0 0.0
        %2462 = vmatpush1.msra.mxu0 0.0
        %2463 = vmatprep.subr.mxu0 0.0
        %2464 = vmatpush1.msra.mxu0 0.0
        %2465 = vmatprep.subr.mxu0 0.0
        %2466 = vmatpush1.msra.mxu0 0.0
        %2467 = vmatprep.subr.mxu0 0.0
        %2468 = vmatpush1.msra.mxu0 0.0
        %2469 = vmatprep.subr.mxu0 0.0
        %2470 = vmatpush1.msra.mxu0 0.0
        %2471 = vmatprep.subr.mxu0 0.0
        %2472 = vmatpush1.msra.mxu0 0.0
        %2473 = vmatprep.subr.mxu0 0.0
        %2474 = vmatpush1.msra.mxu0 0.0
        %2475 = vmatprep.subr.mxu0 0.0
        %2476 = vmatpush1.msra.mxu0 0.0
        %2477 = vmatprep.subr.mxu0 0.0
        %2478 = vmatpush1.msra.mxu0 0.0
        %2479 = vmatprep.subr.mxu0 0.0
        %2480 = vmatpush1.msra.mxu0 0.0
        %2481 = vmatprep.subr.mxu0 0.0
        %2482 = vmatpush1.msra.mxu0 0.0
        %2483 = vmatprep.subr.mxu0 0.0
        %2484 = vmatpush1.msra.mxu0 0.0
        %2485 = vmatprep.subr.mxu0 0.0
        %2486 = vmatpush1.msra.mxu0 0.0
        %2487 = vmatprep.subr.mxu0 0.0
        %2488 = vmatpush1.msra.mxu0 0.0
        %2489 = vmatprep.subr.mxu0 0.0
        %2490 = vmatpush1.msra.mxu0 0.0
        %2491 = vmatprep.subr.mxu0 0.0
        %2492 = vmatpush1.msra.mxu0 0.0
        %2493 = vmatprep.subr.mxu0 0.0
        %2494 = vmatpush1.msra.mxu0 0.0
        %2495 = vmatprep.subr.mxu0 0.0
        %2496 = vmatpush1.msra.mxu0 0.0
        %2497 = vmatprep.subr.mxu0 0.0
        %2498 = vmatpush1.msra.mxu0 0.0
        %2499 = vmatprep.subr.mxu0 0.0
        %2500 = vmatpush1.msra.mxu0 0.0
        %2501 = vmatprep.subr.mxu0 0.0
        %2502 = vmatpush1.msra.mxu0 0.0
        %2503 = vmatprep.subr.mxu0 0.0
        %2504 = vmatpush1.msra.mxu0 0.0
        %2505 = vmatprep.subr.mxu0 0.0
        %2506 = vmatpush1.msra.mxu0 0.0
        %2507 = vmatprep.subr.mxu0 0.0
        %2508 = vmatpush1.msra.mxu0 0.0
        %2509 = vmatprep.subr.mxu0 0.0
        %2510 = vmatpush1.msra.mxu0 0.0
        %2511 = vmatprep.subr.mxu0 0.0
        %2512 = vmatpush1.msra.mxu0 0.0
        %2513 = vmatprep.subr.mxu0 0.0
        %2514 = vmatpush1.msra.mxu0 0.0
        %2515 = vmatprep.subr.mxu0 0.0
        %2516 = vmatpush1.msra.mxu0 0.0
        %2517 = vmatprep.subr.mxu0 0.0
        %2518 = vmatpush1.msra.mxu0 0.0
        %2519 = vmatprep.mubr.f32.mxu0 0.0
        %2520 = vmatmul.mubr.f32.gmra.mrb[0].mxu0 %v2453
        %v2521 = vpop.f32.mrb[0].mxu0
        %v2522 = vadd.f32 0.0, %v2521
        %v2523 = vpop.f32.mrb[0].mxu0
        %2524 = vdwg.mxu0
        %2525 = vst [vmem:[#allocation6 + $0x1] sm:$0x1] %v2522
        %v2526 = vld [vmem:[#allocation3 + $0x2] sm:$0x1]
        %v2527 = vld [vmem:[#allocation4 + $0x2] sm:$0x1]
        %v2528 = vld [vmem:[#allocation5 + $0x2] sm:$0x1]
        %v2529 = vlaneseq
        %v2530 = vshrl.u32 %v2529, 7
        %v2531 = vsub.s32 0, %v2530
        %v2532 = vrot.slane %v2528, %v2531
        %v2533 = vsel %vm997, %v2532, 0.0
        %v2534 = vsel %vm998, %v2532, 0.0
        %v2535 = vsel %vm989, %v2533, 0.0
        %2536 = vadd.xlane.f32.xlu0 %v2535
        %v2537 = vpop.xlane.xlu0 %2536
        %v2538 = vsel %vm989, %v2534, 0.0
        %2539 = vadd.xlane.f32.xlu0 %v2538
        %v2540 = vpop.xlane.xlu0 %2539
        %v2541 = vlaneseq
        %v2542 = vshrl.u32 %v2541, 7
        %v2543 = vsub.s32 0, %v2542
        %v2544 = vrot.slane %v2526, %v2543
        %v2545 = vmul.f32 %v2544, %v2295
        %v2546 = vmul.f32 %v2544, %v2296
        %v2547 = vmul.f32 %v2545, 1.442695
        %v2548 = vpow.pop %v2547
        %v2549 = vmul.f32 %v2546, 1.442695
        %v2550 = vpow.pop %v2549
        %v2551 = vmul.f32 %v2548, %v2448
        %v2552 = vmul.f32 %v2550, %v2449
        %v2553 = vlaneseq
        %v2554 = vshrl.u32 %v2553, 7
        %v2555 = vsub.s32 0, %v2554
        %v2556 = vrot.slane %v2527, %v2555
        %v2557 = vmul.f32 %v2537, %v2556
        %v2558 = vmul.f32 %v2540, %v2556
        %v2559 = vadd.f32 %v2551, %v2557
        %v2560 = vadd.f32 %v2552, %v2558
        %2562 = vrot.lane.b32.xlu0 %v2528, 112
        %v2563 = vpop.permute.xlu0 %2562
        %v2564 = vsel %vm989, %v2563, 0
        %2566 = vmatprep.subr.mxu0 0.0
        %2567 = vmatpush1.msra.mxu0 %v2559
        %2568 = vmatprep.subr.mxu0 0.0
        %2569 = vmatpush1.msra.mxu0 %v2560
        %2570 = vmatprep.subr.mxu0 0.0
        %2571 = vmatpush1.msra.mxu0 0.0
        %2572 = vmatprep.subr.mxu0 0.0
        %2573 = vmatpush1.msra.mxu0 0.0
        %2574 = vmatprep.subr.mxu0 0.0
        %2575 = vmatpush1.msra.mxu0 0.0
        %2576 = vmatprep.subr.mxu0 0.0
        %2577 = vmatpush1.msra.mxu0 0.0
        %2578 = vmatprep.subr.mxu0 0.0
        %2579 = vmatpush1.msra.mxu0 0.0
        %2580 = vmatprep.subr.mxu0 0.0
        %2581 = vmatpush1.msra.mxu0 0.0
        %2582 = vmatprep.subr.mxu0 0.0
        %2583 = vmatpush1.msra.mxu0 0.0
        %2584 = vmatprep.subr.mxu0 0.0
        %2585 = vmatpush1.msra.mxu0 0.0
        %2586 = vmatprep.subr.mxu0 0.0
        %2587 = vmatpush1.msra.mxu0 0.0
        %2588 = vmatprep.subr.mxu0 0.0
        %2589 = vmatpush1.msra.mxu0 0.0
        %2590 = vmatprep.subr.mxu0 0.0
        %2591 = vmatpush1.msra.mxu0 0.0
        %2592 = vmatprep.subr.mxu0 0.0
        %2593 = vmatpush1.msra.mxu0 0.0
        %2594 = vmatprep.subr.mxu0 0.0
        %2595 = vmatpush1.msra.mxu0 0.0
        %2596 = vmatprep.subr.mxu0 0.0
        %2597 = vmatpush1.msra.mxu0 0.0
        %2598 = vmatprep.subr.mxu0 0.0
        %2599 = vmatpush1.msra.mxu0 0.0
        %2600 = vmatprep.subr.mxu0 0.0
        %2601 = vmatpush1.msra.mxu0 0.0
        %2602 = vmatprep.subr.mxu0 0.0
        %2603 = vmatpush1.msra.mxu0 0.0
        %2604 = vmatprep.subr.mxu0 0.0
        %2605 = vmatpush1.msra.mxu0 0.0
        %2606 = vmatprep.subr.mxu0 0.0
        %2607 = vmatpush1.msra.mxu0 0.0
        %2608 = vmatprep.subr.mxu0 0.0
        %2609 = vmatpush1.msra.mxu0 0.0
        %2610 = vmatprep.subr.mxu0 0.0
        %2611 = vmatpush1.msra.mxu0 0.0
        %2612 = vmatprep.subr.mxu0 0.0
        %2613 = vmatpush1.msra.mxu0 0.0
        %2614 = vmatprep.subr.mxu0 0.0
        %2615 = vmatpush1.msra.mxu0 0.0
        %2616 = vmatprep.subr.mxu0 0.0
        %2617 = vmatpush1.msra.mxu0 0.0
        %2618 = vmatprep.subr.mxu0 0.0
        %2619 = vmatpush1.msra.mxu0 0.0
        %2620 = vmatprep.subr.mxu0 0.0
        %2621 = vmatpush1.msra.mxu0 0.0
        %2622 = vmatprep.subr.mxu0 0.0
        %2623 = vmatpush1.msra.mxu0 0.0
        %2624 = vmatprep.subr.mxu0 0.0
        %2625 = vmatpush1.msra.mxu0 0.0
        %2626 = vmatprep.subr.mxu0 0.0
        %2627 = vmatpush1.msra.mxu0 0.0
        %2628 = vmatprep.subr.mxu0 0.0
        %2629 = vmatpush1.msra.mxu0 0.0
        %2630 = vmatprep.mubr.f32.mxu0 0.0
        %2631 = vmatmul.mubr.f32.gmra.mrb[0].mxu0 %v2564
        %v2632 = vpop.f32.mrb[0].mxu0
        %v2633 = vadd.f32 0.0, %v2632
        %v2634 = vpop.f32.mrb[0].mxu0
        %2635 = vdwg.mxu0
        %2636 = vst [vmem:[#allocation6 + $0x2] sm:$0x1] %v2633
        %v2637 = vld [vmem:[#allocation3 + $0x3] sm:$0x1]
        %v2638 = vld [vmem:[#allocation4 + $0x3] sm:$0x1]
        %v2639 = vld [vmem:[#allocation5 + $0x3] sm:$0x1]
        %v2640 = vlaneseq
        %v2641 = vshrl.u32 %v2640, 7
        %v2642 = vsub.s32 0, %v2641
        %v2643 = vrot.slane %v2639, %v2642
        %v2644 = vsel %vm997, %v2643, 0.0
        %v2645 = vsel %vm998, %v2643, 0.0
        %v2646 = vsel %vm989, %v2644, 0.0
        %2647 = vadd.xlane.f32.xlu0 %v2646
        %v2648 = vpop.xlane.xlu0 %2647
        %v2649 = vsel %vm989, %v2645, 0.0
        %2650 = vadd.xlane.f32.xlu0 %v2649
        %v2651 = vpop.xlane.xlu0 %2650
        %v2652 = vlaneseq
        %v2653 = vshrl.u32 %v2652, 7
        %v2654 = vsub.s32 0, %v2653
        %v2655 = vrot.slane %v2637, %v2654
        %v2656 = vmul.f32 %v2655, %v2295
        %v2657 = vmul.f32 %v2655, %v2296
        %v2658 = vmul.f32 %v2656, 1.442695
        %v2659 = vpow.pop %v2658
        %v2660 = vmul.f32 %v2657, 1.442695
        %v2661 = vpow.pop %v2660
        %v2662 = vmul.f32 %v2659, %v2559
        %v2663 = vmul.f32 %v2661, %v2560
        %v2664 = vlaneseq
        %v2665 = vshrl.u32 %v2664, 7
        %v2666 = vsub.s32 0, %v2665
        %v2667 = vrot.slane %v2638, %v2666
        %v2668 = vmul.f32 %v2648, %v2667
        %v2669 = vmul.f32 %v2651, %v2667
        %v2670 = vadd.f32 %v2662, %v2668
        %v2671 = vadd.f32 %v2663, %v2669
        %2673 = vrot.lane.b32.xlu0 %v2639, 112
        %v2674 = vpop.permute.xlu0 %2673
        %v2675 = vsel %vm989, %v2674, 0
        %2677 = vmatprep.subr.mxu0 0.0
        %2678 = vmatpush1.msra.mxu0 %v2670
        %2679 = vmatprep.subr.mxu0 0.0
        %2680 = vmatpush1.msra.mxu0 %v2671
        %2681 = vmatprep.subr.mxu0 0.0
        %2682 = vmatpush1.msra.mxu0 0.0
        %2683 = vmatprep.subr.mxu0 0.0
        %2684 = vmatpush1.msra.mxu0 0.0
        %2685 = vmatprep.subr.mxu0 0.0
        %2686 = vmatpush1.msra.mxu0 0.0
        %2687 = vmatprep.subr.mxu0 0.0
        %2688 = vmatpush1.msra.mxu0 0.0
        %2689 = vmatprep.subr.mxu0 0.0
        %2690 = vmatpush1.msra.mxu0 0.0
        %2691 = vmatprep.subr.mxu0 0.0
        %2692 = vmatpush1.msra.mxu0 0.0
        %2693 = vmatprep.subr.mxu0 0.0
        %2694 = vmatpush1.msra.mxu0 0.0
        %2695 = vmatprep.subr.mxu0 0.0
        %2696 = vmatpush1.msra.mxu0 0.0
        %2697 = vmatprep.subr.mxu0 0.0
        %2698 = vmatpush1.msra.mxu0 0.0
        %2699 = vmatprep.subr.mxu0 0.0
        %2700 = vmatpush1.msra.mxu0 0.0
        %2701 = vmatprep.subr.mxu0 0.0
        %2702 = vmatpush1.msra.mxu0 0.0
        %2703 = vmatprep.subr.mxu0 0.0
        %2704 = vmatpush1.msra.mxu0 0.0
        %2705 = vmatprep.subr.mxu0 0.0
        %2706 = vmatpush1.msra.mxu0 0.0
        %2707 = vmatprep.subr.mxu0 0.0
        %2708 = vmatpush1.msra.mxu0 0.0
        %2709 = vmatprep.subr.mxu0 0.0
        %2710 = vmatpush1.msra.mxu0 0.0
        %2711 = vmatprep.subr.mxu0 0.0
        %2712 = vmatpush1.msra.mxu0 0.0
        %2713 = vmatprep.subr.mxu0 0.0
        %2714 = vmatpush1.msra.mxu0 0.0
        %2715 = vmatprep.subr.mxu0 0.0
        %2716 = vmatpush1.msra.mxu0 0.0
        %2717 = vmatprep.subr.mxu0 0.0
        %2718 = vmatpush1.msra.mxu0 0.0
        %2719 = vmatprep.subr.mxu0 0.0
        %2720 = vmatpush1.msra.mxu0 0.0
        %2721 = vmatprep.subr.mxu0 0.0
        %2722 = vmatpush1.msra.mxu0 0.0
        %2723 = vmatprep.subr.mxu0 0.0
        %2724 = vmatpush1.msra.mxu0 0.0
        %2725 = vmatprep.subr.mxu0 0.0
        %2726 = vmatpush1.msra.mxu0 0.0
        %2727 = vmatprep.subr.mxu0 0.0
        %2728 = vmatpush1.msra.mxu0 0.0
        %2729 = vmatprep.subr.mxu0 0.0
        %2730 = vmatpush1.msra.mxu0 0.0
        %2731 = vmatprep.subr.mxu0 0.0
        %2732 = vmatpush1.msra.mxu0 0.0
        %2733 = vmatprep.subr.mxu0 0.0
        %2734 = vmatpush1.msra.mxu0 0.0
        %2735 = vmatprep.subr.mxu0 0.0
        %2736 = vmatpush1.msra.mxu0 0.0
        %2737 = vmatprep.subr.mxu0 0.0
        %2738 = vmatpush1.msra.mxu0 0.0
        %2739 = vmatprep.subr.mxu0 0.0
        %2740 = vmatpush1.msra.mxu0 0.0
        %2741 = vmatprep.mubr.f32.mxu0 0.0
        %2742 = vmatmul.mubr.f32.gmra.mrb[0].mxu0 %v2675
        %v2743 = vpop.f32.mrb[0].mxu0
        %v2744 = vadd.f32 0.0, %v2743
        %v2745 = vpop.f32.mrb[0].mxu0
        %2746 = vdwg.mxu0
        %2747 = vst [vmem:[#allocation6 + $0x3] sm:$0x1] %v2744
        %v2748 = vld [vmem:[#allocation3 + $0x4] sm:$0x1]
        %v2749 = vld [vmem:[#allocation4 + $0x4] sm:$0x1]
        %v2750 = vld [vmem:[#allocation5 + $0x4] sm:$0x1]
        %v2751 = vlaneseq
        %v2752 = vshrl.u32 %v2751, 7
        %v2753 = vsub.s32 0, %v2752
        %v2754 = vrot.slane %v2750, %v2753
        %v2755 = vsel %vm997, %v2754, 0.0
        %v2756 = vsel %vm998, %v2754, 0.0
        %v2757 = vsel %vm989, %v2755, 0.0
        %2758 = vadd.xlane.f32.xlu0 %v2757
        %v2759 = vpop.xlane.xlu0 %2758
        %v2760 = vsel %vm989, %v2756, 0.0
        %2761 = vadd.xlane.f32.xlu0 %v2760
        %v2762 = vpop.xlane.xlu0 %2761
        %v2763 = vlaneseq
        %v2764 = vshrl.u32 %v2763, 7
        %v2765 = vsub.s32 0, %v2764
        %v2766 = vrot.slane %v2748, %v2765
        %v2767 = vmul.f32 %v2766, %v2295
        %v2768 = vmul.f32 %v2766, %v2296
        %v2769 = vmul.f32 %v2767, 1.442695
        %v2770 = vpow.pop %v2769
        %v2771 = vmul.f32 %v2768, 1.442695
        %v2772 = vpow.pop %v2771
        %v2773 = vmul.f32 %v2770, %v2670
        %v2774 = vmul.f32 %v2772, %v2671
        %v2775 = vlaneseq
        %v2776 = vshrl.u32 %v2775, 7
        %v2777 = vsub.s32 0, %v2776
        %v2778 = vrot.slane %v2749, %v2777
        %v2779 = vmul.f32 %v2759, %v2778
        %v2780 = vmul.f32 %v2762, %v2778
        %v2781 = vadd.f32 %v2773, %v2779
        %v2782 = vadd.f32 %v2774, %v2780
        %2784 = vrot.lane.b32.xlu0 %v2750, 112
        %v2785 = vpop.permute.xlu0 %2784
        %v2786 = vsel %vm989, %v2785, 0
        %2788 = vmatprep.subr.mxu0 0.0
        %2789 = vmatpush1.msra.mxu0 %v2781
        %2790 = vmatprep.subr.mxu0 0.0
        %2791 = vmatpush1.msra.mxu0 %v2782
        %2792 = vmatprep.subr.mxu0 0.0
        %2793 = vmatpush1.msra.mxu0 0.0
        %2794 = vmatprep.subr.mxu0 0.0
        %2795 = vmatpush1.msra.mxu0 0.0
        %2796 = vmatprep.subr.mxu0 0.0
        %2797 = vmatpush1.msra.mxu0 0.0
        %2798 = vmatprep.subr.mxu0 0.0
        %2799 = vmatpush1.msra.mxu0 0.0
        %2800 = vmatprep.subr.mxu0 0.0
        %2801 = vmatpush1.msra.mxu0 0.0
        %2802 = vmatprep.subr.mxu0 0.0
        %2803 = vmatpush1.msra.mxu0 0.0
        %2804 = vmatprep.subr.mxu0 0.0
        %2805 = vmatpush1.msra.mxu0 0.0
        %2806 = vmatprep.subr.mxu0 0.0
        %2807 = vmatpush1.msra.mxu0 0.0
        %2808 = vmatprep.subr.mxu0 0.0
        %2809 = vmatpush1.msra.mxu0 0.0
        %2810 = vmatprep.subr.mxu0 0.0
        %2811 = vmatpush1.msra.mxu0 0.0
        %2812 = vmatprep.subr.mxu0 0.0
        %2813 = vmatpush1.msra.mxu0 0.0
        %2814 = vmatprep.subr.mxu0 0.0
        %2815 = vmatpush1.msra.mxu0 0.0
        %2816 = vmatprep.subr.mxu0 0.0
        %2817 = vmatpush1.msra.mxu0 0.0
        %2818 = vmatprep.subr.mxu0 0.0
        %2819 = vmatpush1.msra.mxu0 0.0
        %2820 = vmatprep.subr.mxu0 0.0
        %2821 = vmatpush1.msra.mxu0 0.0
        %2822 = vmatprep.subr.mxu0 0.0
        %2823 = vmatpush1.msra.mxu0 0.0
        %2824 = vmatprep.subr.mxu0 0.0
        %2825 = vmatpush1.msra.mxu0 0.0
        %2826 = vmatprep.subr.mxu0 0.0
        %2827 = vmatpush1.msra.mxu0 0.0
        %2828 = vmatprep.subr.mxu0 0.0
        %2829 = vmatpush1.msra.mxu0 0.0
        %2830 = vmatprep.subr.mxu0 0.0
        %2831 = vmatpush1.msra.mxu0 0.0
        %2832 = vmatprep.subr.mxu0 0.0
        %2833 = vmatpush1.msra.mxu0 0.0
        %2834 = vmatprep.subr.mxu0 0.0
        %2835 = vmatpush1.msra.mxu0 0.0
        %2836 = vmatprep.subr.mxu0 0.0
        %2837 = vmatpush1.msra.mxu0 0.0
        %2838 = vmatprep.subr.mxu0 0.0
        %2839 = vmatpush1.msra.mxu0 0.0
        %2840 = vmatprep.subr.mxu0 0.0
        %2841 = vmatpush1.msra.mxu0 0.0
        %2842 = vmatprep.subr.mxu0 0.0
        %2843 = vmatpush1.msra.mxu0 0.0
        %2844 = vmatprep.subr.mxu0 0.0
        %2845 = vmatpush1.msra.mxu0 0.0
        %2846 = vmatprep.subr.mxu0 0.0
        %2847 = vmatpush1.msra.mxu0 0.0
        %2848 = vmatprep.subr.mxu0 0.0
        %2849 = vmatpush1.msra.mxu0 0.0
        %2850 = vmatprep.subr.mxu0 0.0
        %2851 = vmatpush1.msra.mxu0 0.0
        %2852 = vmatprep.mubr.f32.mxu0 0.0
        %2853 = vmatmul.mubr.f32.gmra.mrb[0].mxu0 %v2786
        %v2854 = vpop.f32.mrb[0].mxu0
        %v2855 = vadd.f32 0.0, %v2854
        %v2856 = vpop.f32.mrb[0].mxu0
        %2857 = vdwg.mxu0
        %2858 = vst [vmem:[#allocation6 + $0x4] sm:$0x1] %v2855
        %v2859 = vld [vmem:[#allocation3 + $0x5] sm:$0x1]
        %v2860 = vld [vmem:[#allocation4 + $0x5] sm:$0x1]
        %v2861 = vld [vmem:[#allocation5 + $0x5] sm:$0x1]
        %v2862 = vlaneseq
        %v2863 = vshrl.u32 %v2862, 7
        %v2864 = vsub.s32 0, %v2863
        %v2865 = vrot.slane %v2861, %v2864
        %v2866 = vsel %vm997, %v2865, 0.0
        %v2867 = vsel %vm998, %v2865, 0.0
        %v2868 = vsel %vm989, %v2866, 0.0
        %2869 = vadd.xlane.f32.xlu0 %v2868
        %v2870 = vpop.xlane.xlu0 %2869
        %v2871 = vsel %vm989, %v2867, 0.0
        %2872 = vadd.xlane.f32.xlu0 %v2871
        %v2873 = vpop.xlane.xlu0 %2872
        %v2874 = vlaneseq
        %v2875 = vshrl.u32 %v2874, 7
        %v2876 = vsub.s32 0, %v2875
        %v2877 = vrot.slane %v2859, %v2876
        %v2878 = vmul.f32 %v2877, %v2295
        %v2879 = vmul.f32 %v2877, %v2296
        %v2880 = vmul.f32 %v2878, 1.442695
        %v2881 = vpow.pop %v2880
        %v2882 = vmul.f32 %v2879, 1.442695
        %v2883 = vpow.pop %v2882
        %v2884 = vmul.f32 %v2881, %v2781
        %v2885 = vmul.f32 %v2883, %v2782
        %v2886 = vlaneseq
        %v2887 = vshrl.u32 %v2886, 7
        %v2888 = vsub.s32 0, %v2887
        %v2889 = vrot.slane %v2860, %v2888
        %v2890 = vmul.f32 %v2870, %v2889
        %v2891 = vmul.f32 %v2873, %v2889
        %v2892 = vadd.f32 %v2884, %v2890
        %v2893 = vadd.f32 %v2885, %v2891
        %2895 = vrot.lane.b32.xlu0 %v2861, 112
        %v2896 = vpop.permute.xlu0 %2895
        %v2897 = vsel %vm989, %v2896, 0
        %2899 = vmatprep.subr.mxu0 0.0
        %2900 = vmatpush1.msra.mxu0 %v2892
        %2901 = vmatprep.subr.mxu0 0.0
        %2902 = vmatpush1.msra.mxu0 %v2893
        %2903 = vmatprep.subr.mxu0 0.0
        %2904 = vmatpush1.msra.mxu0 0.0
        %2905 = vmatprep.subr.mxu0 0.0
        %2906 = vmatpush1.msra.mxu0 0.0
        %2907 = vmatprep.subr.mxu0 0.0
        %2908 = vmatpush1.msra.mxu0 0.0
        %2909 = vmatprep.subr.mxu0 0.0
        %2910 = vmatpush1.msra.mxu0 0.0
        %2911 = vmatprep.subr.mxu0 0.0
        %2912 = vmatpush1.msra.mxu0 0.0
        %2913 = vmatprep.subr.mxu0 0.0
        %2914 = vmatpush1.msra.mxu0 0.0
        %2915 = vmatprep.subr.mxu0 0.0
        %2916 = vmatpush1.msra.mxu0 0.0
        %2917 = vmatprep.subr.mxu0 0.0
        %2918 = vmatpush1.msra.mxu0 0.0
        %2919 = vmatprep.subr.mxu0 0.0
        %2920 = vmatpush1.msra.mxu0 0.0
        %2921 = vmatprep.subr.mxu0 0.0
        %2922 = vmatpush1.msra.mxu0 0.0
        %2923 = vmatprep.subr.mxu0 0.0
        %2924 = vmatpush1.msra.mxu0 0.0
        %2925 = vmatprep.subr.mxu0 0.0
        %2926 = vmatpush1.msra.mxu0 0.0
        %2927 = vmatprep.subr.mxu0 0.0
        %2928 = vmatpush1.msra.mxu0 0.0
        %2929 = vmatprep.subr.mxu0 0.0
        %2930 = vmatpush1.msra.mxu0 0.0
        %2931 = vmatprep.subr.mxu0 0.0
        %2932 = vmatpush1.msra.mxu0 0.0
        %2933 = vmatprep.subr.mxu0 0.0
        %2934 = vmatpush1.msra.mxu0 0.0
        %2935 = vmatprep.subr.mxu0 0.0
        %2936 = vmatpush1.msra.mxu0 0.0
        %2937 = vmatprep.subr.mxu0 0.0
        %2938 = vmatpush1.msra.mxu0 0.0
        %2939 = vmatprep.subr.mxu0 0.0
        %2940 = vmatpush1.msra.mxu0 0.0
        %2941 = vmatprep.subr.mxu0 0.0
        %2942 = vmatpush1.msra.mxu0 0.0
        %2943 = vmatprep.subr.mxu0 0.0
        %2944 = vmatpush1.msra.mxu0 0.0
        %2945 = vmatprep.subr.mxu0 0.0
        %2946 = vmatpush1.msra.mxu0 0.0
        %2947 = vmatprep.subr.mxu0 0.0
        %2948 = vmatpush1.msra.mxu0 0.0
        %2949 = vmatprep.subr.mxu0 0.0
        %2950 = vmatpush1.msra.mxu0 0.0
        %2951 = vmatprep.subr.mxu0 0.0
        %2952 = vmatpush1.msra.mxu0 0.0
        %2953 = vmatprep.subr.mxu0 0.0
        %2954 = vmatpush1.msra.mxu0 0.0
        %2955 = vmatprep.subr.mxu0 0.0
        %2956 = vmatpush1.msra.mxu0 0.0
        %2957 = vmatprep.subr.mxu0 0.0
        %2958 = vmatpush1.msra.mxu0 0.0
        %2959 = vmatprep.subr.mxu0 0.0
        %2960 = vmatpush1.msra.mxu0 0.0
        %2961 = vmatprep.subr.mxu0 0.0
        %2962 = vmatpush1.msra.mxu0 0.0
        %2963 = vmatprep.mubr.f32.mxu0 0.0
        %2964 = vmatmul.mubr.f32.gmra.mrb[0].mxu0 %v2897
        %v2965 = vpop.f32.mrb[0].mxu0
        %v2966 = vadd.f32 0.0, %v2965
        %v2967 = vpop.f32.mrb[0].mxu0
        %2968 = vdwg.mxu0
        %2969 = vst [vmem:[#allocation6 + $0x5] sm:$0x1] %v2966
        %v2970 = vld [vmem:[#allocation3 + $0x6] sm:$0x1]
        %v2971 = vld [vmem:[#allocation4 + $0x6] sm:$0x1]
        %v2972 = vld [vmem:[#allocation5 + $0x6] sm:$0x1]
        %v2973 = vlaneseq
        %v2974 = vshrl.u32 %v2973, 7
        %v2975 = vsub.s32 0, %v2974
        %v2976 = vrot.slane %v2972, %v2975
        %v2977 = vsel %vm997, %v2976, 0.0
        %v2978 = vsel %vm998, %v2976, 0.0
        %v2979 = vsel %vm989, %v2977, 0.0
        %2980 = vadd.xlane.f32.xlu0 %v2979
        %v2981 = vpop.xlane.xlu0 %2980
        %v2982 = vsel %vm989, %v2978, 0.0
        %2983 = vadd.xlane.f32.xlu0 %v2982
        %v2984 = vpop.xlane.xlu0 %2983
        %v2985 = vlaneseq
        %v2986 = vshrl.u32 %v2985, 7
        %v2987 = vsub.s32 0, %v2986
        %v2988 = vrot.slane %v2970, %v2987
        %v2989 = vmul.f32 %v2988, %v2295
        %v2990 = vmul.f32 %v2988, %v2296
        %v2991 = vmul.f32 %v2989, 1.442695
        %v2992 = vpow.pop %v2991
        %v2993 = vmul.f32 %v2990, 1.442695
        %v2994 = vpow.pop %v2993
        %v2995 = vmul.f32 %v2992, %v2892
        %v2996 = vmul.f32 %v2994, %v2893
        %v2997 = vlaneseq
        %v2998 = vshrl.u32 %v2997, 7
        %v2999 = vsub.s32 0, %v2998
        %v3000 = vrot.slane %v2971, %v2999
        %v3001 = vmul.f32 %v2981, %v3000
        %v3002 = vmul.f32 %v2984, %v3000
        %v3003 = vadd.f32 %v2995, %v3001
        %v3004 = vadd.f32 %v2996, %v3002
        %3006 = vrot.lane.b32.xlu0 %v2972, 112
        %v3007 = vpop.permute.xlu0 %3006
        %v3008 = vsel %vm989, %v3007, 0
        %3010 = vmatprep.subr.mxu0 0.0
        %3011 = vmatpush1.msra.mxu0 %v3003
        %3012 = vmatprep.subr.mxu0 0.0
        %3013 = vmatpush1.msra.mxu0 %v3004
        %3014 = vmatprep.subr.mxu0 0.0
        %3015 = vmatpush1.msra.mxu0 0.0
        %3016 = vmatprep.subr.mxu0 0.0
        %3017 = vmatpush1.msra.mxu0 0.0
        %3018 = vmatprep.subr.mxu0 0.0
        %3019 = vmatpush1.msra.mxu0 0.0
        %3020 = vmatprep.subr.mxu0 0.0
        %3021 = vmatpush1.msra.mxu0 0.0
        %3022 = vmatprep.subr.mxu0 0.0
        %3023 = vmatpush1.msra.mxu0 0.0
        %3024 = vmatprep.subr.mxu0 0.0
        %3025 = vmatpush1.msra.mxu0 0.0
        %3026 = vmatprep.subr.mxu0 0.0
        %3027 = vmatpush1.msra.mxu0 0.0
        %3028 = vmatprep.subr.mxu0 0.0
        %3029 = vmatpush1.msra.mxu0 0.0
        %3030 = vmatprep.subr.mxu0 0.0
        %3031 = vmatpush1.msra.mxu0 0.0
        %3032 = vmatprep.subr.mxu0 0.0
        %3033 = vmatpush1.msra.mxu0 0.0
        %3034 = vmatprep.subr.mxu0 0.0
        %3035 = vmatpush1.msra.mxu0 0.0
        %3036 = vmatprep.subr.mxu0 0.0
        %3037 = vmatpush1.msra.mxu0 0.0
        %3038 = vmatprep.subr.mxu0 0.0
        %3039 = vmatpush1.msra.mxu0 0.0
        %3040 = vmatprep.subr.mxu0 0.0
        %3041 = vmatpush1.msra.mxu0 0.0
        %3042 = vmatprep.subr.mxu0 0.0
        %3043 = vmatpush1.msra.mxu0 0.0
        %3044 = vmatprep.subr.mxu0 0.0
        %3045 = vmatpush1.msra.mxu0 0.0
        %3046 = vmatprep.subr.mxu0 0.0
        %3047 = vmatpush1.msra.mxu0 0.0
        %3048 = vmatprep.subr.mxu0 0.0
        %3049 = vmatpush1.msra.mxu0 0.0
        %3050 = vmatprep.subr.mxu0 0.0
        %3051 = vmatpush1.msra.mxu0 0.0
        %3052 = vmatprep.subr.mxu0 0.0
        %3053 = vmatpush1.msra.mxu0 0.0
        %3054 = vmatprep.subr.mxu0 0.0
        %3055 = vmatpush1.msra.mxu0 0.0
        %3056 = vmatprep.subr.mxu0 0.0
        %3057 = vmatpush1.msra.mxu0 0.0
        %3058 = vmatprep.subr.mxu0 0.0
        %3059 = vmatpush1.msra.mxu0 0.0
        %3060 = vmatprep.subr.mxu0 0.0
        %3061 = vmatpush1.msra.mxu0 0.0
        %3062 = vmatprep.subr.mxu0 0.0
        %3063 = vmatpush1.msra.mxu0 0.0
        %3064 = vmatprep.subr.mxu0 0.0
        %3065 = vmatpush1.msra.mxu0 0.0
        %3066 = vmatprep.subr.mxu0 0.0
        %3067 = vmatpush1.msra.mxu0 0.0
        %3068 = vmatprep.subr.mxu0 0.0
        %3069 = vmatpush1.msra.mxu0 0.0
        %3070 = vmatprep.subr.mxu0 0.0
        %3071 = vmatpush1.msra.mxu0 0.0
        %3072 = vmatprep.subr.mxu0 0.0
        %3073 = vmatpush1.msra.mxu0 0.0
        %3074 = vmatprep.mubr.f32.mxu0 0.0
        %3075 = vmatmul.mubr.f32.gmra.mrb[0].mxu0 %v3008
        %v3076 = vpop.f32.mrb[0].mxu0
        %v3077 = vadd.f32 0.0, %v3076
        %v3078 = vpop.f32.mrb[0].mxu0
        %3079 = vdwg.mxu0
        %3080 = vst [vmem:[#allocation6 + $0x6] sm:$0x1] %v3077
        %v3081 = vld [vmem:[#allocation3 + $0x7] sm:$0x1]
        %v3082 = vld [vmem:[#allocation4 + $0x7] sm:$0x1]
        %v3083 = vld [vmem:[#allocation5 + $0x7] sm:$0x1]
        %v3084 = vlaneseq
        %v3085 = vshrl.u32 %v3084, 7
        %v3086 = vsub.s32 0, %v3085
        %v3087 = vrot.slane %v3083, %v3086
        %v3088 = vsel %vm997, %v3087, 0.0
        %v3089 = vsel %vm998, %v3087, 0.0
        %v3090 = vsel %vm989, %v3088, 0.0
        %3091 = vadd.xlane.f32.xlu0 %v3090
        %v3092 = vpop.xlane.xlu0 %3091
        %v3093 = vsel %vm989, %v3089, 0.0
        %3094 = vadd.xlane.f32.xlu0 %v3093
        %v3095 = vpop.xlane.xlu0 %3094
        %v3096 = vlaneseq
        %v3097 = vshrl.u32 %v3096, 7
        %v3098 = vsub.s32 0, %v3097
        %v3099 = vrot.slane %v3081, %v3098
        %v3100 = vmul.f32 %v3099, %v2295
        %v3101 = vmul.f32 %v3099, %v2296
        %v3102 = vmul.f32 %v3100, 1.442695
        %v3103 = vpow.pop %v3102
        %v3104 = vmul.f32 %v3101, 1.442695
        %v3105 = vpow.pop %v3104
        %v3106 = vmul.f32 %v3103, %v3003
        %v3107 = vmul.f32 %v3105, %v3004
        %v3108 = vlaneseq
        %v3109 = vshrl.u32 %v3108, 7
        %v3110 = vsub.s32 0, %v3109
        %v3111 = vrot.slane %v3082, %v3110
        %v3112 = vmul.f32 %v3092, %v3111
        %v3113 = vmul.f32 %v3095, %v3111
        %v3114 = vadd.f32 %v3106, %v3112
        %v3115 = vadd.f32 %v3107, %v3113
        %3117 = vrot.lane.b32.xlu0 %v3083, 112
        %v3118 = vpop.permute.xlu0 %3117
        %v3119 = vsel %vm989, %v3118, 0
        %3121 = vmatprep.subr.mxu0 0.0
        %3122 = vmatpush1.msra.mxu0 %v3114
        %3123 = vmatprep.subr.mxu0 0.0
        %3124 = vmatpush1.msra.mxu0 %v3115
        %3125 = vmatprep.subr.mxu0 0.0
        %3126 = vmatpush1.msra.mxu0 0.0
        %3127 = vmatprep.subr.mxu0 0.0
        %3128 = vmatpush1.msra.mxu0 0.0
        %3129 = vmatprep.subr.mxu0 0.0
        %3130 = vmatpush1.msra.mxu0 0.0
        %3131 = vmatprep.subr.mxu0 0.0
        %3132 = vmatpush1.msra.mxu0 0.0
        %3133 = vmatprep.subr.mxu0 0.0
        %3134 = vmatpush1.msra.mxu0 0.0
        %3135 = vmatprep.subr.mxu0 0.0
        %3136 = vmatpush1.msra.mxu0 0.0
        %3137 = vmatprep.subr.mxu0 0.0
        %3138 = vmatpush1.msra.mxu0 0.0
        %3139 = vmatprep.subr.mxu0 0.0
        %3140 = vmatpush1.msra.mxu0 0.0
        %3141 = vmatprep.subr.mxu0 0.0
        %3142 = vmatpush1.msra.mxu0 0.0
        %3143 = vmatprep.subr.mxu0 0.0
        %3144 = vmatpush1.msra.mxu0 0.0
        %3145 = vmatprep.subr.mxu0 0.0
        %3146 = vmatpush1.msra.mxu0 0.0
        %3147 = vmatprep.subr.mxu0 0.0
        %3148 = vmatpush1.msra.mxu0 0.0
        %3149 = vmatprep.subr.mxu0 0.0
        %3150 = vmatpush1.msra.mxu0 0.0
        %3151 = vmatprep.subr.mxu0 0.0
        %3152 = vmatpush1.msra.mxu0 0.0
        %3153 = vmatprep.subr.mxu0 0.0
        %3154 = vmatpush1.msra.mxu0 0.0
        %3155 = vmatprep.subr.mxu0 0.0
        %3156 = vmatpush1.msra.mxu0 0.0
        %3157 = vmatprep.subr.mxu0 0.0
        %3158 = vmatpush1.msra.mxu0 0.0
        %3159 = vmatprep.subr.mxu0 0.0
        %3160 = vmatpush1.msra.mxu0 0.0
        %3161 = vmatprep.subr.mxu0 0.0
        %3162 = vmatpush1.msra.mxu0 0.0
        %3163 = vmatprep.subr.mxu0 0.0
        %3164 = vmatpush1.msra.mxu0 0.0
        %3165 = vmatprep.subr.mxu0 0.0
        %3166 = vmatpush1.msra.mxu0 0.0
        %3167 = vmatprep.subr.mxu0 0.0
        %3168 = vmatpush1.msra.mxu0 0.0
        %3169 = vmatprep.subr.mxu0 0.0
        %3170 = vmatpush1.msra.mxu0 0.0
        %3171 = vmatprep.subr.mxu0 0.0
        %3172 = vmatpush1.msra.mxu0 0.0
        %3173 = vmatprep.subr.mxu0 0.0
        %3174 = vmatpush1.msra.mxu0 0.0
        %3175 = vmatprep.subr.mxu0 0.0
        %3176 = vmatpush1.msra.mxu0 0.0
        %3177 = vmatprep.subr.mxu0 0.0
        %3178 = vmatpush1.msra.mxu0 0.0
        %3179 = vmatprep.subr.mxu0 0.0
        %3180 = vmatpush1.msra.mxu0 0.0
        %3181 = vmatprep.subr.mxu0 0.0
        %3182 = vmatpush1.msra.mxu0 0.0
        %3183 = vmatprep.subr.mxu0 0.0
        %3184 = vmatpush1.msra.mxu0 0.0
        %3185 = vmatprep.mubr.f32.mxu0 0.0
        %3186 = vmatmul.mubr.f32.gmra.mrb[0].mxu0 %v3119
        %v3187 = vpop.f32.mrb[0].mxu0
        %v3188 = vadd.f32 0.0, %v3187
        %v3189 = vpop.f32.mrb[0].mxu0
        %3190 = vdwg.mxu0
        %3191 = vst [vmem:[#allocation6 + $0x7] sm:$0x1] %v3188
        %v3192 = vld [vmem:[#allocation6] sm:$0xff]
        %v3193 = vld [vmem:[%s19] sm:$0x1]
        %v3195 = vlaneseq
        %v3196 = vshrl.u32 %v3195, 7
        %v3197 = vsub.s32 0, %v3196
        %v3198 = vrot.slane %v3193, %v3197
        %v3200 = vmul.f32 %v2170, %v3198
        %v3201 = vadd.f32 %v3192, %v3200
        %v3202 = vxor.u32 %v2122, 2147483648
        %v3203 = vmul.f32 %v3202, 1.442695
        %v3204 = vpow.pop %v3203
        %v3205 = vadd.f32 %v3204, 1.0
        %v3206 = vrcp.pop %v3205
        %v3207 = vmul.f32 1.0, %v3206
        %v3208 = vmul.f32 %v2122, %v3207
        %v3209 = vmul.f32 %v3201, %v3208
        %v3210 = vld [vmem:[%s20] sm:$0xff]
        %v3211 = vld [vmem:[%s20 + $0x8] sm:$0xff]
        %v3212 = vld [vmem:[%s20 + $0x10] sm:$0xff]
        %v3213 = vld [vmem:[%s20 + $0x18] sm:$0xff]
        %v3214 = vld [vmem:[%s20 + $0x20] sm:$0xff]
        %v3215 = vld [vmem:[%s20 + $0x28] sm:$0xff]
        %v3216 = vld [vmem:[%s20 + $0x30] sm:$0xff]
        %v3217 = vld [vmem:[%s20 + $0x38] sm:$0xff]
        %v3218 = vld [vmem:[%s20 + $0x40] sm:$0xff]
        %v3219 = vld [vmem:[%s20 + $0x48] sm:$0xff]
        %v3220 = vld [vmem:[%s20 + $0x50] sm:$0xff]
        %v3221 = vld [vmem:[%s20 + $0x58] sm:$0xff]
        %v3222 = vld [vmem:[%s20 + $0x60] sm:$0xff]
        %v3223 = vld [vmem:[%s20 + $0x68] sm:$0xff]
        %v3224 = vld [vmem:[%s20 + $0x70] sm:$0xff]
        %v3225 = vld [vmem:[%s20 + $0x78] sm:$0xff]
        %3226 = vmatprep.subr.mxu0 0.0
        %3227 = vmatpush1.msra.mxu0 %v3210
        %3228 = vmatprep.subr.mxu0 0.0
        %3229 = vmatpush1.msra.mxu0 %v3211
        %3230 = vmatprep.subr.mxu0 0.0
        %3231 = vmatpush1.msra.mxu0 %v3212
        %3232 = vmatprep.subr.mxu0 0.0
        %3233 = vmatpush1.msra.mxu0 %v3213
        %3234 = vmatprep.subr.mxu0 0.0
        %3235 = vmatpush1.msra.mxu0 %v3214
        %3236 = vmatprep.subr.mxu0 0.0
        %3237 = vmatpush1.msra.mxu0 %v3215
        %3238 = vmatprep.subr.mxu0 0.0
        %3239 = vmatpush1.msra.mxu0 %v3216
        %3240 = vmatprep.subr.mxu0 0.0
        %3241 = vmatpush1.msra.mxu0 %v3217
        %3242 = vmatprep.subr.mxu0 0.0
        %3243 = vmatpush1.msra.mxu0 %v3218
        %3244 = vmatprep.subr.mxu0 0.0
        %3245 = vmatpush1.msra.mxu0 %v3219
        %3246 = vmatprep.subr.mxu0 0.0
        %3247 = vmatpush1.msra.mxu0 %v3220
        %3248 = vmatprep.subr.mxu0 0.0
        %3249 = vmatpush1.msra.mxu0 %v3221
        %3250 = vmatprep.subr.mxu0 0.0
        %3251 = vmatpush1.msra.mxu0 %v3222
        %3252 = vmatprep.subr.mxu0 0.0
        %3253 = vmatpush1.msra.mxu0 %v3223
        %3254 = vmatprep.subr.mxu0 0.0
        %3255 = vmatpush1.msra.mxu0 %v3224
        %3256 = vmatprep.subr.mxu0 0.0
        %3257 = vmatpush1.msra.mxu0 %v3225
        %3258 = vmatprep.subr.mxu0 0.0
        %3259 = vmatpush1.msra.mxu0 0.0
        %3260 = vmatprep.subr.mxu0 0.0
        %3261 = vmatpush1.msra.mxu0 0.0
        %3262 = vmatprep.subr.mxu0 0.0
        %3263 = vmatpush1.msra.mxu0 0.0
        %3264 = vmatprep.subr.mxu0 0.0
        %3265 = vmatpush1.msra.mxu0 0.0
        %3266 = vmatprep.subr.mxu0 0.0
        %3267 = vmatpush1.msra.mxu0 0.0
        %3268 = vmatprep.subr.mxu0 0.0
        %3269 = vmatpush1.msra.mxu0 0.0
        %3270 = vmatprep.subr.mxu0 0.0
        %3271 = vmatpush1.msra.mxu0 0.0
        %3272 = vmatprep.subr.mxu0 0.0
        %3273 = vmatpush1.msra.mxu0 0.0
        %3274 = vmatprep.subr.mxu0 0.0
        %3275 = vmatpush1.msra.mxu0 0.0
        %3276 = vmatprep.subr.mxu0 0.0
        %3277 = vmatpush1.msra.mxu0 0.0
        %3278 = vmatprep.subr.mxu0 0.0
        %3279 = vmatpush1.msra.mxu0 0.0
        %3280 = vmatprep.subr.mxu0 0.0
        %3281 = vmatpush1.msra.mxu0 0.0
        %3282 = vmatprep.subr.mxu0 0.0
        %3283 = vmatpush1.msra.mxu0 0.0
        %3284 = vmatprep.subr.mxu0 0.0
        %3285 = vmatpush1.msra.mxu0 0.0
        %3286 = vmatprep.subr.mxu0 0.0
        %3287 = vmatpush1.msra.mxu0 0.0
        %3288 = vmatprep.subr.mxu0 0.0
        %3289 = vmatpush1.msra.mxu0 0.0
        %3290 = vmatprep.mubr.f32.mxu0 0.0
        %3291 = vmatmul.mubr.f32.gmra.mrb[0].mxu0 %v3209
        %v3292 = vpop.f32.mrb[0].mxu0
        %v3293 = vadd.f32 0.0, %v3292
        %v3294 = vpop.f32.mrb[0].mxu0
        %3295 = vdwg.mxu0
        %v3296 = vsel %vm1991, %v3293, 0.0
        %3297 = vadd.xlane.f32.xlu0 %v3296
        %v3298 = vpop.xlane.xlu0 %3297
        %v3299 = vmul.f32 %v3298, 0.125
        %v3300 = vsub.f32 %v3293, %v3299
        %v3301 = vsel %vm1991, %v3300, 0.0
        %v3302 = vmul.f32 %v3301, %v3301
        %3303 = vadd.xlane.f32.xlu0 %v3302
        %v3304 = vpop.xlane.xlu0 %3303
        %v3305 = vmul.f32 %v3304, 0.125
        %v3306 = vadd.f32 %v3305, 1e-05
        %v3307 = vrsqrt.pop %v3306
        %v3308 = vmul.f32 %v3301, %v3307
        %v3309 = vld [vmem:[%s21] sm:$0x1]
        %v3311 = vlaneseq
        %v3312 = vshrl.u32 %v3311, 7
        %v3313 = vsub.s32 0, %v3312
        %v3314 = vrot.slane %v3309, %v3313
        %v3316 = vmul.f32 %v3308, %v3314
        %v3317 = vld [vmem:[%s22] sm:$0x1]
        %v3319 = vlaneseq
        %v3320 = vshrl.u32 %v3319, 7
        %v3321 = vsub.s32 0, %v3320
        %v3322 = vrot.slane %v3317, %v3321
        %v3324 = vadd.f32 %v3316, %v3322
        %3325 = vst [vmem:[%s701] sm:$0xff] %v3324
        %s3326 = sand.u32 %s533, 1
        %s3327 = scalar_lea.sflag [#allocation8], %s3326
        %s3328 = sand.u32 %s533, 1
        %s3329 = smul.addr %s3328, 8
        %s3330 = scalar_lea.vmem [#allocation7], %s3329
        // Predicated region
        $region113: #{double_ssm_block.1} parent=111 // pred_check
          %p3331 = pneg %p543
        $region114: #{double_ssm_block.1} parent=111 // pred_check_branch
          %3333 = sbr.rel (%p3331) target = $region116
        $region115: #{double_ssm_block.1} parent=111 // pred_region
          %s3335 = ssub.s32 128, 128
          %3336 = vsyncadd %s3327, %s3335
          %s3337 = smul.addr %s37, 128
          %s3338 = scalar_lea.hbm %s23, %s3337
          %s3340 = sshll.u32 %s3330, 4
          %s3341 = int_to_ptr.vmem [resolvable:$true] %s3340
          %3343 = dma.vmem_to_hbm [thread:$0]  %s3341, 128, %s3338, %s3327
        $region116: #{double_ssm_block.1} parent=111 // pred_fallthru
          _
      $region112: #{double_ssm_block.1} parent=5 // pred_fallthru
        _
      %p3344 = scmp.le.s32.totalorder 2, %s32
      // Predicated region
      $region117: #{double_ssm_block.1} parent=5 // pred_check
        %p3345 = pneg %p3344
      $region118: #{double_ssm_block.1} parent=5 // pred_check_branch
        %3347 = sbr.rel (%p3345) target = $region120
      $region119: #{double_ssm_block.1} parent=5 // pred_region
        %s3348 = ssub.s32 %s32, 2
        // Predicated region
        $region121: #{double_ssm_block.1} parent=119 // pred_check
          %p3349 = pneg %p549
        $region122: #{double_ssm_block.1} parent=119 // pred_check_branch
          %3351 = sbr.rel (%p3349) target = $region124
        $region123: #{double_ssm_block.1} parent=119 // pred_region
          %s3352 = sand.u32 %s534, 1
          %s3353 = scalar_lea.sflag [#allocation8], %s3352
          %s3354 = sand.u32 %s534, 1
          %s3355 = smul.addr %s3354, 8
          %s3356 = scalar_lea.vmem [#allocation7], %s3355
          %3357 = dma.done %s3353, 128
        $region124: #{double_ssm_block.1} parent=119 // pred_fallthru
          _
      $region120: #{double_ssm_block.1} parent=5 // pred_fallthru
        _
    $region6: #{double_ssm_block.1} parent=1 // loop_footer
      %s36 = sadd.s32 1, %s32
    $region7: #{double_ssm_block.1} parent=1 // loop_footer_branch
      %31 = sbr.rel target = $region3
    $region8: #{double_ssm_block.1} parent=1 // loop_exit
      _
    %3358 = vsyncpa [#allocation8], 1
    %s3359 = scalar_lea.sflag [#allocation8], 1
    %3360 = vsyncpa %s3359, 1

</llo_original>
